<compile_context>
chip_gen: v7x
topology: tpu7x:2x2x1
jax: 0.10.0
libtpu: 0.0.40
codegen_flags: <defaults>
</compile_context>

<pallas_src>
import jax
import jax.numpy as jnp
from jax.experimental import pallas as pl
from jax.experimental.pallas import tpu as pltpu

LATENT_DIMS = 2
LATENT_PAD = 128          # lane-width padding for the tiny latent axis
HIDDEN = 512
IN_FEATS = 784            # 1 * 28 * 28
IN_PAD = 896              # 7 * 128 -> lane-dense loads/stores
MIN_TILE_B = 16           # bf16 sublane packing (16, 128)
MAX_TILE_B = 512          # per review: 512-1024; 512 keeps v5e footprint modest


def vae_kernel(x_ref, eps_ref, b_ref,
               w1_ref, b1_ref, w23_ref, b23_ref,
               dw1_ref, db1_ref, dw2_ref, db2_ref,
               out_ref, kl_ref):
    tile_b = x_ref.shape[0]

    # ---- encoder ----
    # x is bf16, weights are bf16, accumulation is f32 on the MXU.
    h = jnp.dot(x_ref[...], w1_ref[...],
                preferred_element_type=jnp.float32) + b1_ref[...]
    h = jnp.maximum(h, 0.0)                                   # relu (f32, VPU)

    # fused mu || log_sigma head: one (512, 256) matmul, lane-aligned slices.
    enc = jnp.dot(h.astype(jnp.bfloat16), w23_ref[...],
                  preferred_element_type=jnp.float32) + b23_ref[...]
    mu = enc[:, :LATENT_PAD]
    log_sigma = enc[:, LATENT_PAD:]
    sigma = jnp.exp(log_sigma)
    z = mu + sigma * eps_ref[...].astype(jnp.float32)         # reparam trick

    # KL (torch: (sigma**2 + mu**2 - log(sigma) - 1/2).sum()).
    # Mask generated in-kernel: valid latent lanes AND valid batch rows only
    # (no HBM mask stream). B arrives as an SMEM scalar.
    row = (pl.program_id(0) * tile_b
           + jax.lax.broadcasted_iota(jnp.int32, (tile_b, LATENT_PAD), 0))
    lane = jax.lax.broadcasted_iota(jnp.int32, (tile_b, LATENT_PAD), 1)
    valid = (row < b_ref[0]) & (lane < LATENT_DIMS)
    kl_terms = jnp.where(valid, sigma * sigma + mu * mu - log_sigma - 0.5, 0.0)
    kl_sum = jnp.sum(kl_terms, axis=0, keepdims=True)         # (1, 128)
    row_sel = jax.lax.broadcasted_iota(jnp.int32, (8, LATENT_PAD), 0) == 0
    kl_ref[...] = jnp.where(row_sel, kl_sum, 0.0)             # (8, 128) dense store

    # ---- decoder ----
    h2 = jnp.dot(z.astype(jnp.bfloat16), dw1_ref[...],
                 preferred_element_type=jnp.float32) + db1_ref[...]
    h2 = jnp.maximum(h2, 0.0)                                 # relu
    logits = jnp.dot(h2.astype(jnp.bfloat16), dw2_ref[...],
                     preferred_element_type=jnp.float32) + db2_ref[...]
    # sigmoid = 1 / (1 + exp(-x)); approx reciprocal keeps the divide cheap on EUP.
    probs = pl.reciprocal(1.0 + jnp.exp(-logits), approx=True)
    out_ref[...] = probs.astype(jnp.bfloat16)                 # bf16 output stream


def vae_forward(x_nchw, eps, params):
    """x_nchw: (B,1,28,28) f32, eps: (B, LATENT_DIMS) f32 N(0,1) sample."""
    w1, b1, w23, b23, dw1, db1, dw2, db2 = params
    B = x_nchw.shape[0]
    x = x_nchw.reshape(B, IN_FEATS)

    # ---- batch tiling: pad B to a multiple of 16 (bf16 sublane packing) ----
    b_pad = B + ((-B) % MIN_TILE_B)
    tile_b = min(MAX_TILE_B, b_pad)
    # guarantee >= 2 tiles when the batch allows it (v7x megacore sharding).
    if b_pad >= 2 * MIN_TILE_B and b_pad <= tile_b:
        half = b_pad // 2
        tile_b = half + ((-half) % MIN_TILE_B)
    padded_b = ((b_pad + tile_b - 1) // tile_b) * tile_b
    num_tiles = padded_b // tile_b

    # ---- fused pad: feature 784 -> 896, batch -> padded_b; streams in bf16 ----
    x_p = jnp.pad(x.astype(jnp.bfloat16),
                  ((0, padded_b - B), (0, IN_PAD - IN_FEATS)))
    eps_p = jnp.pad(eps.astype(jnp.bfloat16),
                    ((0, padded_b - B), (0, LATENT_PAD - LATENT_DIMS)))
    bsz = jnp.array([B], jnp.int32)                           # true batch size (SMEM)

    vmem = pltpu.MemorySpace.VMEM
    smem = pltpu.MemorySpace.SMEM

    def resident(shape):
        # Constant block index -> weight stays VMEM-resident across the grid.
        return pl.BlockSpec(shape, lambda i: (0,) * len(shape), memory_space=vmem)

    recon, kl_tiles = pl.pallas_call(
        vae_kernel,
        grid=(num_tiles,),
        in_specs=[
            pl.BlockSpec((tile_b, IN_PAD), lambda i: (i, 0)),        # x (bf16)
            pl.BlockSpec((tile_b, LATENT_PAD), lambda i: (i, 0)),    # eps (bf16)
            pl.BlockSpec(memory_space=smem),                         # B scalar
            resident((IN_PAD, HIDDEN)),                              # w1 (bf16)
            resident((1, HIDDEN)),                                   # b1
            resident((HIDDEN, 2 * LATENT_PAD)),                      # w2||w3 (bf16)
            resident((1, 2 * LATENT_PAD)),                           # b2||b3
            resident((LATENT_PAD, HIDDEN)),                          # dw1 (bf16)
            resident((1, HIDDEN)),                                   # db1
            resident((HIDDEN, IN_PAD)),                              # dw2 (bf16)
            resident((1, IN_PAD)),                                   # db2
        ],
        out_specs=(
            pl.BlockSpec((tile_b, IN_PAD), lambda i: (i, 0)),        # recon (bf16)
            pl.BlockSpec((8, LATENT_PAD), lambda i: (i, 0)),         # KL partials
        ),
        out_shape=(
            jax.ShapeDtypeStruct((padded_b, IN_PAD), jnp.bfloat16),
            jax.ShapeDtypeStruct((num_tiles * 8, LATENT_PAD), jnp.float32),
        ),
        compiler_params=pltpu.CompilerParams(
            dimension_semantics=("parallel",),
            vmem_limit_bytes=32 * 1024 * 1024),
    )(x_p, eps_p, bsz, w1, b1, w23, b23, dw1, db1, dw2, db2)

    recon = recon[:B, :IN_FEATS].astype(jnp.float32).reshape(B, 1, 28, 28)
    return recon, jnp.sum(kl_tiles)


def init_params(key):
    """PyTorch-style uniform(+/-1/sqrt(fan_in)) init, padded + fused + bf16."""
    ks = jax.random.split(key, 10)

    def lin(k, fan_in, shape):
        bound = 1.0 / float(fan_in) ** 0.5
        return jax.random.uniform(k, shape, jnp.float32, -bound, bound)

    # encoder linear1: 784 -> 512 (input rows 784..895 zero-padded)
    w1 = jnp.zeros((IN_PAD, HIDDEN), jnp.float32).at[:IN_FEATS, :].set(
        lin(ks[0], IN_FEATS, (IN_FEATS, HIDDEN)))
    b1 = lin(ks[1], IN_FEATS, (1, HIDDEN))

    # fused encoder heads: 512 -> (mu[0:128] || log_sigma[128:256]), each 2 real cols
    w23 = jnp.zeros((HIDDEN, 2 * LATENT_PAD), jnp.float32)
    w23 = w23.at[:, :LATENT_DIMS].set(lin(ks[2], HIDDEN, (HIDDEN, LATENT_DIMS)))
    w23 = w23.at[:, LATENT_PAD:LATENT_PAD + LATENT_DIMS].set(
        lin(ks[4], HIDDEN, (HIDDEN, LATENT_DIMS)))
    b23 = jnp.zeros((1, 2 * LATENT_PAD), jnp.float32)
    b23 = b23.at[:, :LATENT_DIMS].set(lin(ks[3], HIDDEN, (1, LATENT_DIMS)))
    b23 = b23.at[:, LATENT_PAD:LATENT_PAD + LATENT_DIMS].set(
        lin(ks[5], HIDDEN, (1, LATENT_DIMS)))

    # decoder linear1: 2 -> 512 (input rows padded to 128 with zeros)
    dw1 = jnp.zeros((LATENT_PAD, HIDDEN), jnp.float32).at[:LATENT_DIMS, :].set(
        lin(ks[6], LATENT_DIMS, (LATENT_DIMS, HIDDEN)))
    db1 = lin(ks[7], LATENT_DIMS, (1, HIDDEN))

    # decoder linear2: 512 -> 784 (output cols padded to 896 with zeros)
    dw2 = jnp.zeros((HIDDEN, IN_PAD), jnp.float32).at[:, :IN_FEATS].set(
        lin(ks[8], HIDDEN, (HIDDEN, IN_FEATS)))
    db2 = jnp.zeros((1, IN_PAD), jnp.float32).at[:, :IN_FEATS].set(
        lin(ks[9], HIDDEN, (1, IN_FEATS)))

    # Weights in bf16 (halves HBM weight traffic; MXU accumulates f32);
    # biases stay f32 (added after f32 accumulation).
    return (w1.astype(jnp.bfloat16), b1,
            w23.astype(jnp.bfloat16), b23,
            dw1.astype(jnp.bfloat16), db1,
            dw2.astype(jnp.bfloat16), db2)


def ref_forward(x_nchw, eps, params):
    """Pure-JAX reference mirroring the PyTorch forward with the same
    bf16-at-matmul-boundary / bf16-eps precision as the kernel (unpadded math)."""
    w1, b1, w23, b23, dw1, db1, dw2, db2 = params
    B = x_nchw.shape[0]
    x = x_nchw.reshape(B, IN_FEATS).astype(jnp.float32)

    def mm(a, w):
        return jnp.dot(a.astype(jnp.bfloat16), w,
                       preferred_element_type=jnp.float32)

    h = jax.nn.relu(mm(x, w1[:IN_FEATS, :]) + b1)
    mu = mm(h, w23[:, :LATENT_DIMS]) + b23[:, :LATENT_DIMS]
    log_sigma = (mm(h, w23[:, LATENT_PAD:LATENT_PAD + LATENT_DIMS])
                 + b23[:, LATENT_PAD:LATENT_PAD + LATENT_DIMS])
    sigma = jnp.exp(log_sigma)
    eps_q = eps.astype(jnp.bfloat16).astype(jnp.float32)   # kernel streams bf16 eps
    z = mu + sigma * eps_q
    kl = jnp.sum(sigma ** 2 + mu ** 2 - log_sigma - 0.5)
    h2 = jax.nn.relu(mm(z, dw1[:LATENT_DIMS, :]) + db1)
    out = jax.nn.sigmoid(mm(h2, dw2[:, :IN_FEATS]) + db2[:, :IN_FEATS])
    return out.reshape(B, 1, 28, 28), kl


if __name__ == "__main__":
    key = jax.random.PRNGKey(0)
    k_x, k_eps, k_p = jax.random.split(key, 3)

    B = 8
    x = jax.random.normal(k_x, (B, 1, 28, 28), jnp.float32)

    # N(0,1) sample for the reparameterization trick (torch's self.N.sample),
    # generated outside the kernel for determinism.
    # TODO(synk): torch.distributions.Normal sampling has no in-kernel equivalent;
    # the noise is passed in explicitly.
    eps = jax.random.normal(k_eps, (B, LATENT_DIMS), jnp.float32)

    params = init_params(k_p)

    recon, kl = jax.block_until_ready(vae_forward(x, eps, params))

    recon_ref, kl_ref_val = ref_forward(x, eps, params)
    assert recon.shape == (B, 1, 28, 28)
    # bf16 output store + approx reciprocal -> ~5e-3 tolerance vs f32 reference.
    assert jnp.allclose(recon, recon_ref, atol=5e-3, rtol=5e-3), \
        float(jnp.max(jnp.abs(recon - recon_ref)))
    assert jnp.allclose(kl, kl_ref_val, atol=1e-2, rtol=1e-3), \
        (float(kl), float(kl_ref_val))

    print("KERNEL_OK")
</pallas_src>

<mosaic_0001>
module attributes {stable_mosaic.version = 11 : i64} {
  func.func @vae_kernel(%arg0: i32, %arg1: memref<16x896xbf16, #tpu.memory_space<vmem>>, %arg2: memref<16x128xbf16, #tpu.memory_space<vmem>>, %arg3: memref<1xi32, #tpu.memory_space<smem>>, %arg4: memref<896x512xbf16, #tpu.memory_space<vmem>>, %arg5: memref<1x512xf32, #tpu.memory_space<vmem>>, %arg6: memref<512x256xbf16, #tpu.memory_space<vmem>>, %arg7: memref<1x256xf32, #tpu.memory_space<vmem>>, %arg8: memref<128x512xbf16, #tpu.memory_space<vmem>>, %arg9: memref<1x512xf32, #tpu.memory_space<vmem>>, %arg10: memref<512x896xbf16, #tpu.memory_space<vmem>>, %arg11: memref<1x896xf32, #tpu.memory_space<vmem>>, %arg12: memref<16x896xbf16, #tpu.memory_space<vmem>>, %arg13: memref<8x128xf32, #tpu.memory_space<vmem>>) attributes {dimension_semantics = [#tpu.dimension_semantics<parallel>], iteration_bounds = array<i64: 1>, scalar_prefetch = 0 : i64, scratch_operands = 0 : i64, tpu.core_type = #tpu.core_type<tc>, window_params = [{transform_indices = @transform_0, window_bounds = array<i64: 16, 896>}, {transform_indices = @transform_1, window_bounds = array<i64: 16, 128>}, {transform_indices = @transform_2, window_bounds = array<i64: 1>}, {pipeline_mode = #tpu.pipeline_mode<synchronous>, transform_indices = @transform_3, window_bounds = array<i64: 896, 512>}, {pipeline_mode = #tpu.pipeline_mode<synchronous>, transform_indices = @transform_4, window_bounds = array<i64: 1, 512>}, {pipeline_mode = #tpu.pipeline_mode<synchronous>, transform_indices = @transform_5, window_bounds = array<i64: 512, 256>}, {pipeline_mode = #tpu.pipeline_mode<synchronous>, transform_indices = @transform_6, window_bounds = array<i64: 1, 256>}, {pipeline_mode = #tpu.pipeline_mode<synchronous>, transform_indices = @transform_7, window_bounds = array<i64: 128, 512>}, {pipeline_mode = #tpu.pipeline_mode<synchronous>, transform_indices = @transform_8, window_bounds = array<i64: 1, 512>}, {pipeline_mode = #tpu.pipeline_mode<synchronous>, transform_indices = @transform_9, window_bounds = array<i64: 512, 896>}, {pipeline_mode = #tpu.pipeline_mode<synchronous>, transform_indices = @transform_10, window_bounds = array<i64: 1, 896>}, {transform_indices = @transform_11, window_bounds = array<i64: 16, 896>}, {transform_indices = @transform_12, window_bounds = array<i64: 8, 128>}]} {
    %c0 = arith.constant 0 : index
    %c0_0 = arith.constant 0 : index
    %0 = vector.load %arg1[%c0, %c0_0] : memref<16x896xbf16, #tpu.memory_space<vmem>>, vector<16x896xbf16>
    %c0_1 = arith.constant 0 : index
    %c0_2 = arith.constant 0 : index
    %1 = vector.load %arg4[%c0_1, %c0_2] : memref<896x512xbf16, #tpu.memory_space<vmem>>, vector<896x512xbf16>
    %cst = arith.constant dense<0.000000e+00> : vector<16x512xf32>
    %2 = tpu.matmul %0, %1, %cst {dimension_numbers = #tpu.dot_dimension_numbers<[1], [0], [0], [1], [0, 0, 1, 1], [], []>} : vector<16x896xbf16>, vector<896x512xbf16>, vector<16x512xf32> -> vector<16x512xf32>
    %c0_3 = arith.constant 0 : index
    %c0_4 = arith.constant 0 : index
    %3 = vector.load %arg5[%c0_3, %c0_4] : memref<1x512xf32, #tpu.memory_space<vmem>>, vector<1x512xf32>
    %4 = vector.broadcast %3 : vector<1x512xf32> to vector<16x512xf32>
    %5 = arith.addf %2, %4 : vector<16x512xf32>
    %cst_5 = arith.constant 0.000000e+00 : f32
    %6 = vector.broadcast %cst_5 : f32 to vector<16x512xf32>
    %7 = arith.maximumf %5, %6 : vector<16x512xf32>
    %8 = arith.truncf %7 : vector<16x512xf32> to vector<16x512xbf16>
    %c0_6 = arith.constant 0 : index
    %c0_7 = arith.constant 0 : index
    %9 = vector.load %arg6[%c0_6, %c0_7] : memref<512x256xbf16, #tpu.memory_space<vmem>>, vector<512x256xbf16>
    %cst_8 = arith.constant dense<0.000000e+00> : vector<16x256xf32>
    %10 = tpu.matmul %8, %9, %cst_8 {dimension_numbers = #tpu.dot_dimension_numbers<[1], [0], [0], [1], [0, 0, 1, 1], [], []>} : vector<16x512xbf16>, vector<512x256xbf16>, vector<16x256xf32> -> vector<16x256xf32>
    %c0_9 = arith.constant 0 : index
    %c0_10 = arith.constant 0 : index
    %11 = vector.load %arg7[%c0_9, %c0_10] : memref<1x256xf32, #tpu.memory_space<vmem>>, vector<1x256xf32>
    %12 = vector.broadcast %11 : vector<1x256xf32> to vector<16x256xf32>
    %13 = arith.addf %10, %12 : vector<16x256xf32>
    %14 = vector.extract_strided_slice %13 {offsets = [0, 0], sizes = [16, 128], strides = [1, 1]} : vector<16x256xf32> to vector<16x128xf32>
    %15 = vector.extract_strided_slice %13 {offsets = [0, 128], sizes = [16, 128], strides = [1, 1]} : vector<16x256xf32> to vector<16x128xf32>
    %16 = math.exp %15 : vector<16x128xf32>
    %c0_11 = arith.constant 0 : index
    %c0_12 = arith.constant 0 : index
    %17 = vector.load %arg2[%c0_11, %c0_12] : memref<16x128xbf16, #tpu.memory_space<vmem>>, vector<16x128xbf16>
    %18 = arith.extf %17 : vector<16x128xbf16> to vector<16x128xf32>
    %19 = arith.mulf %16, %18 : vector<16x128xf32>
    %20 = arith.addf %14, %19 : vector<16x128xf32>
    %c16_i32 = arith.constant 16 : i32
    %21 = arith.muli %arg0, %c16_i32 : i32
    %22 = tpu.iota {dimensions = array<i32: 0>} : vector<16x128xi32>
    %23 = vector.broadcast %21 : i32 to vector<16x128xi32>
    %24 = arith.addi %23, %22 : vector<16x128xi32>
    %25 = tpu.iota {dimensions = array<i32: 1>} : vector<16x128xi32>
    %c0_13 = arith.constant 0 : index
    %26 = memref.load %arg3[%c0_13] : memref<1xi32, #tpu.memory_space<smem>>
    %27 = vector.broadcast %26 : i32 to vector<16x128xi32>
    %28 = arith.cmpi slt, %24, %27 : vector<16x128xi32>
    %c2_i32 = arith.constant 2 : i32
    %29 = vector.broadcast %c2_i32 : i32 to vector<16x128xi32>
    %30 = arith.cmpi slt, %25, %29 : vector<16x128xi32>
    %31 = arith.andi %28, %30 : vector<16x128xi1>
    %32 = arith.mulf %16, %16 : vector<16x128xf32>
    %33 = arith.mulf %14, %14 : vector<16x128xf32>
    %34 = arith.addf %32, %33 : vector<16x128xf32>
    %35 = arith.subf %34, %15 : vector<16x128xf32>
    %cst_14 = arith.constant 5.000000e-01 : f32
    %36 = vector.broadcast %cst_14 : f32 to vector<16x128xf32>
    %37 = arith.subf %35, %36 : vector<16x128xf32>
    %cst_15 = arith.constant 0.000000e+00 : f32
    %38 = vector.broadcast %cst_15 : f32 to vector<16x128xf32>
    %39 = arith.select %31, %37, %38 : vector<16x128xi1>, vector<16x128xf32>
    %cst_16 = arith.constant dense<0.000000e+00> : vector<128xf32>
    %40 = vector.multi_reduction <add>, %39, %cst_16 [0] : vector<16x128xf32> to vector<128xf32>
    %41 = vector.shape_cast %40 : vector<128xf32> to vector<1x128xf32>
    %42 = tpu.iota {dimensions = array<i32: 0>} : vector<8x128xi32>
    %c0_i32 = arith.constant 0 : i32
    %43 = vector.broadcast %c0_i32 : i32 to vector<8x128xi32>
    %44 = arith.cmpi eq, %42, %43 : vector<8x128xi32>
    %cst_17 = arith.constant 0.000000e+00 : f32
    %45 = vector.shape_cast %41 : vector<1x128xf32> to vector<1x128xf32>
    %46 = vector.broadcast %45 : vector<1x128xf32> to vector<8x128xf32>
    %47 = vector.broadcast %cst_17 : f32 to vector<8x128xf32>
    %48 = arith.select %44, %46, %47 : vector<8x128xi1>, vector<8x128xf32>
    %c0_18 = arith.constant 0 : index
    %c0_19 = arith.constant 0 : index
    %49 = vector.load %arg13[%c0_18, %c0_19] : memref<8x128xf32, #tpu.memory_space<vmem>>, vector<8x128xf32>
    tpu.vector_store %arg13[%c0_18, %c0_19], %48 {strides = array<i32>} : memref<8x128xf32, #tpu.memory_space<vmem>>, vector<8x128xf32>,
    %50 = arith.truncf %20 : vector<16x128xf32> to vector<16x128xbf16>
    %c0_20 = arith.constant 0 : index
    %c0_21 = arith.constant 0 : index
    %51 = vector.load %arg8[%c0_20, %c0_21] : memref<128x512xbf16, #tpu.memory_space<vmem>>, vector<128x512xbf16>
    %cst_22 = arith.constant dense<0.000000e+00> : vector<16x512xf32>
    %52 = tpu.matmul %50, %51, %cst_22 {dimension_numbers = #tpu.dot_dimension_numbers<[1], [0], [0], [1], [0, 0, 1, 1], [], []>} : vector<16x128xbf16>, vector<128x512xbf16>, vector<16x512xf32> -> vector<16x512xf32>
    %c0_23 = arith.constant 0 : index
    %c0_24 = arith.constant 0 : index
    %53 = vector.load %arg9[%c0_23, %c0_24] : memref<1x512xf32, #tpu.memory_space<vmem>>, vector<1x512xf32>
    %54 = vector.broadcast %53 : vector<1x512xf32> to vector<16x512xf32>
    %55 = arith.addf %52, %54 : vector<16x512xf32>
    %cst_25 = arith.constant 0.000000e+00 : f32
    %56 = vector.broadcast %cst_25 : f32 to vector<16x512xf32>
    %57 = arith.maximumf %55, %56 : vector<16x512xf32>
    %58 = arith.truncf %57 : vector<16x512xf32> to vector<16x512xbf16>
    %c0_26 = arith.constant 0 : index
    %c0_27 = arith.constant 0 : index
    %59 = vector.load %arg10[%c0_26, %c0_27] : memref<512x896xbf16, #tpu.memory_space<vmem>>, vector<512x896xbf16>
    %cst_28 = arith.constant dense<0.000000e+00> : vector<16x896xf32>
    %60 = tpu.matmul %58, %59, %cst_28 {dimension_numbers = #tpu.dot_dimension_numbers<[1], [0], [0], [1], [0, 0, 1, 1], [], []>} : vector<16x512xbf16>, vector<512x896xbf16>, vector<16x896xf32> -> vector<16x896xf32>
    %c0_29 = arith.constant 0 : index
    %c0_30 = arith.constant 0 : index
    %61 = vector.load %arg11[%c0_29, %c0_30] : memref<1x896xf32, #tpu.memory_space<vmem>>, vector<1x896xf32>
    %62 = vector.broadcast %61 : vector<1x896xf32> to vector<16x896xf32>
    %63 = arith.addf %60, %62 : vector<16x896xf32>
    %cst_31 = arith.constant 0.000000e+00 : f32
    %64 = vector.broadcast %cst_31 : f32 to vector<16x896xf32>
    %65 = arith.subf %64, %63 : vector<16x896xf32>
    %66 = math.exp %65 : vector<16x896xf32>
    %cst_32 = arith.constant 1.000000e+00 : f32
    %67 = vector.broadcast %cst_32 : f32 to vector<16x896xf32>
    %68 = arith.addf %67, %66 : vector<16x896xf32>
    %69 = tpu.reciprocal %68 {approx = true} : vector<16x896xf32> -> vector<16x896xf32>
    %70 = arith.truncf %69 : vector<16x896xf32> to vector<16x896xbf16>
    %c0_33 = arith.constant 0 : index
    %c0_34 = arith.constant 0 : index
    %71 = vector.load %arg12[%c0_33, %c0_34] : memref<16x896xbf16, #tpu.memory_space<vmem>>, vector<16x896xbf16>
    tpu.vector_store %arg12[%c0_33, %c0_34], %70 {strides = array<i32>} : memref<16x896xbf16, #tpu.memory_space<vmem>>, vector<16x896xbf16>,
    return
  }
  func.func @transform_0(%arg0: i32) -> (i32, i32) {
    %c0_i32 = arith.constant 0 : i32
    %c0_i32_0 = arith.constant 0 : i32
    return %arg0, %c0_i32 : i32, i32
  }
  func.func @transform_1(%arg0: i32) -> (i32, i32) {
    %c0_i32 = arith.constant 0 : i32
    %c0_i32_0 = arith.constant 0 : i32
    return %arg0, %c0_i32 : i32, i32
  }
  func.func @transform_2(%arg0: i32) -> i32 {
    %c0_i32 = arith.constant 0 : i32
    %c0_i32_0 = arith.constant 0 : i32
    return %c0_i32 : i32
  }
  func.func @transform_3(%arg0: i32) -> (i32, i32) {
    %c0_i32 = arith.constant 0 : i32
    %c0_i32_0 = arith.constant 0 : i32
    %c0_i32_1 = arith.constant 0 : i32
    return %c0_i32, %c0_i32_0 : i32, i32
  }
  func.func @transform_4(%arg0: i32) -> (i32, i32) {
    %c0_i32 = arith.constant 0 : i32
    %c0_i32_0 = arith.constant 0 : i32
    %c0_i32_1 = arith.constant 0 : i32
    return %c0_i32, %c0_i32_0 : i32, i32
  }
  func.func @transform_5(%arg0: i32) -> (i32, i32) {
    %c0_i32 = arith.constant 0 : i32
    %c0_i32_0 = arith.constant 0 : i32
    %c0_i32_1 = arith.constant 0 : i32
    return %c0_i32, %c0_i32_0 : i32, i32
  }
  func.func @transform_6(%arg0: i32) -> (i32, i32) {
    %c0_i32 = arith.constant 0 : i32
    %c0_i32_0 = arith.constant 0 : i32
    %c0_i32_1 = arith.constant 0 : i32
    return %c0_i32, %c0_i32_0 : i32, i32
  }
  func.func @transform_7(%arg0: i32) -> (i32, i32) {
    %c0_i32 = arith.constant 0 : i32
    %c0_i32_0 = arith.constant 0 : i32
    %c0_i32_1 = arith.constant 0 : i32
    return %c0_i32, %c0_i32_0 : i32, i32
  }
  func.func @transform_8(%arg0: i32) -> (i32, i32) {
    %c0_i32 = arith.constant 0 : i32
    %c0_i32_0 = arith.constant 0 : i32
    %c0_i32_1 = arith.constant 0 : i32
    return %c0_i32, %c0_i32_0 : i32, i32
  }
  func.func @transform_9(%arg0: i32) -> (i32, i32) {
    %c0_i32 = arith.constant 0 : i32
    %c0_i32_0 = arith.constant 0 : i32
    %c0_i32_1 = arith.constant 0 : i32
    return %c0_i32, %c0_i32_0 : i32, i32
  }
  func.func @transform_10(%arg0: i32) -> (i32, i32) {
    %c0_i32 = arith.constant 0 : i32
    %c0_i32_0 = arith.constant 0 : i32
    %c0_i32_1 = arith.constant 0 : i32
    return %c0_i32, %c0_i32_0 : i32, i32
  }
  func.func @transform_11(%arg0: i32) -> (i32, i32) {
    %c0_i32 = arith.constant 0 : i32
    %c0_i32_0 = arith.constant 0 : i32
    return %arg0, %c0_i32 : i32, i32
  }
  func.func @transform_12(%arg0: i32) -> (i32, i32) {
    %c0_i32 = arith.constant 0 : i32
    %c0_i32_0 = arith.constant 0 : i32
    return %arg0, %c0_i32 : i32, i32
  }
}

</mosaic_0001>

<llo_original>
// kernel: tpu_custom_call.1
$region0: #{tpu_custom_call.1}
  #allocation0 [shape = 'u32[]', space=smem, size = 0x4, offset = 0x4, fixed_abs, tag = 'smem constant byte address 0x4 - core index']
  #allocation1 [shape = 'u32[144,128]{1,0:T(1,128)}', space=vmem, size = 0x12000, scoped, tag = 'internal scratch']
  #allocation2 [shape = 's32[1]{0:T(128)S(6)}', space=smem, size = 0x200, scoped, tag = 'scoped memory for tpu_custom_call.1']
  %s0 = inlined_call_operand.hbm [shape: bf16[16,896], index: 0, kind: input, shape index: {}]
  %s1 = inlined_call_operand.hbm [shape: bf16[16,128], index: 1, kind: input, shape index: {}]
  %s2 = inlined_call_operand.<no memory space> [shape: s32[1], index: 2, kind: input, shape index: {}]
  %s3 = inlined_call_operand.hbm [shape: bf16[896,512], index: 3, kind: input, shape index: {}]
  %s4 = inlined_call_operand.vmem [shape: f32[1,512], index: 4, kind: input, shape index: {}]
  %s5 = inlined_call_operand.hbm [shape: bf16[512,256], index: 5, kind: input, shape index: {}]
  %s6 = inlined_call_operand.vmem [shape: f32[1,256], index: 6, kind: input, shape index: {}]
  %s7 = inlined_call_operand.hbm [shape: bf16[128,512], index: 7, kind: input, shape index: {}]
  %s8 = inlined_call_operand.vmem [shape: f32[1,512], index: 8, kind: input, shape index: {}]
  %s9 = inlined_call_operand.hbm [shape: bf16[512,896], index: 9, kind: input, shape index: {}]
  %s10 = inlined_call_operand.vmem [shape: f32[1,896], index: 10, kind: input, shape index: {}]
  %s11 = inlined_call_operand.hbm [shape: bf16[16,896], index: 11, kind: output, shape index: {0}]
  %s12 = inlined_call_operand.hbm [shape: f32[8,128], index: 12, kind: output, shape index: {1}]
  %13 = xla_tuple %s11, %s12
  %s14 = sld [smem:[#allocation0]]
  $region86: #{tpu_custom_call.1} parent=0
    _
  %s16 = ssub.s32 1, %s14
  %s17 = scalar_select 0, %s16, %s14
  %18 = sst [smem:[#allocation2]] %s2
  $region1: #{tpu_custom_call.1} parent=0
    #allocation3 [shape = 'u8[28672]{0}', space=vmem, size = 0x7000, scoped, tag = 'input window, operand 0, single buffered']
    #allocation4 [shape = 's32[1]{0}', space=sflag, size = 0x4, scoped, tag = 'scoped memory for tpu_custom_call.1']
    #allocation5 [shape = 's32[1]{0}', space=sflag, size = 0x4, scoped, tag = 'scoped memory for tpu_custom_call.1']
    #allocation6 [shape = 'u8[4096]{0}', space=vmem, size = 0x1000, scoped, tag = 'input window, operand 1, single buffered']
    #allocation7 [shape = 's32[1]{0}', space=sflag, size = 0x4, scoped, tag = 'scoped memory for tpu_custom_call.1']
    #allocation8 [shape = 'u8[917504]{0}', space=vmem, size = 0xe0000, scoped, tag = 'input window, operand 3, single buffered']
    #allocation9 [shape = 'u8[262144]{0}', space=vmem, size = 0x40000, scoped, tag = 'input window, operand 5, single buffered']
    #allocation10 [shape = 's32[1]{0}', space=sflag, size = 0x4, scoped, tag = 'scoped memory for tpu_custom_call.1']
    #allocation11 [shape = 'u8[131072]{0}', space=vmem, size = 0x20000, scoped, tag = 'input window, operand 7, single buffered']
    #allocation12 [shape = 'u8[917504]{0}', space=vmem, size = 0xe0000, scoped, tag = 'input window, operand 9, single buffered']
    #allocation13 [shape = 's32[1]{0}', space=sflag, size = 0x4, scoped, tag = 'scoped memory for tpu_custom_call.1']
    #allocation14 [shape = 'u8[28672]{0}', space=vmem, size = 0x7000, scoped, tag = 'output window, operand 0, single buffered']
    #allocation15 [shape = 'u8[4096]{0}', space=vmem, size = 0x1000, scoped, tag = 'output window, operand 1, single buffered']
    #allocation16 [shape = 's32[1]{0}', space=sflag, size = 0x4, scoped, tag = 'scoped memory for tpu_custom_call.1']
    %19 = vsyncpa [#allocation4], 0
    %20 = vsyncpa [#allocation7], 0
    %21 = vsyncpa [#allocation10], 0
    %22 = vsyncpa [#allocation13], 0
    %23 = vsyncpa [#allocation5], 0
    %24 = vsyncpa [#allocation16], 0
    // Predicated region
    $region2: #{tpu_custom_call.1} parent=1 // pred_check
      _
    $region3: #{tpu_custom_call.1} parent=1 // pred_check_branch
      %26 = sbr.rel (0) target = $region5
    $region4: #{tpu_custom_call.1} parent=1 // pred_region
      %s28 = ssub.s32 896, 896
      %29 = vsyncadd [#allocation4], %s28
      %s30 = sshll.u32 [#allocation3], 4
      %s31 = int_to_ptr.vmem [resolvable:$true] %s30
      %36 = dma.hbm_to_vmem [thread:$0]  %s0, 896, %s31, [#allocation4], 448, 448, 28
    $region5: #{tpu_custom_call.1} parent=1 // pred_fallthru
      _
    // Predicated region
    $region6: #{tpu_custom_call.1} parent=1 // pred_check
      _
    $region7: #{tpu_custom_call.1} parent=1 // pred_check_branch
      %38 = sbr.rel (0) target = $region9
    $region8: #{tpu_custom_call.1} parent=1 // pred_region
      %s40 = ssub.s32 128, 128
      %41 = vsyncadd [#allocation7], %s40
      %s42 = sshll.u32 [#allocation6], 4
      %s43 = int_to_ptr.vmem [resolvable:$true] %s42
      %48 = dma.hbm_to_vmem [thread:$0]  %s1, 128, %s43, [#allocation7], 64, 64, 4
    $region9: #{tpu_custom_call.1} parent=1 // pred_fallthru
      _
    // Predicated region
    $region10: #{tpu_custom_call.1} parent=1 // pred_check
      _
    $region11: #{tpu_custom_call.1} parent=1 // pred_check_branch
      %50 = sbr.rel (0) target = $region13
    $region12: #{tpu_custom_call.1} parent=1 // pred_region
      _
    $region13: #{tpu_custom_call.1} parent=1 // pred_fallthru
      _
    // Predicated region
    $region14: #{tpu_custom_call.1} parent=1 // pred_check
      _
    $region15: #{tpu_custom_call.1} parent=1 // pred_check_branch
      %52 = sbr.rel (0) target = $region17
    $region16: #{tpu_custom_call.1} parent=1 // pred_region
      %s54 = ssub.s32 28672, 28672
      %55 = vsyncadd [#allocation7], %s54
      %s56 = sshll.u32 [#allocation8], 4
      %s57 = int_to_ptr.vmem [resolvable:$true] %s56
      %62 = dma.hbm_to_vmem [thread:$0]  %s3, 28672, %s57, [#allocation7], 256, 256, 16
    $region17: #{tpu_custom_call.1} parent=1 // pred_fallthru
      _
    // Predicated region
    $region18: #{tpu_custom_call.1} parent=1 // pred_check
      _
    $region19: #{tpu_custom_call.1} parent=1 // pred_check_branch
      %64 = sbr.rel (0) target = $region21
    $region20: #{tpu_custom_call.1} parent=1 // pred_region
      _
    $region21: #{tpu_custom_call.1} parent=1 // pred_fallthru
      _
    // Predicated region
    $region22: #{tpu_custom_call.1} parent=1 // pred_check
      _
    $region23: #{tpu_custom_call.1} parent=1 // pred_check_branch
      %66 = sbr.rel (0) target = $region25
    $region24: #{tpu_custom_call.1} parent=1 // pred_region
      %s68 = ssub.s32 8192, 8192
      %69 = vsyncadd [#allocation10], %s68
      %s70 = sshll.u32 [#allocation9], 4
      %s71 = int_to_ptr.vmem [resolvable:$true] %s70
      %76 = dma.hbm_to_vmem [thread:$0]  %s5, 8192, %s71, [#allocation10], 128, 128, 8
    $region25: #{tpu_custom_call.1} parent=1 // pred_fallthru
      _
    // Predicated region
    $region26: #{tpu_custom_call.1} parent=1 // pred_check
      _
    $region27: #{tpu_custom_call.1} parent=1 // pred_check_branch
      %78 = sbr.rel (0) target = $region29
    $region28: #{tpu_custom_call.1} parent=1 // pred_region
      _
    $region29: #{tpu_custom_call.1} parent=1 // pred_fallthru
      _
    // Predicated region
    $region30: #{tpu_custom_call.1} parent=1 // pred_check
      _
    $region31: #{tpu_custom_call.1} parent=1 // pred_check_branch
      %80 = sbr.rel (0) target = $region33
    $region32: #{tpu_custom_call.1} parent=1 // pred_region
      %s82 = ssub.s32 4096, 4096
      %83 = vsyncadd [#allocation10], %s82
      %s84 = sshll.u32 [#allocation11], 4
      %s85 = int_to_ptr.vmem [resolvable:$true] %s84
      %90 = dma.hbm_to_vmem [thread:$0]  %s7, 4096, %s85, [#allocation10], 256, 256, 16
    $region33: #{tpu_custom_call.1} parent=1 // pred_fallthru
      _
    // Predicated region
    $region34: #{tpu_custom_call.1} parent=1 // pred_check
      _
    $region35: #{tpu_custom_call.1} parent=1 // pred_check_branch
      %92 = sbr.rel (0) target = $region37
    $region36: #{tpu_custom_call.1} parent=1 // pred_region
      _
    $region37: #{tpu_custom_call.1} parent=1 // pred_fallthru
      _
    // Predicated region
    $region38: #{tpu_custom_call.1} parent=1 // pred_check
      _
    $region39: #{tpu_custom_call.1} parent=1 // pred_check_branch
      %94 = sbr.rel (0) target = $region41
    $region40: #{tpu_custom_call.1} parent=1 // pred_region
      %s96 = ssub.s32 28672, 28672
      %97 = vsyncadd [#allocation13], %s96
      %s98 = sshll.u32 [#allocation12], 4
      %s99 = int_to_ptr.vmem [resolvable:$true] %s98
      %104 = dma.hbm_to_vmem [thread:$0]  %s9, 28672, %s99, [#allocation13], 448, 448, 28
    $region41: #{tpu_custom_call.1} parent=1 // pred_fallthru
      _
    // Predicated region
    $region42: #{tpu_custom_call.1} parent=1 // pred_check
      _
    $region43: #{tpu_custom_call.1} parent=1 // pred_check_branch
      %106 = sbr.rel (0) target = $region45
    $region44: #{tpu_custom_call.1} parent=1 // pred_region
      _
    $region45: #{tpu_custom_call.1} parent=1 // pred_fallthru
      _
    // Predicated region
    $region46: #{tpu_custom_call.1} parent=1 // pred_check
      _
    $region47: #{tpu_custom_call.1} parent=1 // pred_check_branch
      %108 = sbr.rel (0) target = $region49
    $region48: #{tpu_custom_call.1} parent=1 // pred_region
      %109 = dma.done [#allocation4], 896
    $region49: #{tpu_custom_call.1} parent=1 // pred_fallthru
      _
    // Predicated region
    $region50: #{tpu_custom_call.1} parent=1 // pred_check
      _
    $region51: #{tpu_custom_call.1} parent=1 // pred_check_branch
      %111 = sbr.rel (0) target = $region53
    $region52: #{tpu_custom_call.1} parent=1 // pred_region
      %112 = dma.done [#allocation7], 128
    $region53: #{tpu_custom_call.1} parent=1 // pred_fallthru
      _
    // Predicated region
    $region54: #{tpu_custom_call.1} parent=1 // pred_check
      _
    $region55: #{tpu_custom_call.1} parent=1 // pred_check_branch
      %114 = sbr.rel (0) target = $region57
    $region56: #{tpu_custom_call.1} parent=1 // pred_region
      %115 = dma.done [#allocation7], 28672
    $region57: #{tpu_custom_call.1} parent=1 // pred_fallthru
      _
    // Predicated region
    $region58: #{tpu_custom_call.1} parent=1 // pred_check
      _
    $region59: #{tpu_custom_call.1} parent=1 // pred_check_branch
      %117 = sbr.rel (0) target = $region61
    $region60: #{tpu_custom_call.1} parent=1 // pred_region
      %118 = dma.done [#allocation10], 8192
    $region61: #{tpu_custom_call.1} parent=1 // pred_fallthru
      _
    // Predicated region
    $region62: #{tpu_custom_call.1} parent=1 // pred_check
      _
    $region63: #{tpu_custom_call.1} parent=1 // pred_check_branch
      %120 = sbr.rel (0) target = $region65
    $region64: #{tpu_custom_call.1} parent=1 // pred_region
      %121 = dma.done [#allocation10], 4096
    $region65: #{tpu_custom_call.1} parent=1 // pred_fallthru
      _
    // Predicated region
    $region66: #{tpu_custom_call.1} parent=1 // pred_check
      _
    $region67: #{tpu_custom_call.1} parent=1 // pred_check_branch
      %123 = sbr.rel (0) target = $region69
    $region68: #{tpu_custom_call.1} parent=1 // pred_region
      %124 = dma.done [#allocation13], 28672
    $region69: #{tpu_custom_call.1} parent=1 // pred_fallthru
      _
    %v126 = vld [vmem:[#allocation3] sm:$0xff]
    %v127 = vld [vmem:[#allocation3 + $0x8] sm:$0xff]
    %v128 = vld [vmem:[#allocation3 + $0x10] sm:$0xff]
    %v129 = vld [vmem:[#allocation3 + $0x18] sm:$0xf]
    %v130 = vld [vmem:[#allocation3 + $0x1c] sm:$0xff]
    %v131 = vld [vmem:[#allocation3 + $0x24] sm:$0xff]
    %v132 = vld [vmem:[#allocation3 + $0x2c] sm:$0xff]
    %v133 = vld [vmem:[#allocation3 + $0x34] sm:$0xf]
    %v134 = vld [vmem:[#allocation8] sm:$0xff]
    %v135 = vld [vmem:[#allocation8 + $0x8] sm:$0xff]
    %v136 = vld [vmem:[#allocation8 + $0x10] sm:$0xff]
    %v137 = vld [vmem:[#allocation8 + $0x18] sm:$0xff]
    %v138 = vld [vmem:[#allocation8 + $0x20] sm:$0xff]
    %v139 = vld [vmem:[#allocation8 + $0x28] sm:$0xff]
    %v140 = vld [vmem:[#allocation8 + $0x30] sm:$0xff]
    %v141 = vld [vmem:[#allocation8 + $0x38] sm:$0xff]
    %v142 = vld [vmem:[#allocation8 + $0x40] sm:$0xff]
    %v143 = vld [vmem:[#allocation8 + $0x48] sm:$0xff]
    %v144 = vld [vmem:[#allocation8 + $0x50] sm:$0xff]
    %v145 = vld [vmem:[#allocation8 + $0x58] sm:$0xff]
    %v146 = vld [vmem:[#allocation8 + $0x60] sm:$0xff]
    %v147 = vld [vmem:[#allocation8 + $0x68] sm:$0xff]
    %v148 = vld [vmem:[#allocation8 + $0x70] sm:$0xff]
    %v149 = vld [vmem:[#allocation8 + $0x78] sm:$0xff]
    %v150 = vld [vmem:[#allocation8 + $0x80] sm:$0xff]
    %v151 = vld [vmem:[#allocation8 + $0x88] sm:$0xff]
    %v152 = vld [vmem:[#allocation8 + $0x90] sm:$0xff]
    %v153 = vld [vmem:[#allocation8 + $0x98] sm:$0xff]
    %v154 = vld [vmem:[#allocation8 + $0xa0] sm:$0xff]
    %v155 = vld [vmem:[#allocation8 + $0xa8] sm:$0xff]
    %v156 = vld [vmem:[#allocation8 + $0xb0] sm:$0xff]
    %v157 = vld [vmem:[#allocation8 + $0xb8] sm:$0xff]
    %v158 = vld [vmem:[#allocation8 + $0xc0] sm:$0xff]
    %v159 = vld [vmem:[#allocation8 + $0xc8] sm:$0xff]
    %v160 = vld [vmem:[#allocation8 + $0xd0] sm:$0xff]
    %v161 = vld [vmem:[#allocation8 + $0xd8] sm:$0xff]
    %v162 = vld [vmem:[#allocation8 + $0xe0] sm:$0xff]
    %v163 = vld [vmem:[#allocation8 + $0xe8] sm:$0xff]
    %v164 = vld [vmem:[#allocation8 + $0xf0] sm:$0xff]
    %v165 = vld [vmem:[#allocation8 + $0xf8] sm:$0xff]
    %v166 = vld [vmem:[#allocation8 + $0x100] sm:$0xff]
    %v167 = vld [vmem:[#allocation8 + $0x108] sm:$0xff]
    %v168 = vld [vmem:[#allocation8 + $0x110] sm:$0xff]
    %v169 = vld [vmem:[#allocation8 + $0x118] sm:$0xff]
    %v170 = vld [vmem:[#allocation8 + $0x120] sm:$0xff]
    %v171 = vld [vmem:[#allocation8 + $0x128] sm:$0xff]
    %v172 = vld [vmem:[#allocation8 + $0x130] sm:$0xff]
    %v173 = vld [vmem:[#allocation8 + $0x138] sm:$0xff]
    %v174 = vld [vmem:[#allocation8 + $0x140] sm:$0xff]
    %v175 = vld [vmem:[#allocation8 + $0x148] sm:$0xff]
    %v176 = vld [vmem:[#allocation8 + $0x150] sm:$0xff]
    %v177 = vld [vmem:[#allocation8 + $0x158] sm:$0xff]
    %v178 = vld [vmem:[#allocation8 + $0x160] sm:$0xff]
    %v179 = vld [vmem:[#allocation8 + $0x168] sm:$0xff]
    %v180 = vld [vmem:[#allocation8 + $0x170] sm:$0xff]
    %v181 = vld [vmem:[#allocation8 + $0x178] sm:$0xff]
    %v182 = vld [vmem:[#allocation8 + $0x180] sm:$0xff]
    %v183 = vld [vmem:[#allocation8 + $0x188] sm:$0xff]
    %v184 = vld [vmem:[#allocation8 + $0x190] sm:$0xff]
    %v185 = vld [vmem:[#allocation8 + $0x198] sm:$0xff]
    %v186 = vld [vmem:[#allocation8 + $0x1a0] sm:$0xff]
    %v187 = vld [vmem:[#allocation8 + $0x1a8] sm:$0xff]
    %v188 = vld [vmem:[#allocation8 + $0x1b0] sm:$0xff]
    %v189 = vld [vmem:[#allocation8 + $0x1b8] sm:$0xff]
    %v190 = vld [vmem:[#allocation8 + $0x1c0] sm:$0xff]
    %v191 = vld [vmem:[#allocation8 + $0x1c8] sm:$0xff]
    %v192 = vld [vmem:[#allocation8 + $0x1d0] sm:$0xff]
    %v193 = vld [vmem:[#allocation8 + $0x1d8] sm:$0xff]
    %v194 = vld [vmem:[#allocation8 + $0x1e0] sm:$0xff]
    %v195 = vld [vmem:[#allocation8 + $0x1e8] sm:$0xff]
    %v196 = vld [vmem:[#allocation8 + $0x1f0] sm:$0xff]
    %v197 = vld [vmem:[#allocation8 + $0x1f8] sm:$0xff]
    %v198 = vld [vmem:[#allocation8 + $0x200] sm:$0xff]
    %v199 = vld [vmem:[#allocation8 + $0x208] sm:$0xff]
    %v200 = vld [vmem:[#allocation8 + $0x210] sm:$0xff]
    %v201 = vld [vmem:[#allocation8 + $0x218] sm:$0xff]
    %v202 = vld [vmem:[#allocation8 + $0x220] sm:$0xff]
    %v203 = vld [vmem:[#allocation8 + $0x228] sm:$0xff]
    %v204 = vld [vmem:[#allocation8 + $0x230] sm:$0xff]
    %v205 = vld [vmem:[#allocation8 + $0x238] sm:$0xff]
    %v206 = vld [vmem:[#allocation8 + $0x240] sm:$0xff]
    %v207 = vld [vmem:[#allocation8 + $0x248] sm:$0xff]
    %v208 = vld [vmem:[#allocation8 + $0x250] sm:$0xff]
    %v209 = vld [vmem:[#allocation8 + $0x258] sm:$0xff]
    %v210 = vld [vmem:[#allocation8 + $0x260] sm:$0xff]
    %v211 = vld [vmem:[#allocation8 + $0x268] sm:$0xff]
    %v212 = vld [vmem:[#allocation8 + $0x270] sm:$0xff]
    %v213 = vld [vmem:[#allocation8 + $0x278] sm:$0xff]
    %v214 = vld [vmem:[#allocation8 + $0x280] sm:$0xff]
    %v215 = vld [vmem:[#allocation8 + $0x288] sm:$0xff]
    %v216 = vld [vmem:[#allocation8 + $0x290] sm:$0xff]
    %v217 = vld [vmem:[#allocation8 + $0x298] sm:$0xff]
    %v218 = vld [vmem:[#allocation8 + $0x2a0] sm:$0xff]
    %v219 = vld [vmem:[#allocation8 + $0x2a8] sm:$0xff]
    %v220 = vld [vmem:[#allocation8 + $0x2b0] sm:$0xff]
    %v221 = vld [vmem:[#allocation8 + $0x2b8] sm:$0xff]
    %v222 = vld [vmem:[#allocation8 + $0x2c0] sm:$0xff]
    %v223 = vld [vmem:[#allocation8 + $0x2c8] sm:$0xff]
    %v224 = vld [vmem:[#allocation8 + $0x2d0] sm:$0xff]
    %v225 = vld [vmem:[#allocation8 + $0x2d8] sm:$0xff]
    %v226 = vld [vmem:[#allocation8 + $0x2e0] sm:$0xff]
    %v227 = vld [vmem:[#allocation8 + $0x2e8] sm:$0xff]
    %v228 = vld [vmem:[#allocation8 + $0x2f0] sm:$0xff]
    %v229 = vld [vmem:[#allocation8 + $0x2f8] sm:$0xff]
    %v230 = vld [vmem:[#allocation8 + $0x300] sm:$0xff]
    %v231 = vld [vmem:[#allocation8 + $0x308] sm:$0xff]
    %v232 = vld [vmem:[#allocation8 + $0x310] sm:$0xff]
    %v233 = vld [vmem:[#allocation8 + $0x318] sm:$0xff]
    %v234 = vld [vmem:[#allocation8 + $0x320] sm:$0xff]
    %v235 = vld [vmem:[#allocation8 + $0x328] sm:$0xff]
    %v236 = vld [vmem:[#allocation8 + $0x330] sm:$0xff]
    %v237 = vld [vmem:[#allocation8 + $0x338] sm:$0xff]
    %v238 = vld [vmem:[#allocation8 + $0x340] sm:$0xff]
    %v239 = vld [vmem:[#allocation8 + $0x348] sm:$0xff]
    %v240 = vld [vmem:[#allocation8 + $0x350] sm:$0xff]
    %v241 = vld [vmem:[#allocation8 + $0x358] sm:$0xff]
    %v242 = vld [vmem:[#allocation8 + $0x360] sm:$0xff]
    %v243 = vld [vmem:[#allocation8 + $0x368] sm:$0xff]
    %v244 = vld [vmem:[#allocation8 + $0x370] sm:$0xff]
    %v245 = vld [vmem:[#allocation8 + $0x378] sm:$0xff]
    %v246 = vld [vmem:[#allocation8 + $0x380] sm:$0xff]
    %v247 = vld [vmem:[#allocation8 + $0x388] sm:$0xff]
    %v248 = vld [vmem:[#allocation8 + $0x390] sm:$0xff]
    %v249 = vld [vmem:[#allocation8 + $0x398] sm:$0xff]
    %v250 = vld [vmem:[#allocation8 + $0x3a0] sm:$0xff]
    %v251 = vld [vmem:[#allocation8 + $0x3a8] sm:$0xff]
    %v252 = vld [vmem:[#allocation8 + $0x3b0] sm:$0xff]
    %v253 = vld [vmem:[#allocation8 + $0x3b8] sm:$0xff]
    %v254 = vld [vmem:[#allocation8 + $0x3c0] sm:$0xff]
    %v255 = vld [vmem:[#allocation8 + $0x3c8] sm:$0xff]
    %v256 = vld [vmem:[#allocation8 + $0x3d0] sm:$0xff]
    %v257 = vld [vmem:[#allocation8 + $0x3d8] sm:$0xff]
    %v258 = vld [vmem:[#allocation8 + $0x3e0] sm:$0xff]
    %v259 = vld [vmem:[#allocation8 + $0x3e8] sm:$0xff]
    %v260 = vld [vmem:[#allocation8 + $0x3f0] sm:$0xff]
    %v261 = vld [vmem:[#allocation8 + $0x3f8] sm:$0xff]
    %v262 = vld [vmem:[#allocation8 + $0x400] sm:$0xff]
    %v263 = vld [vmem:[#allocation8 + $0x408] sm:$0xff]
    %v264 = vld [vmem:[#allocation8 + $0x410] sm:$0xff]
    %v265 = vld [vmem:[#allocation8 + $0x418] sm:$0xff]
    %v266 = vld [vmem:[#allocation8 + $0x420] sm:$0xff]
    %v267 = vld [vmem:[#allocation8 + $0x428] sm:$0xff]
    %v268 = vld [vmem:[#allocation8 + $0x430] sm:$0xff]
    %v269 = vld [vmem:[#allocation8 + $0x438] sm:$0xff]
    %v270 = vld [vmem:[#allocation8 + $0x440] sm:$0xff]
    %v271 = vld [vmem:[#allocation8 + $0x448] sm:$0xff]
    %v272 = vld [vmem:[#allocation8 + $0x450] sm:$0xff]
    %v273 = vld [vmem:[#allocation8 + $0x458] sm:$0xff]
    %v274 = vld [vmem:[#allocation8 + $0x460] sm:$0xff]
    %v275 = vld [vmem:[#allocation8 + $0x468] sm:$0xff]
    %v276 = vld [vmem:[#allocation8 + $0x470] sm:$0xff]
    %v277 = vld [vmem:[#allocation8 + $0x478] sm:$0xff]
    %v278 = vld [vmem:[#allocation8 + $0x480] sm:$0xff]
    %v279 = vld [vmem:[#allocation8 + $0x488] sm:$0xff]
    %v280 = vld [vmem:[#allocation8 + $0x490] sm:$0xff]
    %v281 = vld [vmem:[#allocation8 + $0x498] sm:$0xff]
    %v282 = vld [vmem:[#allocation8 + $0x4a0] sm:$0xff]
    %v283 = vld [vmem:[#allocation8 + $0x4a8] sm:$0xff]
    %v284 = vld [vmem:[#allocation8 + $0x4b0] sm:$0xff]
    %v285 = vld [vmem:[#allocation8 + $0x4b8] sm:$0xff]
    %v286 = vld [vmem:[#allocation8 + $0x4c0] sm:$0xff]
    %v287 = vld [vmem:[#allocation8 + $0x4c8] sm:$0xff]
    %v288 = vld [vmem:[#allocation8 + $0x4d0] sm:$0xff]
    %v289 = vld [vmem:[#allocation8 + $0x4d8] sm:$0xff]
    %v290 = vld [vmem:[#allocation8 + $0x4e0] sm:$0xff]
    %v291 = vld [vmem:[#allocation8 + $0x4e8] sm:$0xff]
    %v292 = vld [vmem:[#allocation8 + $0x4f0] sm:$0xff]
    %v293 = vld [vmem:[#allocation8 + $0x4f8] sm:$0xff]
    %v294 = vld [vmem:[#allocation8 + $0x500] sm:$0xff]
    %v295 = vld [vmem:[#allocation8 + $0x508] sm:$0xff]
    %v296 = vld [vmem:[#allocation8 + $0x510] sm:$0xff]
    %v297 = vld [vmem:[#allocation8 + $0x518] sm:$0xff]
    %v298 = vld [vmem:[#allocation8 + $0x520] sm:$0xff]
    %v299 = vld [vmem:[#allocation8 + $0x528] sm:$0xff]
    %v300 = vld [vmem:[#allocation8 + $0x530] sm:$0xff]
    %v301 = vld [vmem:[#allocation8 + $0x538] sm:$0xff]
    %v302 = vld [vmem:[#allocation8 + $0x540] sm:$0xff]
    %v303 = vld [vmem:[#allocation8 + $0x548] sm:$0xff]
    %v304 = vld [vmem:[#allocation8 + $0x550] sm:$0xff]
    %v305 = vld [vmem:[#allocation8 + $0x558] sm:$0xff]
    %v306 = vld [vmem:[#allocation8 + $0x560] sm:$0xff]
    %v307 = vld [vmem:[#allocation8 + $0x568] sm:$0xff]
    %v308 = vld [vmem:[#allocation8 + $0x570] sm:$0xff]
    %v309 = vld [vmem:[#allocation8 + $0x578] sm:$0xff]
    %v310 = vld [vmem:[#allocation8 + $0x580] sm:$0xff]
    %v311 = vld [vmem:[#allocation8 + $0x588] sm:$0xff]
    %v312 = vld [vmem:[#allocation8 + $0x590] sm:$0xff]
    %v313 = vld [vmem:[#allocation8 + $0x598] sm:$0xff]
    %v314 = vld [vmem:[#allocation8 + $0x5a0] sm:$0xff]
    %v315 = vld [vmem:[#allocation8 + $0x5a8] sm:$0xff]
    %v316 = vld [vmem:[#allocation8 + $0x5b0] sm:$0xff]
    %v317 = vld [vmem:[#allocation8 + $0x5b8] sm:$0xff]
    %v318 = vld [vmem:[#allocation8 + $0x5c0] sm:$0xff]
    %v319 = vld [vmem:[#allocation8 + $0x5c8] sm:$0xff]
    %v320 = vld [vmem:[#allocation8 + $0x5d0] sm:$0xff]
    %v321 = vld [vmem:[#allocation8 + $0x5d8] sm:$0xff]
    %v322 = vld [vmem:[#allocation8 + $0x5e0] sm:$0xff]
    %v323 = vld [vmem:[#allocation8 + $0x5e8] sm:$0xff]
    %v324 = vld [vmem:[#allocation8 + $0x5f0] sm:$0xff]
    %v325 = vld [vmem:[#allocation8 + $0x5f8] sm:$0xff]
    %v326 = vld [vmem:[#allocation8 + $0x600] sm:$0xff]
    %v327 = vld [vmem:[#allocation8 + $0x608] sm:$0xff]
    %v328 = vld [vmem:[#allocation8 + $0x610] sm:$0xff]
    %v329 = vld [vmem:[#allocation8 + $0x618] sm:$0xff]
    %v330 = vld [vmem:[#allocation8 + $0x620] sm:$0xff]
    %v331 = vld [vmem:[#allocation8 + $0x628] sm:$0xff]
    %v332 = vld [vmem:[#allocation8 + $0x630] sm:$0xff]
    %v333 = vld [vmem:[#allocation8 + $0x638] sm:$0xff]
    %v334 = vld [vmem:[#allocation8 + $0x640] sm:$0xff]
    %v335 = vld [vmem:[#allocation8 + $0x648] sm:$0xff]
    %v336 = vld [vmem:[#allocation8 + $0x650] sm:$0xff]
    %v337 = vld [vmem:[#allocation8 + $0x658] sm:$0xff]
    %v338 = vld [vmem:[#allocation8 + $0x660] sm:$0xff]
    %v339 = vld [vmem:[#allocation8 + $0x668] sm:$0xff]
    %v340 = vld [vmem:[#allocation8 + $0x670] sm:$0xff]
    %v341 = vld [vmem:[#allocation8 + $0x678] sm:$0xff]
    %v342 = vld [vmem:[#allocation8 + $0x680] sm:$0xff]
    %v343 = vld [vmem:[#allocation8 + $0x688] sm:$0xff]
    %v344 = vld [vmem:[#allocation8 + $0x690] sm:$0xff]
    %v345 = vld [vmem:[#allocation8 + $0x698] sm:$0xff]
    %v346 = vld [vmem:[#allocation8 + $0x6a0] sm:$0xff]
    %v347 = vld [vmem:[#allocation8 + $0x6a8] sm:$0xff]
    %v348 = vld [vmem:[#allocation8 + $0x6b0] sm:$0xff]
    %v349 = vld [vmem:[#allocation8 + $0x6b8] sm:$0xff]
    %v350 = vld [vmem:[#allocation8 + $0x6c0] sm:$0xff]
    %v351 = vld [vmem:[#allocation8 + $0x6c8] sm:$0xff]
    %v352 = vld [vmem:[#allocation8 + $0x6d0] sm:$0xff]
    %v353 = vld [vmem:[#allocation8 + $0x6d8] sm:$0xff]
    %v354 = vld [vmem:[#allocation8 + $0x6e0] sm:$0xff]
    %v355 = vld [vmem:[#allocation8 + $0x6e8] sm:$0xff]
    %v356 = vld [vmem:[#allocation8 + $0x6f0] sm:$0xff]
    %v357 = vld [vmem:[#allocation8 + $0x6f8] sm:$0xff]
    %v358 = vld [vmem:[%s4] sm:$0xf]
    %v360 = vlaneseq
    %v361 = vshrl.u32 %v360, 7
    %v362 = vsub.s32 0, %v361
    %v363 = vrot.slane %v358, %v362
    %v364 = vlaneseq
    %v365 = vshrl.u32 %v364, 7
    %v366 = vsub.s32 1, %v365
    %v367 = vrot.slane %v358, %v366
    %v368 = vlaneseq
    %v369 = vshrl.u32 %v368, 7
    %v370 = vsub.s32 2, %v369
    %v371 = vrot.slane %v358, %v370
    %v372 = vlaneseq
    %v373 = vshrl.u32 %v372, 7
    %v374 = vsub.s32 3, %v373
    %v375 = vrot.slane %v358, %v374
    %v388 = vunpack.c.l.b16 %v126
    %v389 = vunpack.c.h.b16 %v126
    %v390 = vunpack.c.l.b16 %v127
    %v391 = vunpack.c.h.b16 %v127
    %v392 = vunpack.c.l.b16 %v128
    %v393 = vunpack.c.h.b16 %v128
    %v394 = vunpack.c.l.b16 %v129
    %v395 = vunpack.c.l.b16 %v130
    %v396 = vunpack.c.h.b16 %v130
    %v397 = vunpack.c.l.b16 %v131
    %v398 = vunpack.c.h.b16 %v131
    %v399 = vunpack.c.l.b16 %v132
    %v400 = vunpack.c.h.b16 %v132
    %v401 = vunpack.c.l.b16 %v133
    %v402 = vpack.c.b16 %v395, %v388
    %v403 = vpack.c.b16 %v396, %v389
    %v404 = vpack.c.b16 %v397, %v390
    %v405 = vpack.c.b16 %v398, %v391
    %v406 = vpack.c.b16 %v399, %v392
    %v407 = vpack.c.b16 %v400, %v393
    %v408 = vpack.c.b16 %v401, %v394
    %v640 = vunpack.c.l.b16 %v134
    %v641 = vunpack.c.h.b16 %v134
    %v642 = vunpack.c.l.b16 %v135
    %v643 = vunpack.c.h.b16 %v135
    %v644 = vunpack.c.l.b16 %v136
    %v645 = vunpack.c.h.b16 %v136
    %v646 = vunpack.c.l.b16 %v137
    %v647 = vunpack.c.h.b16 %v137
    %v648 = vunpack.c.l.b16 %v138
    %v649 = vunpack.c.h.b16 %v138
    %v650 = vunpack.c.l.b16 %v139
    %v651 = vunpack.c.h.b16 %v139
    %v652 = vunpack.c.l.b16 %v140
    %v653 = vunpack.c.h.b16 %v140
    %v654 = vunpack.c.l.b16 %v141
    %v655 = vunpack.c.h.b16 %v141
    %v656 = vunpack.c.l.b16 %v142
    %v657 = vunpack.c.h.b16 %v142
    %v658 = vunpack.c.l.b16 %v143
    %v659 = vunpack.c.h.b16 %v143
    %v660 = vunpack.c.l.b16 %v144
    %v661 = vunpack.c.h.b16 %v144
    %v662 = vunpack.c.l.b16 %v145
    %v663 = vunpack.c.h.b16 %v145
    %v664 = vunpack.c.l.b16 %v146
    %v665 = vunpack.c.h.b16 %v146
    %v666 = vunpack.c.l.b16 %v147
    %v667 = vunpack.c.h.b16 %v147
    %v668 = vunpack.c.l.b16 %v148
    %v669 = vunpack.c.h.b16 %v148
    %v670 = vunpack.c.l.b16 %v149
    %v671 = vunpack.c.h.b16 %v149
    %v672 = vunpack.c.l.b16 %v150
    %v673 = vunpack.c.h.b16 %v150
    %v674 = vunpack.c.l.b16 %v151
    %v675 = vunpack.c.h.b16 %v151
    %v676 = vunpack.c.l.b16 %v152
    %v677 = vunpack.c.h.b16 %v152
    %v678 = vunpack.c.l.b16 %v153
    %v679 = vunpack.c.h.b16 %v153
    %v680 = vunpack.c.l.b16 %v154
    %v681 = vunpack.c.h.b16 %v154
    %v682 = vunpack.c.l.b16 %v155
    %v683 = vunpack.c.h.b16 %v155
    %v684 = vunpack.c.l.b16 %v156
    %v685 = vunpack.c.h.b16 %v156
    %v686 = vunpack.c.l.b16 %v157
    %v687 = vunpack.c.h.b16 %v157
    %v688 = vunpack.c.l.b16 %v158
    %v689 = vunpack.c.h.b16 %v158
    %v690 = vunpack.c.l.b16 %v159
    %v691 = vunpack.c.h.b16 %v159
    %v692 = vunpack.c.l.b16 %v160
    %v693 = vunpack.c.h.b16 %v160
    %v694 = vunpack.c.l.b16 %v161
    %v695 = vunpack.c.h.b16 %v161
    %v696 = vunpack.c.l.b16 %v162
    %v697 = vunpack.c.h.b16 %v162
    %v698 = vunpack.c.l.b16 %v163
    %v699 = vunpack.c.h.b16 %v163
    %v700 = vunpack.c.l.b16 %v164
    %v701 = vunpack.c.h.b16 %v164
    %v702 = vunpack.c.l.b16 %v165
    %v703 = vunpack.c.h.b16 %v165
    %v704 = vunpack.c.l.b16 %v166
    %v705 = vunpack.c.h.b16 %v166
    %v706 = vunpack.c.l.b16 %v167
    %v707 = vunpack.c.h.b16 %v167
    %v708 = vunpack.c.l.b16 %v168
    %v709 = vunpack.c.h.b16 %v168
    %v710 = vunpack.c.l.b16 %v169
    %v711 = vunpack.c.h.b16 %v169
    %v712 = vunpack.c.l.b16 %v170
    %v713 = vunpack.c.h.b16 %v170
    %v714 = vunpack.c.l.b16 %v171
    %v715 = vunpack.c.h.b16 %v171
    %v716 = vunpack.c.l.b16 %v172
    %v717 = vunpack.c.h.b16 %v172
    %v718 = vunpack.c.l.b16 %v173
    %v719 = vunpack.c.h.b16 %v173
    %v720 = vunpack.c.l.b16 %v174
    %v721 = vunpack.c.h.b16 %v174
    %v722 = vunpack.c.l.b16 %v175
    %v723 = vunpack.c.h.b16 %v175
    %v724 = vunpack.c.l.b16 %v176
    %v725 = vunpack.c.h.b16 %v176
    %v726 = vunpack.c.l.b16 %v177
    %v727 = vunpack.c.h.b16 %v177
    %v728 = vunpack.c.l.b16 %v178
    %v729 = vunpack.c.h.b16 %v178
    %v730 = vunpack.c.l.b16 %v179
    %v731 = vunpack.c.h.b16 %v179
    %v732 = vunpack.c.l.b16 %v180
    %v733 = vunpack.c.h.b16 %v180
    %v734 = vunpack.c.l.b16 %v181
    %v735 = vunpack.c.h.b16 %v181
    %v736 = vunpack.c.l.b16 %v182
    %v737 = vunpack.c.h.b16 %v182
    %v738 = vunpack.c.l.b16 %v183
    %v739 = vunpack.c.h.b16 %v183
    %v740 = vunpack.c.l.b16 %v184
    %v741 = vunpack.c.h.b16 %v184
    %v742 = vunpack.c.l.b16 %v185
    %v743 = vunpack.c.h.b16 %v185
    %v744 = vunpack.c.l.b16 %v186
    %v745 = vunpack.c.h.b16 %v186
    %v746 = vunpack.c.l.b16 %v187
    %v747 = vunpack.c.h.b16 %v187
    %v748 = vunpack.c.l.b16 %v188
    %v749 = vunpack.c.h.b16 %v188
    %v750 = vunpack.c.l.b16 %v189
    %v751 = vunpack.c.h.b16 %v189
    %v752 = vunpack.c.l.b16 %v190
    %v753 = vunpack.c.h.b16 %v190
    %v754 = vunpack.c.l.b16 %v191
    %v755 = vunpack.c.h.b16 %v191
    %v756 = vunpack.c.l.b16 %v192
    %v757 = vunpack.c.h.b16 %v192
    %v758 = vunpack.c.l.b16 %v193
    %v759 = vunpack.c.h.b16 %v193
    %v760 = vunpack.c.l.b16 %v194
    %v761 = vunpack.c.h.b16 %v194
    %v762 = vunpack.c.l.b16 %v195
    %v763 = vunpack.c.h.b16 %v195
    %v764 = vunpack.c.l.b16 %v196
    %v765 = vunpack.c.h.b16 %v196
    %v766 = vunpack.c.l.b16 %v197
    %v767 = vunpack.c.h.b16 %v197
    %v768 = vunpack.c.l.b16 %v198
    %v769 = vunpack.c.h.b16 %v198
    %v770 = vunpack.c.l.b16 %v199
    %v771 = vunpack.c.h.b16 %v199
    %v772 = vunpack.c.l.b16 %v200
    %v773 = vunpack.c.h.b16 %v200
    %v774 = vunpack.c.l.b16 %v201
    %v775 = vunpack.c.h.b16 %v201
    %v776 = vunpack.c.l.b16 %v202
    %v777 = vunpack.c.h.b16 %v202
    %v778 = vunpack.c.l.b16 %v203
    %v779 = vunpack.c.h.b16 %v203
    %v780 = vunpack.c.l.b16 %v204
    %v781 = vunpack.c.h.b16 %v204
    %v782 = vunpack.c.l.b16 %v205
    %v783 = vunpack.c.h.b16 %v205
    %v784 = vunpack.c.l.b16 %v206
    %v785 = vunpack.c.h.b16 %v206
    %v786 = vunpack.c.l.b16 %v207
    %v787 = vunpack.c.h.b16 %v207
    %v788 = vunpack.c.l.b16 %v208
    %v789 = vunpack.c.h.b16 %v208
    %v790 = vunpack.c.l.b16 %v209
    %v791 = vunpack.c.h.b16 %v209
    %v792 = vunpack.c.l.b16 %v210
    %v793 = vunpack.c.h.b16 %v210
    %v794 = vunpack.c.l.b16 %v211
    %v795 = vunpack.c.h.b16 %v211
    %v796 = vunpack.c.l.b16 %v212
    %v797 = vunpack.c.h.b16 %v212
    %v798 = vunpack.c.l.b16 %v213
    %v799 = vunpack.c.h.b16 %v213
    %v800 = vunpack.c.l.b16 %v214
    %v801 = vunpack.c.h.b16 %v214
    %v802 = vunpack.c.l.b16 %v215
    %v803 = vunpack.c.h.b16 %v215
    %v804 = vunpack.c.l.b16 %v216
    %v805 = vunpack.c.h.b16 %v216
    %v806 = vunpack.c.l.b16 %v217
    %v807 = vunpack.c.h.b16 %v217
    %v808 = vunpack.c.l.b16 %v218
    %v809 = vunpack.c.h.b16 %v218
    %v810 = vunpack.c.l.b16 %v219
    %v811 = vunpack.c.h.b16 %v219
    %v812 = vunpack.c.l.b16 %v220
    %v813 = vunpack.c.h.b16 %v220
    %v814 = vunpack.c.l.b16 %v221
    %v815 = vunpack.c.h.b16 %v221
    %v816 = vunpack.c.l.b16 %v222
    %v817 = vunpack.c.h.b16 %v222
    %v818 = vunpack.c.l.b16 %v223
    %v819 = vunpack.c.h.b16 %v223
    %v820 = vunpack.c.l.b16 %v224
    %v821 = vunpack.c.h.b16 %v224
    %v822 = vunpack.c.l.b16 %v225
    %v823 = vunpack.c.h.b16 %v225
    %v824 = vunpack.c.l.b16 %v226
    %v825 = vunpack.c.h.b16 %v226
    %v826 = vunpack.c.l.b16 %v227
    %v827 = vunpack.c.h.b16 %v227
    %v828 = vunpack.c.l.b16 %v228
    %v829 = vunpack.c.h.b16 %v228
    %v830 = vunpack.c.l.b16 %v229
    %v831 = vunpack.c.h.b16 %v229
    %v832 = vunpack.c.l.b16 %v230
    %v833 = vunpack.c.h.b16 %v230
    %v834 = vunpack.c.l.b16 %v231
    %v835 = vunpack.c.h.b16 %v231
    %v836 = vunpack.c.l.b16 %v232
    %v837 = vunpack.c.h.b16 %v232
    %v838 = vunpack.c.l.b16 %v233
    %v839 = vunpack.c.h.b16 %v233
    %v840 = vunpack.c.l.b16 %v234
    %v841 = vunpack.c.h.b16 %v234
    %v842 = vunpack.c.l.b16 %v235
    %v843 = vunpack.c.h.b16 %v235
    %v844 = vunpack.c.l.b16 %v236
    %v845 = vunpack.c.h.b16 %v236
    %v846 = vunpack.c.l.b16 %v237
    %v847 = vunpack.c.h.b16 %v237
    %v848 = vunpack.c.l.b16 %v238
    %v849 = vunpack.c.h.b16 %v238
    %v850 = vunpack.c.l.b16 %v239
    %v851 = vunpack.c.h.b16 %v239
    %v852 = vunpack.c.l.b16 %v240
    %v853 = vunpack.c.h.b16 %v240
    %v854 = vunpack.c.l.b16 %v241
    %v855 = vunpack.c.h.b16 %v241
    %v856 = vunpack.c.l.b16 %v242
    %v857 = vunpack.c.h.b16 %v242
    %v858 = vunpack.c.l.b16 %v243
    %v859 = vunpack.c.h.b16 %v243
    %v860 = vunpack.c.l.b16 %v244
    %v861 = vunpack.c.h.b16 %v244
    %v862 = vunpack.c.l.b16 %v245
    %v863 = vunpack.c.h.b16 %v245
    %v864 = vunpack.c.l.b16 %v246
    %v865 = vunpack.c.h.b16 %v246
    %v866 = vunpack.c.l.b16 %v247
    %v867 = vunpack.c.h.b16 %v247
    %v868 = vunpack.c.l.b16 %v248
    %v869 = vunpack.c.h.b16 %v248
    %v870 = vunpack.c.l.b16 %v249
    %v871 = vunpack.c.h.b16 %v249
    %v872 = vunpack.c.l.b16 %v250
    %v873 = vunpack.c.h.b16 %v250
    %v874 = vunpack.c.l.b16 %v251
    %v875 = vunpack.c.h.b16 %v251
    %v876 = vunpack.c.l.b16 %v252
    %v877 = vunpack.c.h.b16 %v252
    %v878 = vunpack.c.l.b16 %v253
    %v879 = vunpack.c.h.b16 %v253
    %v880 = vunpack.c.l.b16 %v254
    %v881 = vunpack.c.h.b16 %v254
    %v882 = vunpack.c.l.b16 %v255
    %v883 = vunpack.c.h.b16 %v255
    %v884 = vunpack.c.l.b16 %v256
    %v885 = vunpack.c.h.b16 %v256
    %v886 = vunpack.c.l.b16 %v257
    %v887 = vunpack.c.h.b16 %v257
    %v888 = vunpack.c.l.b16 %v258
    %v889 = vunpack.c.h.b16 %v258
    %v890 = vunpack.c.l.b16 %v259
    %v891 = vunpack.c.h.b16 %v259
    %v892 = vunpack.c.l.b16 %v260
    %v893 = vunpack.c.h.b16 %v260
    %v894 = vunpack.c.l.b16 %v261
    %v895 = vunpack.c.h.b16 %v261
    %v896 = vunpack.c.l.b16 %v262
    %v897 = vunpack.c.h.b16 %v262
    %v898 = vunpack.c.l.b16 %v263
    %v899 = vunpack.c.h.b16 %v263
    %v900 = vunpack.c.l.b16 %v264
    %v901 = vunpack.c.h.b16 %v264
    %v902 = vunpack.c.l.b16 %v265
    %v903 = vunpack.c.h.b16 %v265
    %v904 = vunpack.c.l.b16 %v266
    %v905 = vunpack.c.h.b16 %v266
    %v906 = vunpack.c.l.b16 %v267
    %v907 = vunpack.c.h.b16 %v267
    %v908 = vunpack.c.l.b16 %v268
    %v909 = vunpack.c.h.b16 %v268
    %v910 = vunpack.c.l.b16 %v269
    %v911 = vunpack.c.h.b16 %v269
    %v912 = vunpack.c.l.b16 %v270
    %v913 = vunpack.c.h.b16 %v270
    %v914 = vunpack.c.l.b16 %v271
    %v915 = vunpack.c.h.b16 %v271
    %v916 = vunpack.c.l.b16 %v272
    %v917 = vunpack.c.h.b16 %v272
    %v918 = vunpack.c.l.b16 %v273
    %v919 = vunpack.c.h.b16 %v273
    %v920 = vunpack.c.l.b16 %v274
    %v921 = vunpack.c.h.b16 %v274
    %v922 = vunpack.c.l.b16 %v275
    %v923 = vunpack.c.h.b16 %v275
    %v924 = vunpack.c.l.b16 %v276
    %v925 = vunpack.c.h.b16 %v276
    %v926 = vunpack.c.l.b16 %v277
    %v927 = vunpack.c.h.b16 %v277
    %v928 = vunpack.c.l.b16 %v278
    %v929 = vunpack.c.h.b16 %v278
    %v930 = vunpack.c.l.b16 %v279
    %v931 = vunpack.c.h.b16 %v279
    %v932 = vunpack.c.l.b16 %v280
    %v933 = vunpack.c.h.b16 %v280
    %v934 = vunpack.c.l.b16 %v281
    %v935 = vunpack.c.h.b16 %v281
    %v936 = vunpack.c.l.b16 %v282
    %v937 = vunpack.c.h.b16 %v282
    %v938 = vunpack.c.l.b16 %v283
    %v939 = vunpack.c.h.b16 %v283
    %v940 = vunpack.c.l.b16 %v284
    %v941 = vunpack.c.h.b16 %v284
    %v942 = vunpack.c.l.b16 %v285
    %v943 = vunpack.c.h.b16 %v285
    %v944 = vunpack.c.l.b16 %v286
    %v945 = vunpack.c.h.b16 %v286
    %v946 = vunpack.c.l.b16 %v287
    %v947 = vunpack.c.h.b16 %v287
    %v948 = vunpack.c.l.b16 %v288
    %v949 = vunpack.c.h.b16 %v288
    %v950 = vunpack.c.l.b16 %v289
    %v951 = vunpack.c.h.b16 %v289
    %v952 = vunpack.c.l.b16 %v290
    %v953 = vunpack.c.h.b16 %v290
    %v954 = vunpack.c.l.b16 %v291
    %v955 = vunpack.c.h.b16 %v291
    %v956 = vunpack.c.l.b16 %v292
    %v957 = vunpack.c.h.b16 %v292
    %v958 = vunpack.c.l.b16 %v293
    %v959 = vunpack.c.h.b16 %v293
    %v960 = vunpack.c.l.b16 %v294
    %v961 = vunpack.c.h.b16 %v294
    %v962 = vunpack.c.l.b16 %v295
    %v963 = vunpack.c.h.b16 %v295
    %v964 = vunpack.c.l.b16 %v296
    %v965 = vunpack.c.h.b16 %v296
    %v966 = vunpack.c.l.b16 %v297
    %v967 = vunpack.c.h.b16 %v297
    %v968 = vunpack.c.l.b16 %v298
    %v969 = vunpack.c.h.b16 %v298
    %v970 = vunpack.c.l.b16 %v299
    %v971 = vunpack.c.h.b16 %v299
    %v972 = vunpack.c.l.b16 %v300
    %v973 = vunpack.c.h.b16 %v300
    %v974 = vunpack.c.l.b16 %v301
    %v975 = vunpack.c.h.b16 %v301
    %v976 = vunpack.c.l.b16 %v302
    %v977 = vunpack.c.h.b16 %v302
    %v978 = vunpack.c.l.b16 %v303
    %v979 = vunpack.c.h.b16 %v303
    %v980 = vunpack.c.l.b16 %v304
    %v981 = vunpack.c.h.b16 %v304
    %v982 = vunpack.c.l.b16 %v305
    %v983 = vunpack.c.h.b16 %v305
    %v984 = vunpack.c.l.b16 %v306
    %v985 = vunpack.c.h.b16 %v306
    %v986 = vunpack.c.l.b16 %v307
    %v987 = vunpack.c.h.b16 %v307
    %v988 = vunpack.c.l.b16 %v308
    %v989 = vunpack.c.h.b16 %v308
    %v990 = vunpack.c.l.b16 %v309
    %v991 = vunpack.c.h.b16 %v309
    %v992 = vunpack.c.l.b16 %v310
    %v993 = vunpack.c.h.b16 %v310
    %v994 = vunpack.c.l.b16 %v311
    %v995 = vunpack.c.h.b16 %v311
    %v996 = vunpack.c.l.b16 %v312
    %v997 = vunpack.c.h.b16 %v312
    %v998 = vunpack.c.l.b16 %v313
    %v999 = vunpack.c.h.b16 %v313
    %v1000 = vunpack.c.l.b16 %v314
    %v1001 = vunpack.c.h.b16 %v314
    %v1002 = vunpack.c.l.b16 %v315
    %v1003 = vunpack.c.h.b16 %v315
    %v1004 = vunpack.c.l.b16 %v316
    %v1005 = vunpack.c.h.b16 %v316
    %v1006 = vunpack.c.l.b16 %v317
    %v1007 = vunpack.c.h.b16 %v317
    %v1008 = vunpack.c.l.b16 %v318
    %v1009 = vunpack.c.h.b16 %v318
    %v1010 = vunpack.c.l.b16 %v319
    %v1011 = vunpack.c.h.b16 %v319
    %v1012 = vunpack.c.l.b16 %v320
    %v1013 = vunpack.c.h.b16 %v320
    %v1014 = vunpack.c.l.b16 %v321
    %v1015 = vunpack.c.h.b16 %v321
    %v1016 = vunpack.c.l.b16 %v322
    %v1017 = vunpack.c.h.b16 %v322
    %v1018 = vunpack.c.l.b16 %v323
    %v1019 = vunpack.c.h.b16 %v323
    %v1020 = vunpack.c.l.b16 %v324
    %v1021 = vunpack.c.h.b16 %v324
    %v1022 = vunpack.c.l.b16 %v325
    %v1023 = vunpack.c.h.b16 %v325
    %v1024 = vunpack.c.l.b16 %v326
    %v1025 = vunpack.c.h.b16 %v326
    %v1026 = vunpack.c.l.b16 %v327
    %v1027 = vunpack.c.h.b16 %v327
    %v1028 = vunpack.c.l.b16 %v328
    %v1029 = vunpack.c.h.b16 %v328
    %v1030 = vunpack.c.l.b16 %v329
    %v1031 = vunpack.c.h.b16 %v329
    %v1032 = vunpack.c.l.b16 %v330
    %v1033 = vunpack.c.h.b16 %v330
    %v1034 = vunpack.c.l.b16 %v331
    %v1035 = vunpack.c.h.b16 %v331
    %v1036 = vunpack.c.l.b16 %v332
    %v1037 = vunpack.c.h.b16 %v332
    %v1038 = vunpack.c.l.b16 %v333
    %v1039 = vunpack.c.h.b16 %v333
    %v1040 = vunpack.c.l.b16 %v334
    %v1041 = vunpack.c.h.b16 %v334
    %v1042 = vunpack.c.l.b16 %v335
    %v1043 = vunpack.c.h.b16 %v335
    %v1044 = vunpack.c.l.b16 %v336
    %v1045 = vunpack.c.h.b16 %v336
    %v1046 = vunpack.c.l.b16 %v337
    %v1047 = vunpack.c.h.b16 %v337
    %v1048 = vunpack.c.l.b16 %v338
    %v1049 = vunpack.c.h.b16 %v338
    %v1050 = vunpack.c.l.b16 %v339
    %v1051 = vunpack.c.h.b16 %v339
    %v1052 = vunpack.c.l.b16 %v340
    %v1053 = vunpack.c.h.b16 %v340
    %v1054 = vunpack.c.l.b16 %v341
    %v1055 = vunpack.c.h.b16 %v341
    %v1056 = vunpack.c.l.b16 %v342
    %v1057 = vunpack.c.h.b16 %v342
    %v1058 = vunpack.c.l.b16 %v343
    %v1059 = vunpack.c.h.b16 %v343
    %v1060 = vunpack.c.l.b16 %v344
    %v1061 = vunpack.c.h.b16 %v344
    %v1062 = vunpack.c.l.b16 %v345
    %v1063 = vunpack.c.h.b16 %v345
    %v1064 = vunpack.c.l.b16 %v346
    %v1065 = vunpack.c.h.b16 %v346
    %v1066 = vunpack.c.l.b16 %v347
    %v1067 = vunpack.c.h.b16 %v347
    %v1068 = vunpack.c.l.b16 %v348
    %v1069 = vunpack.c.h.b16 %v348
    %v1070 = vunpack.c.l.b16 %v349
    %v1071 = vunpack.c.h.b16 %v349
    %v1072 = vunpack.c.l.b16 %v350
    %v1073 = vunpack.c.h.b16 %v350
    %v1074 = vunpack.c.l.b16 %v351
    %v1075 = vunpack.c.h.b16 %v351
    %v1076 = vunpack.c.l.b16 %v352
    %v1077 = vunpack.c.h.b16 %v352
    %v1078 = vunpack.c.l.b16 %v353
    %v1079 = vunpack.c.h.b16 %v353
    %v1080 = vunpack.c.l.b16 %v354
    %v1081 = vunpack.c.h.b16 %v354
    %v1082 = vunpack.c.l.b16 %v355
    %v1083 = vunpack.c.h.b16 %v355
    %v1084 = vunpack.c.l.b16 %v356
    %v1085 = vunpack.c.h.b16 %v356
    %v1086 = vunpack.c.l.b16 %v357
    %v1087 = vunpack.c.h.b16 %v357
    %v1088 = vpack.c.b16 %v644, %v640
    %v1089 = vpack.c.b16 %v645, %v641
    %v1090 = vpack.c.b16 %v646, %v642
    %v1091 = vpack.c.b16 %v647, %v643
    %v1092 = vpack.c.b16 %v652, %v648
    %v1093 = vpack.c.b16 %v653, %v649
    %v1094 = vpack.c.b16 %v654, %v650
    %v1095 = vpack.c.b16 %v655, %v651
    %v1096 = vpack.c.b16 %v660, %v656
    %v1097 = vpack.c.b16 %v661, %v657
    %v1098 = vpack.c.b16 %v662, %v658
    %v1099 = vpack.c.b16 %v663, %v659
    %v1100 = vpack.c.b16 %v668, %v664
    %v1101 = vpack.c.b16 %v669, %v665
    %v1102 = vpack.c.b16 %v670, %v666
    %v1103 = vpack.c.b16 %v671, %v667
    %v1104 = vpack.c.b16 %v676, %v672
    %v1105 = vpack.c.b16 %v677, %v673
    %v1106 = vpack.c.b16 %v678, %v674
    %v1107 = vpack.c.b16 %v679, %v675
    %v1108 = vpack.c.b16 %v684, %v680
    %v1109 = vpack.c.b16 %v685, %v681
    %v1110 = vpack.c.b16 %v686, %v682
    %v1111 = vpack.c.b16 %v687, %v683
    %v1112 = vpack.c.b16 %v692, %v688
    %v1113 = vpack.c.b16 %v693, %v689
    %v1114 = vpack.c.b16 %v694, %v690
    %v1115 = vpack.c.b16 %v695, %v691
    %v1116 = vpack.c.b16 %v700, %v696
    %v1117 = vpack.c.b16 %v701, %v697
    %v1118 = vpack.c.b16 %v702, %v698
    %v1119 = vpack.c.b16 %v703, %v699
    %v1120 = vpack.c.b16 %v708, %v704
    %v1121 = vpack.c.b16 %v709, %v705
    %v1122 = vpack.c.b16 %v710, %v706
    %v1123 = vpack.c.b16 %v711, %v707
    %v1124 = vpack.c.b16 %v716, %v712
    %v1125 = vpack.c.b16 %v717, %v713
    %v1126 = vpack.c.b16 %v718, %v714
    %v1127 = vpack.c.b16 %v719, %v715
    %v1128 = vpack.c.b16 %v724, %v720
    %v1129 = vpack.c.b16 %v725, %v721
    %v1130 = vpack.c.b16 %v726, %v722
    %v1131 = vpack.c.b16 %v727, %v723
    %v1132 = vpack.c.b16 %v732, %v728
    %v1133 = vpack.c.b16 %v733, %v729
    %v1134 = vpack.c.b16 %v734, %v730
    %v1135 = vpack.c.b16 %v735, %v731
    %v1136 = vpack.c.b16 %v740, %v736
    %v1137 = vpack.c.b16 %v741, %v737
    %v1138 = vpack.c.b16 %v742, %v738
    %v1139 = vpack.c.b16 %v743, %v739
    %v1140 = vpack.c.b16 %v748, %v744
    %v1141 = vpack.c.b16 %v749, %v745
    %v1142 = vpack.c.b16 %v750, %v746
    %v1143 = vpack.c.b16 %v751, %v747
    %v1144 = vpack.c.b16 %v756, %v752
    %v1145 = vpack.c.b16 %v757, %v753
    %v1146 = vpack.c.b16 %v758, %v754
    %v1147 = vpack.c.b16 %v759, %v755
    %v1148 = vpack.c.b16 %v764, %v760
    %v1149 = vpack.c.b16 %v765, %v761
    %v1150 = vpack.c.b16 %v766, %v762
    %v1151 = vpack.c.b16 %v767, %v763
    %v1152 = vpack.c.b16 %v772, %v768
    %v1153 = vpack.c.b16 %v773, %v769
    %v1154 = vpack.c.b16 %v774, %v770
    %v1155 = vpack.c.b16 %v775, %v771
    %v1156 = vpack.c.b16 %v780, %v776
    %v1157 = vpack.c.b16 %v781, %v777
    %v1158 = vpack.c.b16 %v782, %v778
    %v1159 = vpack.c.b16 %v783, %v779
    %v1160 = vpack.c.b16 %v788, %v784
    %v1161 = vpack.c.b16 %v789, %v785
    %v1162 = vpack.c.b16 %v790, %v786
    %v1163 = vpack.c.b16 %v791, %v787
    %v1164 = vpack.c.b16 %v796, %v792
    %v1165 = vpack.c.b16 %v797, %v793
    %v1166 = vpack.c.b16 %v798, %v794
    %v1167 = vpack.c.b16 %v799, %v795
    %v1168 = vpack.c.b16 %v804, %v800
    %v1169 = vpack.c.b16 %v805, %v801
    %v1170 = vpack.c.b16 %v806, %v802
    %v1171 = vpack.c.b16 %v807, %v803
    %v1172 = vpack.c.b16 %v812, %v808
    %v1173 = vpack.c.b16 %v813, %v809
    %v1174 = vpack.c.b16 %v814, %v810
    %v1175 = vpack.c.b16 %v815, %v811
    %v1176 = vpack.c.b16 %v820, %v816
    %v1177 = vpack.c.b16 %v821, %v817
    %v1178 = vpack.c.b16 %v822, %v818
    %v1179 = vpack.c.b16 %v823, %v819
    %v1180 = vpack.c.b16 %v828, %v824
    %v1181 = vpack.c.b16 %v829, %v825
    %v1182 = vpack.c.b16 %v830, %v826
    %v1183 = vpack.c.b16 %v831, %v827
    %v1184 = vpack.c.b16 %v836, %v832
    %v1185 = vpack.c.b16 %v837, %v833
    %v1186 = vpack.c.b16 %v838, %v834
    %v1187 = vpack.c.b16 %v839, %v835
    %v1188 = vpack.c.b16 %v844, %v840
    %v1189 = vpack.c.b16 %v845, %v841
    %v1190 = vpack.c.b16 %v846, %v842
    %v1191 = vpack.c.b16 %v847, %v843
    %v1192 = vpack.c.b16 %v852, %v848
    %v1193 = vpack.c.b16 %v853, %v849
    %v1194 = vpack.c.b16 %v854, %v850
    %v1195 = vpack.c.b16 %v855, %v851
    %v1196 = vpack.c.b16 %v860, %v856
    %v1197 = vpack.c.b16 %v861, %v857
    %v1198 = vpack.c.b16 %v862, %v858
    %v1199 = vpack.c.b16 %v863, %v859
    %v1200 = vpack.c.b16 %v868, %v864
    %v1201 = vpack.c.b16 %v869, %v865
    %v1202 = vpack.c.b16 %v870, %v866
    %v1203 = vpack.c.b16 %v871, %v867
    %v1204 = vpack.c.b16 %v876, %v872
    %v1205 = vpack.c.b16 %v877, %v873
    %v1206 = vpack.c.b16 %v878, %v874
    %v1207 = vpack.c.b16 %v879, %v875
    %v1208 = vpack.c.b16 %v884, %v880
    %v1209 = vpack.c.b16 %v885, %v881
    %v1210 = vpack.c.b16 %v886, %v882
    %v1211 = vpack.c.b16 %v887, %v883
    %v1212 = vpack.c.b16 %v892, %v888
    %v1213 = vpack.c.b16 %v893, %v889
    %v1214 = vpack.c.b16 %v894, %v890
    %v1215 = vpack.c.b16 %v895, %v891
    %v1216 = vpack.c.b16 %v900, %v896
    %v1217 = vpack.c.b16 %v901, %v897
    %v1218 = vpack.c.b16 %v902, %v898
    %v1219 = vpack.c.b16 %v903, %v899
    %v1220 = vpack.c.b16 %v908, %v904
    %v1221 = vpack.c.b16 %v909, %v905
    %v1222 = vpack.c.b16 %v910, %v906
    %v1223 = vpack.c.b16 %v911, %v907
    %v1224 = vpack.c.b16 %v916, %v912
    %v1225 = vpack.c.b16 %v917, %v913
    %v1226 = vpack.c.b16 %v918, %v914
    %v1227 = vpack.c.b16 %v919, %v915
    %v1228 = vpack.c.b16 %v924, %v920
    %v1229 = vpack.c.b16 %v925, %v921
    %v1230 = vpack.c.b16 %v926, %v922
    %v1231 = vpack.c.b16 %v927, %v923
    %v1232 = vpack.c.b16 %v932, %v928
    %v1233 = vpack.c.b16 %v933, %v929
    %v1234 = vpack.c.b16 %v934, %v930
    %v1235 = vpack.c.b16 %v935, %v931
    %v1236 = vpack.c.b16 %v940, %v936
    %v1237 = vpack.c.b16 %v941, %v937
    %v1238 = vpack.c.b16 %v942, %v938
    %v1239 = vpack.c.b16 %v943, %v939
    %v1240 = vpack.c.b16 %v948, %v944
    %v1241 = vpack.c.b16 %v949, %v945
    %v1242 = vpack.c.b16 %v950, %v946
    %v1243 = vpack.c.b16 %v951, %v947
    %v1244 = vpack.c.b16 %v956, %v952
    %v1245 = vpack.c.b16 %v957, %v953
    %v1246 = vpack.c.b16 %v958, %v954
    %v1247 = vpack.c.b16 %v959, %v955
    %v1248 = vpack.c.b16 %v964, %v960
    %v1249 = vpack.c.b16 %v965, %v961
    %v1250 = vpack.c.b16 %v966, %v962
    %v1251 = vpack.c.b16 %v967, %v963
    %v1252 = vpack.c.b16 %v972, %v968
    %v1253 = vpack.c.b16 %v973, %v969
    %v1254 = vpack.c.b16 %v974, %v970
    %v1255 = vpack.c.b16 %v975, %v971
    %v1256 = vpack.c.b16 %v980, %v976
    %v1257 = vpack.c.b16 %v981, %v977
    %v1258 = vpack.c.b16 %v982, %v978
    %v1259 = vpack.c.b16 %v983, %v979
    %v1260 = vpack.c.b16 %v988, %v984
    %v1261 = vpack.c.b16 %v989, %v985
    %v1262 = vpack.c.b16 %v990, %v986
    %v1263 = vpack.c.b16 %v991, %v987
    %v1264 = vpack.c.b16 %v996, %v992
    %v1265 = vpack.c.b16 %v997, %v993
    %v1266 = vpack.c.b16 %v998, %v994
    %v1267 = vpack.c.b16 %v999, %v995
    %v1268 = vpack.c.b16 %v1004, %v1000
    %v1269 = vpack.c.b16 %v1005, %v1001
    %v1270 = vpack.c.b16 %v1006, %v1002
    %v1271 = vpack.c.b16 %v1007, %v1003
    %v1272 = vpack.c.b16 %v1012, %v1008
    %v1273 = vpack.c.b16 %v1013, %v1009
    %v1274 = vpack.c.b16 %v1014, %v1010
    %v1275 = vpack.c.b16 %v1015, %v1011
    %v1276 = vpack.c.b16 %v1020, %v1016
    %v1277 = vpack.c.b16 %v1021, %v1017
    %v1278 = vpack.c.b16 %v1022, %v1018
    %v1279 = vpack.c.b16 %v1023, %v1019
    %v1280 = vpack.c.b16 %v1028, %v1024
    %v1281 = vpack.c.b16 %v1029, %v1025
    %v1282 = vpack.c.b16 %v1030, %v1026
    %v1283 = vpack.c.b16 %v1031, %v1027
    %v1284 = vpack.c.b16 %v1036, %v1032
    %v1285 = vpack.c.b16 %v1037, %v1033
    %v1286 = vpack.c.b16 %v1038, %v1034
    %v1287 = vpack.c.b16 %v1039, %v1035
    %v1288 = vpack.c.b16 %v1044, %v1040
    %v1289 = vpack.c.b16 %v1045, %v1041
    %v1290 = vpack.c.b16 %v1046, %v1042
    %v1291 = vpack.c.b16 %v1047, %v1043
    %v1292 = vpack.c.b16 %v1052, %v1048
    %v1293 = vpack.c.b16 %v1053, %v1049
    %v1294 = vpack.c.b16 %v1054, %v1050
    %v1295 = vpack.c.b16 %v1055, %v1051
    %v1296 = vpack.c.b16 %v1060, %v1056
    %v1297 = vpack.c.b16 %v1061, %v1057
    %v1298 = vpack.c.b16 %v1062, %v1058
    %v1299 = vpack.c.b16 %v1063, %v1059
    %v1300 = vpack.c.b16 %v1068, %v1064
    %v1301 = vpack.c.b16 %v1069, %v1065
    %v1302 = vpack.c.b16 %v1070, %v1066
    %v1303 = vpack.c.b16 %v1071, %v1067
    %v1304 = vpack.c.b16 %v1076, %v1072
    %v1305 = vpack.c.b16 %v1077, %v1073
    %v1306 = vpack.c.b16 %v1078, %v1074
    %v1307 = vpack.c.b16 %v1079, %v1075
    %v1308 = vpack.c.b16 %v1084, %v1080
    %v1309 = vpack.c.b16 %v1085, %v1081
    %v1310 = vpack.c.b16 %v1086, %v1082
    %v1311 = vpack.c.b16 %v1087, %v1083
    %1536 = vmatprep.subr.bf16.mxu0 %v1089
    %1537 = vmatpush1.bf16.msra.mxu0 %v1088
    %1538 = vmatprep.subr.bf16.mxu0 %v1093
    %1539 = vmatpush1.bf16.msra.mxu0 %v1092
    %1540 = vmatprep.subr.bf16.mxu0 %v1097
    %1541 = vmatpush1.bf16.msra.mxu0 %v1096
    %1542 = vmatprep.subr.bf16.mxu0 %v1101
    %1543 = vmatpush1.bf16.msra.mxu0 %v1100
    %1544 = vmatprep.subr.bf16.mxu0 %v1105
    %1545 = vmatpush1.bf16.msra.mxu0 %v1104
    %1546 = vmatprep.subr.bf16.mxu0 %v1109
    %1547 = vmatpush1.bf16.msra.mxu0 %v1108
    %1548 = vmatprep.subr.bf16.mxu0 %v1113
    %1549 = vmatpush1.bf16.msra.mxu0 %v1112
    %1550 = vmatprep.subr.bf16.mxu0 %v1117
    %1551 = vmatpush1.bf16.msra.mxu0 %v1116
    %1552 = vmatprep.subr.bf16.mxu0 %v1121
    %1553 = vmatpush1.bf16.msra.mxu0 %v1120
    %1554 = vmatprep.subr.bf16.mxu0 %v1125
    %1555 = vmatpush1.bf16.msra.mxu0 %v1124
    %1556 = vmatprep.subr.bf16.mxu0 %v1129
    %1557 = vmatpush1.bf16.msra.mxu0 %v1128
    %1558 = vmatprep.subr.bf16.mxu0 %v1133
    %1559 = vmatpush1.bf16.msra.mxu0 %v1132
    %1560 = vmatprep.subr.bf16.mxu0 %v1137
    %1561 = vmatpush1.bf16.msra.mxu0 %v1136
    %1562 = vmatprep.subr.bf16.mxu0 %v1141
    %1563 = vmatpush1.bf16.msra.mxu0 %v1140
    %1564 = vmatprep.subr.bf16.mxu0 %v1145
    %1565 = vmatpush1.bf16.msra.mxu0 %v1144
    %1566 = vmatprep.subr.bf16.mxu0 %v1149
    %1567 = vmatpush1.bf16.msra.mxu0 %v1148
    %1568 = vmatprep.mubr.bf16.mxu0 %v403
    %1569 = vmatmul.mubr.bf16.gmra.mrb[0].mxu0 %v402
    %v1570 = vpop.f32.mrb[0].mxu0
    %v1571 = vadd.f32 %v363, %v1570
    %v1572 = vpop.f32.mrb[0].mxu0
    %v1573 = vadd.f32 %v367, %v1572
    %v1574 = vpop.f32.mrb[0].mxu0
    %v1575 = vadd.f32 %v363, %v1574
    %v1576 = vpop.f32.mrb[0].mxu0
    %v1577 = vadd.f32 %v367, %v1576
    %1578 = vdwg.mxu0
    %1579 = vmatprep.subr.bf16.mxu0 %v1153
    %1580 = vmatpush1.bf16.msra.mxu0 %v1152
    %1581 = vmatprep.subr.bf16.mxu0 %v1157
    %1582 = vmatpush1.bf16.msra.mxu0 %v1156
    %1583 = vmatprep.subr.bf16.mxu0 %v1161
    %1584 = vmatpush1.bf16.msra.mxu0 %v1160
    %1585 = vmatprep.subr.bf16.mxu0 %v1165
    %1586 = vmatpush1.bf16.msra.mxu0 %v1164
    %1587 = vmatprep.subr.bf16.mxu0 %v1169
    %1588 = vmatpush1.bf16.msra.mxu0 %v1168
    %1589 = vmatprep.subr.bf16.mxu0 %v1173
    %1590 = vmatpush1.bf16.msra.mxu0 %v1172
    %1591 = vmatprep.subr.bf16.mxu0 %v1177
    %1592 = vmatpush1.bf16.msra.mxu0 %v1176
    %1593 = vmatprep.subr.bf16.mxu0 %v1181
    %1594 = vmatpush1.bf16.msra.mxu0 %v1180
    %1595 = vmatprep.subr.bf16.mxu0 %v1185
    %1596 = vmatpush1.bf16.msra.mxu0 %v1184
    %1597 = vmatprep.subr.bf16.mxu0 %v1189
    %1598 = vmatpush1.bf16.msra.mxu0 %v1188
    %1599 = vmatprep.subr.bf16.mxu0 %v1193
    %1600 = vmatpush1.bf16.msra.mxu0 %v1192
    %1601 = vmatprep.subr.bf16.mxu0 %v1197
    %1602 = vmatpush1.bf16.msra.mxu0 %v1196
    %1603 = vmatprep.subr.bf16.mxu0 %v1201
    %1604 = vmatpush1.bf16.msra.mxu0 %v1200
    %1605 = vmatprep.subr.bf16.mxu0 %v1205
    %1606 = vmatpush1.bf16.msra.mxu0 %v1204
    %1607 = vmatprep.subr.bf16.mxu0 %v1209
    %1608 = vmatpush1.bf16.msra.mxu0 %v1208
    %1609 = vmatprep.subr.bf16.mxu0 %v1213
    %1610 = vmatpush1.bf16.msra.mxu0 %v1212
    %1611 = vmatprep.mubr.bf16.mxu0 %v405
    %1612 = vmatmul.mubr.bf16.gmra.mrb[0].mxu0 %v404
    %v1613 = vpop.f32.mrb[0].mxu0
    %v1614 = vadd.f32 %v1571, %v1613
    %v1615 = vpop.f32.mrb[0].mxu0
    %v1616 = vadd.f32 %v1573, %v1615
    %v1617 = vpop.f32.mrb[0].mxu0
    %v1618 = vadd.f32 %v1575, %v1617
    %v1619 = vpop.f32.mrb[0].mxu0
    %v1620 = vadd.f32 %v1577, %v1619
    %1621 = vdwg.mxu0
    %1622 = vmatprep.subr.bf16.mxu0 %v1217
    %1623 = vmatpush1.bf16.msra.mxu0 %v1216
    %1624 = vmatprep.subr.bf16.mxu0 %v1221
    %1625 = vmatpush1.bf16.msra.mxu0 %v1220
    %1626 = vmatprep.subr.bf16.mxu0 %v1225
    %1627 = vmatpush1.bf16.msra.mxu0 %v1224
    %1628 = vmatprep.subr.bf16.mxu0 %v1229
    %1629 = vmatpush1.bf16.msra.mxu0 %v1228
    %1630 = vmatprep.subr.bf16.mxu0 %v1233
    %1631 = vmatpush1.bf16.msra.mxu0 %v1232
    %1632 = vmatprep.subr.bf16.mxu0 %v1237
    %1633 = vmatpush1.bf16.msra.mxu0 %v1236
    %1634 = vmatprep.subr.bf16.mxu0 %v1241
    %1635 = vmatpush1.bf16.msra.mxu0 %v1240
    %1636 = vmatprep.subr.bf16.mxu0 %v1245
    %1637 = vmatpush1.bf16.msra.mxu0 %v1244
    %1638 = vmatprep.subr.bf16.mxu0 %v1249
    %1639 = vmatpush1.bf16.msra.mxu0 %v1248
    %1640 = vmatprep.subr.bf16.mxu0 %v1253
    %1641 = vmatpush1.bf16.msra.mxu0 %v1252
    %1642 = vmatprep.subr.bf16.mxu0 %v1257
    %1643 = vmatpush1.bf16.msra.mxu0 %v1256
    %1644 = vmatprep.subr.bf16.mxu0 %v1261
    %1645 = vmatpush1.bf16.msra.mxu0 %v1260
    %1646 = vmatprep.subr.bf16.mxu0 %v1265
    %1647 = vmatpush1.bf16.msra.mxu0 %v1264
    %1648 = vmatprep.subr.bf16.mxu0 %v1269
    %1649 = vmatpush1.bf16.msra.mxu0 %v1268
    %1650 = vmatprep.subr.bf16.mxu0 %v1273
    %1651 = vmatpush1.bf16.msra.mxu0 %v1272
    %1652 = vmatprep.subr.bf16.mxu0 %v1277
    %1653 = vmatpush1.bf16.msra.mxu0 %v1276
    %1654 = vmatprep.mubr.bf16.mxu0 %v407
    %1655 = vmatmul.mubr.bf16.gmra.mrb[0].mxu0 %v406
    %v1656 = vpop.f32.mrb[0].mxu0
    %v1657 = vadd.f32 %v1614, %v1656
    %v1658 = vpop.f32.mrb[0].mxu0
    %v1659 = vadd.f32 %v1616, %v1658
    %v1660 = vpop.f32.mrb[0].mxu0
    %v1661 = vadd.f32 %v1618, %v1660
    %v1662 = vpop.f32.mrb[0].mxu0
    %v1663 = vadd.f32 %v1620, %v1662
    %1664 = vdwg.mxu0
    %1665 = vmatprep.subr.bf16.mxu0 %v1281
    %1666 = vmatpush1.bf16.msra.mxu0 %v1280
    %1667 = vmatprep.subr.bf16.mxu0 %v1285
    %1668 = vmatpush1.bf16.msra.mxu0 %v1284
    %1669 = vmatprep.subr.bf16.mxu0 %v1289
    %1670 = vmatpush1.bf16.msra.mxu0 %v1288
    %1671 = vmatprep.subr.bf16.mxu0 %v1293
    %1672 = vmatpush1.bf16.msra.mxu0 %v1292
    %1673 = vmatprep.subr.bf16.mxu0 %v1297
    %1674 = vmatpush1.bf16.msra.mxu0 %v1296
    %1675 = vmatprep.subr.bf16.mxu0 %v1301
    %1676 = vmatpush1.bf16.msra.mxu0 %v1300
    %1677 = vmatprep.subr.bf16.mxu0 %v1305
    %1678 = vmatpush1.bf16.msra.mxu0 %v1304
    %1679 = vmatprep.subr.bf16.mxu0 %v1309
    %1680 = vmatpush1.bf16.msra.mxu0 %v1308
    %1681 = vmatprep.subr.bf16.mxu0 0
    %1682 = vmatpush1.bf16.msra.mxu0 0
    %1683 = vmatprep.subr.bf16.mxu0 0
    %1684 = vmatpush1.bf16.msra.mxu0 0
    %1685 = vmatprep.subr.bf16.mxu0 0
    %1686 = vmatpush1.bf16.msra.mxu0 0
    %1687 = vmatprep.subr.bf16.mxu0 0
    %1688 = vmatpush1.bf16.msra.mxu0 0
    %1689 = vmatprep.subr.bf16.mxu0 0
    %1690 = vmatpush1.bf16.msra.mxu0 0
    %1691 = vmatprep.subr.bf16.mxu0 0
    %1692 = vmatpush1.bf16.msra.mxu0 0
    %1693 = vmatprep.subr.bf16.mxu0 0
    %1694 = vmatpush1.bf16.msra.mxu0 0
    %1695 = vmatprep.subr.bf16.mxu0 0
    %1696 = vmatpush1.bf16.msra.mxu0 0
    %1697 = vmatprep.mubr.bf16.mxu0 0
    %1698 = vmatmul.mubr.bf16.gmra.mrb[0].mxu0 %v408
    %v1699 = vpop.f32.mrb[0].mxu0
    %v1700 = vadd.f32 %v1657, %v1699
    %v1701 = vpop.f32.mrb[0].mxu0
    %v1702 = vadd.f32 %v1659, %v1701
    %v1703 = vpop.f32.mrb[0].mxu0
    %v1704 = vadd.f32 %v1661, %v1703
    %v1705 = vpop.f32.mrb[0].mxu0
    %v1706 = vadd.f32 %v1663, %v1705
    %1707 = vdwg.mxu0
    %1708 = vmatprep.subr.bf16.mxu0 %v1091
    %1709 = vmatpush1.bf16.msra.mxu0 %v1090
    %1710 = vmatprep.subr.bf16.mxu0 %v1095
    %1711 = vmatpush1.bf16.msra.mxu0 %v1094
    %1712 = vmatprep.subr.bf16.mxu0 %v1099
    %1713 = vmatpush1.bf16.msra.mxu0 %v1098
    %1714 = vmatprep.subr.bf16.mxu0 %v1103
    %1715 = vmatpush1.bf16.msra.mxu0 %v1102
    %1716 = vmatprep.subr.bf16.mxu0 %v1107
    %1717 = vmatpush1.bf16.msra.mxu0 %v1106
    %1718 = vmatprep.subr.bf16.mxu0 %v1111
    %1719 = vmatpush1.bf16.msra.mxu0 %v1110
    %1720 = vmatprep.subr.bf16.mxu0 %v1115
    %1721 = vmatpush1.bf16.msra.mxu0 %v1114
    %1722 = vmatprep.subr.bf16.mxu0 %v1119
    %1723 = vmatpush1.bf16.msra.mxu0 %v1118
    %1724 = vmatprep.subr.bf16.mxu0 %v1123
    %1725 = vmatpush1.bf16.msra.mxu0 %v1122
    %1726 = vmatprep.subr.bf16.mxu0 %v1127
    %1727 = vmatpush1.bf16.msra.mxu0 %v1126
    %1728 = vmatprep.subr.bf16.mxu0 %v1131
    %1729 = vmatpush1.bf16.msra.mxu0 %v1130
    %1730 = vmatprep.subr.bf16.mxu0 %v1135
    %1731 = vmatpush1.bf16.msra.mxu0 %v1134
    %1732 = vmatprep.subr.bf16.mxu0 %v1139
    %1733 = vmatpush1.bf16.msra.mxu0 %v1138
    %1734 = vmatprep.subr.bf16.mxu0 %v1143
    %1735 = vmatpush1.bf16.msra.mxu0 %v1142
    %1736 = vmatprep.subr.bf16.mxu0 %v1147
    %1737 = vmatpush1.bf16.msra.mxu0 %v1146
    %1738 = vmatprep.subr.bf16.mxu0 %v1151
    %1739 = vmatpush1.bf16.msra.mxu0 %v1150
    %1740 = vmatprep.mubr.bf16.mxu0 %v403
    %1741 = vmatmul.mubr.bf16.gmra.mrb[0].mxu0 %v402
    %v1742 = vpop.f32.mrb[0].mxu0
    %v1743 = vadd.f32 %v371, %v1742
    %v1744 = vpop.f32.mrb[0].mxu0
    %v1745 = vadd.f32 %v375, %v1744
    %v1746 = vpop.f32.mrb[0].mxu0
    %v1747 = vadd.f32 %v371, %v1746
    %v1748 = vpop.f32.mrb[0].mxu0
    %v1749 = vadd.f32 %v375, %v1748
    %1750 = vdwg.mxu0
    %1751 = vmatprep.subr.bf16.mxu0 %v1155
    %1752 = vmatpush1.bf16.msra.mxu0 %v1154
    %1753 = vmatprep.subr.bf16.mxu0 %v1159
    %1754 = vmatpush1.bf16.msra.mxu0 %v1158
    %1755 = vmatprep.subr.bf16.mxu0 %v1163
    %1756 = vmatpush1.bf16.msra.mxu0 %v1162
    %1757 = vmatprep.subr.bf16.mxu0 %v1167
    %1758 = vmatpush1.bf16.msra.mxu0 %v1166
    %1759 = vmatprep.subr.bf16.mxu0 %v1171
    %1760 = vmatpush1.bf16.msra.mxu0 %v1170
    %1761 = vmatprep.subr.bf16.mxu0 %v1175
    %1762 = vmatpush1.bf16.msra.mxu0 %v1174
    %1763 = vmatprep.subr.bf16.mxu0 %v1179
    %1764 = vmatpush1.bf16.msra.mxu0 %v1178
    %1765 = vmatprep.subr.bf16.mxu0 %v1183
    %1766 = vmatpush1.bf16.msra.mxu0 %v1182
    %1767 = vmatprep.subr.bf16.mxu0 %v1187
    %1768 = vmatpush1.bf16.msra.mxu0 %v1186
    %1769 = vmatprep.subr.bf16.mxu0 %v1191
    %1770 = vmatpush1.bf16.msra.mxu0 %v1190
    %1771 = vmatprep.subr.bf16.mxu0 %v1195
    %1772 = vmatpush1.bf16.msra.mxu0 %v1194
    %1773 = vmatprep.subr.bf16.mxu0 %v1199
    %1774 = vmatpush1.bf16.msra.mxu0 %v1198
    %1775 = vmatprep.subr.bf16.mxu0 %v1203
    %1776 = vmatpush1.bf16.msra.mxu0 %v1202
    %1777 = vmatprep.subr.bf16.mxu0 %v1207
    %1778 = vmatpush1.bf16.msra.mxu0 %v1206
    %1779 = vmatprep.subr.bf16.mxu0 %v1211
    %1780 = vmatpush1.bf16.msra.mxu0 %v1210
    %1781 = vmatprep.subr.bf16.mxu0 %v1215
    %1782 = vmatpush1.bf16.msra.mxu0 %v1214
    %1783 = vmatprep.mubr.bf16.mxu0 %v405
    %1784 = vmatmul.mubr.bf16.gmra.mrb[0].mxu0 %v404
    %v1785 = vpop.f32.mrb[0].mxu0
    %v1786 = vadd.f32 %v1743, %v1785
    %v1787 = vpop.f32.mrb[0].mxu0
    %v1788 = vadd.f32 %v1745, %v1787
    %v1789 = vpop.f32.mrb[0].mxu0
    %v1790 = vadd.f32 %v1747, %v1789
    %v1791 = vpop.f32.mrb[0].mxu0
    %v1792 = vadd.f32 %v1749, %v1791
    %1793 = vdwg.mxu0
    %1794 = vmatprep.subr.bf16.mxu0 %v1219
    %1795 = vmatpush1.bf16.msra.mxu0 %v1218
    %1796 = vmatprep.subr.bf16.mxu0 %v1223
    %1797 = vmatpush1.bf16.msra.mxu0 %v1222
    %1798 = vmatprep.subr.bf16.mxu0 %v1227
    %1799 = vmatpush1.bf16.msra.mxu0 %v1226
    %1800 = vmatprep.subr.bf16.mxu0 %v1231
    %1801 = vmatpush1.bf16.msra.mxu0 %v1230
    %1802 = vmatprep.subr.bf16.mxu0 %v1235
    %1803 = vmatpush1.bf16.msra.mxu0 %v1234
    %1804 = vmatprep.subr.bf16.mxu0 %v1239
    %1805 = vmatpush1.bf16.msra.mxu0 %v1238
    %1806 = vmatprep.subr.bf16.mxu0 %v1243
    %1807 = vmatpush1.bf16.msra.mxu0 %v1242
    %1808 = vmatprep.subr.bf16.mxu0 %v1247
    %1809 = vmatpush1.bf16.msra.mxu0 %v1246
    %1810 = vmatprep.subr.bf16.mxu0 %v1251
    %1811 = vmatpush1.bf16.msra.mxu0 %v1250
    %1812 = vmatprep.subr.bf16.mxu0 %v1255
    %1813 = vmatpush1.bf16.msra.mxu0 %v1254
    %1814 = vmatprep.subr.bf16.mxu0 %v1259
    %1815 = vmatpush1.bf16.msra.mxu0 %v1258
    %1816 = vmatprep.subr.bf16.mxu0 %v1263
    %1817 = vmatpush1.bf16.msra.mxu0 %v1262
    %1818 = vmatprep.subr.bf16.mxu0 %v1267
    %1819 = vmatpush1.bf16.msra.mxu0 %v1266
    %1820 = vmatprep.subr.bf16.mxu0 %v1271
    %1821 = vmatpush1.bf16.msra.mxu0 %v1270
    %1822 = vmatprep.subr.bf16.mxu0 %v1275
    %1823 = vmatpush1.bf16.msra.mxu0 %v1274
    %1824 = vmatprep.subr.bf16.mxu0 %v1279
    %1825 = vmatpush1.bf16.msra.mxu0 %v1278
    %1826 = vmatprep.mubr.bf16.mxu0 %v407
    %1827 = vmatmul.mubr.bf16.gmra.mrb[0].mxu0 %v406
    %v1828 = vpop.f32.mrb[0].mxu0
    %v1829 = vadd.f32 %v1786, %v1828
    %v1830 = vpop.f32.mrb[0].mxu0
    %v1831 = vadd.f32 %v1788, %v1830
    %v1832 = vpop.f32.mrb[0].mxu0
    %v1833 = vadd.f32 %v1790, %v1832
    %v1834 = vpop.f32.mrb[0].mxu0
    %v1835 = vadd.f32 %v1792, %v1834
    %1836 = vdwg.mxu0
    %1837 = vmatprep.subr.bf16.mxu0 %v1283
    %1838 = vmatpush1.bf16.msra.mxu0 %v1282
    %1839 = vmatprep.subr.bf16.mxu0 %v1287
    %1840 = vmatpush1.bf16.msra.mxu0 %v1286
    %1841 = vmatprep.subr.bf16.mxu0 %v1291
    %1842 = vmatpush1.bf16.msra.mxu0 %v1290
    %1843 = vmatprep.subr.bf16.mxu0 %v1295
    %1844 = vmatpush1.bf16.msra.mxu0 %v1294
    %1845 = vmatprep.subr.bf16.mxu0 %v1299
    %1846 = vmatpush1.bf16.msra.mxu0 %v1298
    %1847 = vmatprep.subr.bf16.mxu0 %v1303
    %1848 = vmatpush1.bf16.msra.mxu0 %v1302
    %1849 = vmatprep.subr.bf16.mxu0 %v1307
    %1850 = vmatpush1.bf16.msra.mxu0 %v1306
    %1851 = vmatprep.subr.bf16.mxu0 %v1311
    %1852 = vmatpush1.bf16.msra.mxu0 %v1310
    %1853 = vmatprep.subr.bf16.mxu0 0
    %1854 = vmatpush1.bf16.msra.mxu0 0
    %1855 = vmatprep.subr.bf16.mxu0 0
    %1856 = vmatpush1.bf16.msra.mxu0 0
    %1857 = vmatprep.subr.bf16.mxu0 0
    %1858 = vmatpush1.bf16.msra.mxu0 0
    %1859 = vmatprep.subr.bf16.mxu0 0
    %1860 = vmatpush1.bf16.msra.mxu0 0
    %1861 = vmatprep.subr.bf16.mxu0 0
    %1862 = vmatpush1.bf16.msra.mxu0 0
    %1863 = vmatprep.subr.bf16.mxu0 0
    %1864 = vmatpush1.bf16.msra.mxu0 0
    %1865 = vmatprep.subr.bf16.mxu0 0
    %1866 = vmatpush1.bf16.msra.mxu0 0
    %1867 = vmatprep.subr.bf16.mxu0 0
    %1868 = vmatpush1.bf16.msra.mxu0 0
    %1869 = vmatprep.mubr.bf16.mxu0 0
    %1870 = vmatmul.mubr.bf16.gmra.mrb[0].mxu0 %v408
    %v1871 = vpop.f32.mrb[0].mxu0
    %v1872 = vadd.f32 %v1829, %v1871
    %v1873 = vpop.f32.mrb[0].mxu0
    %v1874 = vadd.f32 %v1831, %v1873
    %v1875 = vpop.f32.mrb[0].mxu0
    %v1876 = vadd.f32 %v1833, %v1875
    %v1877 = vpop.f32.mrb[0].mxu0
    %v1878 = vadd.f32 %v1835, %v1877
    %1879 = vdwg.mxu0
    %v1880 = vmax.f32 %v1700, 0.0
    %v1881 = vmax.f32 %v1702, 0.0
    %v1882 = vmax.f32 %v1872, 0.0
    %v1883 = vmax.f32 %v1874, 0.0
    %v1884 = vmax.f32 %v1704, 0.0
    %v1885 = vmax.f32 %v1706, 0.0
    %v1886 = vmax.f32 %v1876, 0.0
    %v1887 = vmax.f32 %v1878, 0.0
    %v1888 = vpack.c.bf16 %v1884, %v1880
    %v1889 = vpack.c.bf16 %v1885, %v1881
    %v1890 = vpack.c.bf16 %v1886, %v1882
    %v1891 = vpack.c.bf16 %v1887, %v1883
    %v1892 = vld [vmem:[#allocation9] sm:$0xff]
    %v1893 = vld [vmem:[#allocation9 + $0x8] sm:$0xff]
    %v1894 = vld [vmem:[#allocation9 + $0x10] sm:$0xff]
    %v1895 = vld [vmem:[#allocation9 + $0x18] sm:$0xff]
    %v1896 = vld [vmem:[#allocation9 + $0x20] sm:$0xff]
    %v1897 = vld [vmem:[#allocation9 + $0x28] sm:$0xff]
    %v1898 = vld [vmem:[#allocation9 + $0x30] sm:$0xff]
    %v1899 = vld [vmem:[#allocation9 + $0x38] sm:$0xff]
    %v1900 = vld [vmem:[#allocation9 + $0x40] sm:$0xff]
    %v1901 = vld [vmem:[#allocation9 + $0x48] sm:$0xff]
    %v1902 = vld [vmem:[#allocation9 + $0x50] sm:$0xff]
    %v1903 = vld [vmem:[#allocation9 + $0x58] sm:$0xff]
    %v1904 = vld [vmem:[#allocation9 + $0x60] sm:$0xff]
    %v1905 = vld [vmem:[#allocation9 + $0x68] sm:$0xff]
    %v1906 = vld [vmem:[#allocation9 + $0x70] sm:$0xff]
    %v1907 = vld [vmem:[#allocation9 + $0x78] sm:$0xff]
    %v1908 = vld [vmem:[#allocation9 + $0x80] sm:$0xff]
    %v1909 = vld [vmem:[#allocation9 + $0x88] sm:$0xff]
    %v1910 = vld [vmem:[#allocation9 + $0x90] sm:$0xff]
    %v1911 = vld [vmem:[#allocation9 + $0x98] sm:$0xff]
    %v1912 = vld [vmem:[#allocation9 + $0xa0] sm:$0xff]
    %v1913 = vld [vmem:[#allocation9 + $0xa8] sm:$0xff]
    %v1914 = vld [vmem:[#allocation9 + $0xb0] sm:$0xff]
    %v1915 = vld [vmem:[#allocation9 + $0xb8] sm:$0xff]
    %v1916 = vld [vmem:[#allocation9 + $0xc0] sm:$0xff]
    %v1917 = vld [vmem:[#allocation9 + $0xc8] sm:$0xff]
    %v1918 = vld [vmem:[#allocation9 + $0xd0] sm:$0xff]
    %v1919 = vld [vmem:[#allocation9 + $0xd8] sm:$0xff]
    %v1920 = vld [vmem:[#allocation9 + $0xe0] sm:$0xff]
    %v1921 = vld [vmem:[#allocation9 + $0xe8] sm:$0xff]
    %v1922 = vld [vmem:[#allocation9 + $0xf0] sm:$0xff]
    %v1923 = vld [vmem:[#allocation9 + $0xf8] sm:$0xff]
    %v1924 = vld [vmem:[#allocation9 + $0x100] sm:$0xff]
    %v1925 = vld [vmem:[#allocation9 + $0x108] sm:$0xff]
    %v1926 = vld [vmem:[#allocation9 + $0x110] sm:$0xff]
    %v1927 = vld [vmem:[#allocation9 + $0x118] sm:$0xff]
    %v1928 = vld [vmem:[#allocation9 + $0x120] sm:$0xff]
    %v1929 = vld [vmem:[#allocation9 + $0x128] sm:$0xff]
    %v1930 = vld [vmem:[#allocation9 + $0x130] sm:$0xff]
    %v1931 = vld [vmem:[#allocation9 + $0x138] sm:$0xff]
    %v1932 = vld [vmem:[#allocation9 + $0x140] sm:$0xff]
    %v1933 = vld [vmem:[#allocation9 + $0x148] sm:$0xff]
    %v1934 = vld [vmem:[#allocation9 + $0x150] sm:$0xff]
    %v1935 = vld [vmem:[#allocation9 + $0x158] sm:$0xff]
    %v1936 = vld [vmem:[#allocation9 + $0x160] sm:$0xff]
    %v1937 = vld [vmem:[#allocation9 + $0x168] sm:$0xff]
    %v1938 = vld [vmem:[#allocation9 + $0x170] sm:$0xff]
    %v1939 = vld [vmem:[#allocation9 + $0x178] sm:$0xff]
    %v1940 = vld [vmem:[#allocation9 + $0x180] sm:$0xff]
    %v1941 = vld [vmem:[#allocation9 + $0x188] sm:$0xff]
    %v1942 = vld [vmem:[#allocation9 + $0x190] sm:$0xff]
    %v1943 = vld [vmem:[#allocation9 + $0x198] sm:$0xff]
    %v1944 = vld [vmem:[#allocation9 + $0x1a0] sm:$0xff]
    %v1945 = vld [vmem:[#allocation9 + $0x1a8] sm:$0xff]
    %v1946 = vld [vmem:[#allocation9 + $0x1b0] sm:$0xff]
    %v1947 = vld [vmem:[#allocation9 + $0x1b8] sm:$0xff]
    %v1948 = vld [vmem:[#allocation9 + $0x1c0] sm:$0xff]
    %v1949 = vld [vmem:[#allocation9 + $0x1c8] sm:$0xff]
    %v1950 = vld [vmem:[#allocation9 + $0x1d0] sm:$0xff]
    %v1951 = vld [vmem:[#allocation9 + $0x1d8] sm:$0xff]
    %v1952 = vld [vmem:[#allocation9 + $0x1e0] sm:$0xff]
    %v1953 = vld [vmem:[#allocation9 + $0x1e8] sm:$0xff]
    %v1954 = vld [vmem:[#allocation9 + $0x1f0] sm:$0xff]
    %v1955 = vld [vmem:[#allocation9 + $0x1f8] sm:$0xff]
    %v1956 = vld [vmem:[%s6] sm:$0x3]
    %v1958 = vlaneseq
    %v1959 = vshrl.u32 %v1958, 7
    %v1960 = vsub.s32 0, %v1959
    %v1961 = vrot.slane %v1956, %v1960
    %v1962 = vlaneseq
    %v1963 = vshrl.u32 %v1962, 7
    %v1964 = vsub.s32 1, %v1963
    %v1965 = vrot.slane %v1956, %v1964
    %v2032 = vunpack.c.l.b16 %v1892
    %v2033 = vunpack.c.h.b16 %v1892
    %v2034 = vunpack.c.l.b16 %v1893
    %v2035 = vunpack.c.h.b16 %v1893
    %v2036 = vunpack.c.l.b16 %v1894
    %v2037 = vunpack.c.h.b16 %v1894
    %v2038 = vunpack.c.l.b16 %v1895
    %v2039 = vunpack.c.h.b16 %v1895
    %v2040 = vunpack.c.l.b16 %v1896
    %v2041 = vunpack.c.h.b16 %v1896
    %v2042 = vunpack.c.l.b16 %v1897
    %v2043 = vunpack.c.h.b16 %v1897
    %v2044 = vunpack.c.l.b16 %v1898
    %v2045 = vunpack.c.h.b16 %v1898
    %v2046 = vunpack.c.l.b16 %v1899
    %v2047 = vunpack.c.h.b16 %v1899
    %v2048 = vunpack.c.l.b16 %v1900
    %v2049 = vunpack.c.h.b16 %v1900
    %v2050 = vunpack.c.l.b16 %v1901
    %v2051 = vunpack.c.h.b16 %v1901
    %v2052 = vunpack.c.l.b16 %v1902
    %v2053 = vunpack.c.h.b16 %v1902
    %v2054 = vunpack.c.l.b16 %v1903
    %v2055 = vunpack.c.h.b16 %v1903
    %v2056 = vunpack.c.l.b16 %v1904
    %v2057 = vunpack.c.h.b16 %v1904
    %v2058 = vunpack.c.l.b16 %v1905
    %v2059 = vunpack.c.h.b16 %v1905
    %v2060 = vunpack.c.l.b16 %v1906
    %v2061 = vunpack.c.h.b16 %v1906
    %v2062 = vunpack.c.l.b16 %v1907
    %v2063 = vunpack.c.h.b16 %v1907
    %v2064 = vunpack.c.l.b16 %v1908
    %v2065 = vunpack.c.h.b16 %v1908
    %v2066 = vunpack.c.l.b16 %v1909
    %v2067 = vunpack.c.h.b16 %v1909
    %v2068 = vunpack.c.l.b16 %v1910
    %v2069 = vunpack.c.h.b16 %v1910
    %v2070 = vunpack.c.l.b16 %v1911
    %v2071 = vunpack.c.h.b16 %v1911
    %v2072 = vunpack.c.l.b16 %v1912
    %v2073 = vunpack.c.h.b16 %v1912
    %v2074 = vunpack.c.l.b16 %v1913
    %v2075 = vunpack.c.h.b16 %v1913
    %v2076 = vunpack.c.l.b16 %v1914
    %v2077 = vunpack.c.h.b16 %v1914
    %v2078 = vunpack.c.l.b16 %v1915
    %v2079 = vunpack.c.h.b16 %v1915
    %v2080 = vunpack.c.l.b16 %v1916
    %v2081 = vunpack.c.h.b16 %v1916
    %v2082 = vunpack.c.l.b16 %v1917
    %v2083 = vunpack.c.h.b16 %v1917
    %v2084 = vunpack.c.l.b16 %v1918
    %v2085 = vunpack.c.h.b16 %v1918
    %v2086 = vunpack.c.l.b16 %v1919
    %v2087 = vunpack.c.h.b16 %v1919
    %v2088 = vunpack.c.l.b16 %v1920
    %v2089 = vunpack.c.h.b16 %v1920
    %v2090 = vunpack.c.l.b16 %v1921
    %v2091 = vunpack.c.h.b16 %v1921
    %v2092 = vunpack.c.l.b16 %v1922
    %v2093 = vunpack.c.h.b16 %v1922
    %v2094 = vunpack.c.l.b16 %v1923
    %v2095 = vunpack.c.h.b16 %v1923
    %v2096 = vunpack.c.l.b16 %v1924
    %v2097 = vunpack.c.h.b16 %v1924
    %v2098 = vunpack.c.l.b16 %v1925
    %v2099 = vunpack.c.h.b16 %v1925
    %v2100 = vunpack.c.l.b16 %v1926
    %v2101 = vunpack.c.h.b16 %v1926
    %v2102 = vunpack.c.l.b16 %v1927
    %v2103 = vunpack.c.h.b16 %v1927
    %v2104 = vunpack.c.l.b16 %v1928
    %v2105 = vunpack.c.h.b16 %v1928
    %v2106 = vunpack.c.l.b16 %v1929
    %v2107 = vunpack.c.h.b16 %v1929
    %v2108 = vunpack.c.l.b16 %v1930
    %v2109 = vunpack.c.h.b16 %v1930
    %v2110 = vunpack.c.l.b16 %v1931
    %v2111 = vunpack.c.h.b16 %v1931
    %v2112 = vunpack.c.l.b16 %v1932
    %v2113 = vunpack.c.h.b16 %v1932
    %v2114 = vunpack.c.l.b16 %v1933
    %v2115 = vunpack.c.h.b16 %v1933
    %v2116 = vunpack.c.l.b16 %v1934
    %v2117 = vunpack.c.h.b16 %v1934
    %v2118 = vunpack.c.l.b16 %v1935
    %v2119 = vunpack.c.h.b16 %v1935
    %v2120 = vunpack.c.l.b16 %v1936
    %v2121 = vunpack.c.h.b16 %v1936
    %v2122 = vunpack.c.l.b16 %v1937
    %v2123 = vunpack.c.h.b16 %v1937
    %v2124 = vunpack.c.l.b16 %v1938
    %v2125 = vunpack.c.h.b16 %v1938
    %v2126 = vunpack.c.l.b16 %v1939
    %v2127 = vunpack.c.h.b16 %v1939
    %v2128 = vunpack.c.l.b16 %v1940
    %v2129 = vunpack.c.h.b16 %v1940
    %v2130 = vunpack.c.l.b16 %v1941
    %v2131 = vunpack.c.h.b16 %v1941
    %v2132 = vunpack.c.l.b16 %v1942
    %v2133 = vunpack.c.h.b16 %v1942
    %v2134 = vunpack.c.l.b16 %v1943
    %v2135 = vunpack.c.h.b16 %v1943
    %v2136 = vunpack.c.l.b16 %v1944
    %v2137 = vunpack.c.h.b16 %v1944
    %v2138 = vunpack.c.l.b16 %v1945
    %v2139 = vunpack.c.h.b16 %v1945
    %v2140 = vunpack.c.l.b16 %v1946
    %v2141 = vunpack.c.h.b16 %v1946
    %v2142 = vunpack.c.l.b16 %v1947
    %v2143 = vunpack.c.h.b16 %v1947
    %v2144 = vunpack.c.l.b16 %v1948
    %v2145 = vunpack.c.h.b16 %v1948
    %v2146 = vunpack.c.l.b16 %v1949
    %v2147 = vunpack.c.h.b16 %v1949
    %v2148 = vunpack.c.l.b16 %v1950
    %v2149 = vunpack.c.h.b16 %v1950
    %v2150 = vunpack.c.l.b16 %v1951
    %v2151 = vunpack.c.h.b16 %v1951
    %v2152 = vunpack.c.l.b16 %v1952
    %v2153 = vunpack.c.h.b16 %v1952
    %v2154 = vunpack.c.l.b16 %v1953
    %v2155 = vunpack.c.h.b16 %v1953
    %v2156 = vunpack.c.l.b16 %v1954
    %v2157 = vunpack.c.h.b16 %v1954
    %v2158 = vunpack.c.l.b16 %v1955
    %v2159 = vunpack.c.h.b16 %v1955
    %v2160 = vpack.c.b16 %v2034, %v2032
    %v2161 = vpack.c.b16 %v2035, %v2033
    %v2162 = vpack.c.b16 %v2038, %v2036
    %v2163 = vpack.c.b16 %v2039, %v2037
    %v2164 = vpack.c.b16 %v2042, %v2040
    %v2165 = vpack.c.b16 %v2043, %v2041
    %v2166 = vpack.c.b16 %v2046, %v2044
    %v2167 = vpack.c.b16 %v2047, %v2045
    %v2168 = vpack.c.b16 %v2050, %v2048
    %v2169 = vpack.c.b16 %v2051, %v2049
    %v2170 = vpack.c.b16 %v2054, %v2052
    %v2171 = vpack.c.b16 %v2055, %v2053
    %v2172 = vpack.c.b16 %v2058, %v2056
    %v2173 = vpack.c.b16 %v2059, %v2057
    %v2174 = vpack.c.b16 %v2062, %v2060
    %v2175 = vpack.c.b16 %v2063, %v2061
    %v2176 = vpack.c.b16 %v2066, %v2064
    %v2177 = vpack.c.b16 %v2067, %v2065
    %v2178 = vpack.c.b16 %v2070, %v2068
    %v2179 = vpack.c.b16 %v2071, %v2069
    %v2180 = vpack.c.b16 %v2074, %v2072
    %v2181 = vpack.c.b16 %v2075, %v2073
    %v2182 = vpack.c.b16 %v2078, %v2076
    %v2183 = vpack.c.b16 %v2079, %v2077
    %v2184 = vpack.c.b16 %v2082, %v2080
    %v2185 = vpack.c.b16 %v2083, %v2081
    %v2186 = vpack.c.b16 %v2086, %v2084
    %v2187 = vpack.c.b16 %v2087, %v2085
    %v2188 = vpack.c.b16 %v2090, %v2088
    %v2189 = vpack.c.b16 %v2091, %v2089
    %v2190 = vpack.c.b16 %v2094, %v2092
    %v2191 = vpack.c.b16 %v2095, %v2093
    %v2192 = vpack.c.b16 %v2098, %v2096
    %v2193 = vpack.c.b16 %v2099, %v2097
    %v2194 = vpack.c.b16 %v2102, %v2100
    %v2195 = vpack.c.b16 %v2103, %v2101
    %v2196 = vpack.c.b16 %v2106, %v2104
    %v2197 = vpack.c.b16 %v2107, %v2105
    %v2198 = vpack.c.b16 %v2110, %v2108
    %v2199 = vpack.c.b16 %v2111, %v2109
    %v2200 = vpack.c.b16 %v2114, %v2112
    %v2201 = vpack.c.b16 %v2115, %v2113
    %v2202 = vpack.c.b16 %v2118, %v2116
    %v2203 = vpack.c.b16 %v2119, %v2117
    %v2204 = vpack.c.b16 %v2122, %v2120
    %v2205 = vpack.c.b16 %v2123, %v2121
    %v2206 = vpack.c.b16 %v2126, %v2124
    %v2207 = vpack.c.b16 %v2127, %v2125
    %v2208 = vpack.c.b16 %v2130, %v2128
    %v2209 = vpack.c.b16 %v2131, %v2129
    %v2210 = vpack.c.b16 %v2134, %v2132
    %v2211 = vpack.c.b16 %v2135, %v2133
    %v2212 = vpack.c.b16 %v2138, %v2136
    %v2213 = vpack.c.b16 %v2139, %v2137
    %v2214 = vpack.c.b16 %v2142, %v2140
    %v2215 = vpack.c.b16 %v2143, %v2141
    %v2216 = vpack.c.b16 %v2146, %v2144
    %v2217 = vpack.c.b16 %v2147, %v2145
    %v2218 = vpack.c.b16 %v2150, %v2148
    %v2219 = vpack.c.b16 %v2151, %v2149
    %v2220 = vpack.c.b16 %v2154, %v2152
    %v2221 = vpack.c.b16 %v2155, %v2153
    %v2222 = vpack.c.b16 %v2158, %v2156
    %v2223 = vpack.c.b16 %v2159, %v2157
    %2288 = vmatprep.subr.bf16.mxu0 %v2161
    %2289 = vmatpush1.bf16.msra.mxu0 %v2160
    %2290 = vmatprep.subr.bf16.mxu0 %v2163
    %2291 = vmatpush1.bf16.msra.mxu0 %v2162
    %2292 = vmatprep.subr.bf16.mxu0 %v2165
    %2293 = vmatpush1.bf16.msra.mxu0 %v2164
    %2294 = vmatprep.subr.bf16.mxu0 %v2167
    %2295 = vmatpush1.bf16.msra.mxu0 %v2166
    %2296 = vmatprep.subr.bf16.mxu0 %v2169
    %2297 = vmatpush1.bf16.msra.mxu0 %v2168
    %2298 = vmatprep.subr.bf16.mxu0 %v2171
    %2299 = vmatpush1.bf16.msra.mxu0 %v2170
    %2300 = vmatprep.subr.bf16.mxu0 %v2173
    %2301 = vmatpush1.bf16.msra.mxu0 %v2172
    %2302 = vmatprep.subr.bf16.mxu0 %v2175
    %2303 = vmatpush1.bf16.msra.mxu0 %v2174
    %2304 = vmatprep.subr.bf16.mxu0 %v2177
    %2305 = vmatpush1.bf16.msra.mxu0 %v2176
    %2306 = vmatprep.subr.bf16.mxu0 %v2179
    %2307 = vmatpush1.bf16.msra.mxu0 %v2178
    %2308 = vmatprep.subr.bf16.mxu0 %v2181
    %2309 = vmatpush1.bf16.msra.mxu0 %v2180
    %2310 = vmatprep.subr.bf16.mxu0 %v2183
    %2311 = vmatpush1.bf16.msra.mxu0 %v2182
    %2312 = vmatprep.subr.bf16.mxu0 %v2185
    %2313 = vmatpush1.bf16.msra.mxu0 %v2184
    %2314 = vmatprep.subr.bf16.mxu0 %v2187
    %2315 = vmatpush1.bf16.msra.mxu0 %v2186
    %2316 = vmatprep.subr.bf16.mxu0 %v2189
    %2317 = vmatpush1.bf16.msra.mxu0 %v2188
    %2318 = vmatprep.subr.bf16.mxu0 %v2191
    %2319 = vmatpush1.bf16.msra.mxu0 %v2190
    %2320 = vmatprep.mubr.bf16.mxu0 %v1889
    %2321 = vmatmul.mubr.bf16.gmra.mrb[0].mxu0 %v1888
    %v2322 = vpop.f32.mrb[0].mxu0
    %v2323 = vadd.f32 %v1961, %v2322
    %v2324 = vpop.f32.mrb[0].mxu0
    %v2325 = vadd.f32 %v1965, %v2324
    %v2326 = vpop.f32.mrb[0].mxu0
    %v2327 = vadd.f32 %v1961, %v2326
    %v2328 = vpop.f32.mrb[0].mxu0
    %v2329 = vadd.f32 %v1965, %v2328
    %2330 = vdwg.mxu0
    %2331 = vmatprep.subr.bf16.mxu0 %v2193
    %2332 = vmatpush1.bf16.msra.mxu0 %v2192
    %2333 = vmatprep.subr.bf16.mxu0 %v2195
    %2334 = vmatpush1.bf16.msra.mxu0 %v2194
    %2335 = vmatprep.subr.bf16.mxu0 %v2197
    %2336 = vmatpush1.bf16.msra.mxu0 %v2196
    %2337 = vmatprep.subr.bf16.mxu0 %v2199
    %2338 = vmatpush1.bf16.msra.mxu0 %v2198
    %2339 = vmatprep.subr.bf16.mxu0 %v2201
    %2340 = vmatpush1.bf16.msra.mxu0 %v2200
    %2341 = vmatprep.subr.bf16.mxu0 %v2203
    %2342 = vmatpush1.bf16.msra.mxu0 %v2202
    %2343 = vmatprep.subr.bf16.mxu0 %v2205
    %2344 = vmatpush1.bf16.msra.mxu0 %v2204
    %2345 = vmatprep.subr.bf16.mxu0 %v2207
    %2346 = vmatpush1.bf16.msra.mxu0 %v2206
    %2347 = vmatprep.subr.bf16.mxu0 %v2209
    %2348 = vmatpush1.bf16.msra.mxu0 %v2208
    %2349 = vmatprep.subr.bf16.mxu0 %v2211
    %2350 = vmatpush1.bf16.msra.mxu0 %v2210
    %2351 = vmatprep.subr.bf16.mxu0 %v2213
    %2352 = vmatpush1.bf16.msra.mxu0 %v2212
    %2353 = vmatprep.subr.bf16.mxu0 %v2215
    %2354 = vmatpush1.bf16.msra.mxu0 %v2214
    %2355 = vmatprep.subr.bf16.mxu0 %v2217
    %2356 = vmatpush1.bf16.msra.mxu0 %v2216
    %2357 = vmatprep.subr.bf16.mxu0 %v2219
    %2358 = vmatpush1.bf16.msra.mxu0 %v2218
    %2359 = vmatprep.subr.bf16.mxu0 %v2221
    %2360 = vmatpush1.bf16.msra.mxu0 %v2220
    %2361 = vmatprep.subr.bf16.mxu0 %v2223
    %2362 = vmatpush1.bf16.msra.mxu0 %v2222
    %2363 = vmatprep.mubr.bf16.mxu0 %v1891
    %2364 = vmatmul.mubr.bf16.gmra.mrb[0].mxu0 %v1890
    %v2365 = vpop.f32.mrb[0].mxu0
    %v2366 = vadd.f32 %v2323, %v2365
    %v2367 = vpop.f32.mrb[0].mxu0
    %v2368 = vadd.f32 %v2325, %v2367
    %v2369 = vpop.f32.mrb[0].mxu0
    %v2370 = vadd.f32 %v2327, %v2369
    %v2371 = vpop.f32.mrb[0].mxu0
    %v2372 = vadd.f32 %v2329, %v2371
    %2373 = vdwg.mxu0
    %v2374 = vmul.f32 %v2368, 1.442695
    %v2375 = vpow.pop %v2374
    %v2376 = vmul.f32 %v2372, 1.442695
    %v2377 = vpow.pop %v2376
    %v2378 = vld [vmem:[#allocation6] sm:$0xf]
    %v2379 = vld [vmem:[#allocation6 + $0x4] sm:$0xf]
    %v2380 = vunpack.c.l.bf16 %v2378
    %v2381 = vunpack.c.l.bf16 %v2379
    %v2382 = vmul.f32 %v2375, %v2380
    %v2383 = vmul.f32 %v2377, %v2381
    %v2384 = vadd.f32 %v2366, %v2382
    %v2385 = vadd.f32 %v2370, %v2383
    %s2386 = smul.u32 0, 16
    %v2387 = vlaneseq
    %v2388 = vshrl.u32 %v2387, 7
    %v2389 = vadd.s32 %v2388, 8
    %v2390 = vstv %s2386
    %v2391 = vadd.s32 %v2390, %v2388
    %v2392 = vadd.s32 %v2390, %v2389
    %v2393 = vlaneseq
    %v2394 = vand.u32 %v2393, 127
    %s2395 = sld [smem:[#allocation2]]
    %v2396 = vstv %s2395
    %vm2397 = vcmp.lt.s32.totalorder %v2391, %v2396
    %vm2398 = vcmp.lt.s32.totalorder %v2392, %v2396
    %vm2399 = vcmp.lt.s32.totalorder %v2394, 2
    %vm2400 = vmand %vm2397, %vm2399
    %vm2401 = vmand %vm2398, %vm2399
    %v2402 = vmul.f32 %v2375, %v2375
    %v2403 = vmul.f32 %v2377, %v2377
    %v2404 = vmul.f32 %v2366, %v2366
    %v2405 = vmul.f32 %v2370, %v2370
    %v2406 = vadd.f32 %v2402, %v2404
    %v2407 = vadd.f32 %v2403, %v2405
    %v2408 = vsub.f32 %v2406, %v2368
    %v2409 = vsub.f32 %v2407, %v2372
    %v2410 = vsub.f32 %v2408, 0.5
    %v2411 = vsub.f32 %v2409, 0.5
    %v2412 = vsel %vm2400, %v2410, 0.0
    %v2413 = vsel %vm2401, %v2411, 0.0
    %v2414 = vadd.f32 %v2412, %v2413
    %v2415 = vrot.slane %v2414, 4
    %v2416 = vadd.f32 %v2414, %v2415
    %v2417 = vrot.slane %v2416, 2
    %v2418 = vadd.f32 %v2416, %v2417
    %v2419 = vrot.slane %v2418, 1
    %v2420 = vadd.f32 %v2418, %v2419
    %vm2421 = vcmp.eq.s32.totalorder %v2388, 0
    %v2422 = vsel %vm2421, %v2420, 0.0
    %2423 = vst [vmem:[#allocation15] sm:$0xff] %v2422
    %v2424 = vpack.c.bf16 %v2385, %v2384
    %v2425 = vld [vmem:[#allocation11] sm:$0xff]
    %v2426 = vld [vmem:[#allocation11 + $0x8] sm:$0xff]
    %v2427 = vld [vmem:[#allocation11 + $0x10] sm:$0xff]
    %v2428 = vld [vmem:[#allocation11 + $0x18] sm:$0xff]
    %v2429 = vld [vmem:[#allocation11 + $0x20] sm:$0xff]
    %v2430 = vld [vmem:[#allocation11 + $0x28] sm:$0xff]
    %v2431 = vld [vmem:[#allocation11 + $0x30] sm:$0xff]
    %v2432 = vld [vmem:[#allocation11 + $0x38] sm:$0xff]
    %v2433 = vld [vmem:[#allocation11 + $0x40] sm:$0xff]
    %v2434 = vld [vmem:[#allocation11 + $0x48] sm:$0xff]
    %v2435 = vld [vmem:[#allocation11 + $0x50] sm:$0xff]
    %v2436 = vld [vmem:[#allocation11 + $0x58] sm:$0xff]
    %v2437 = vld [vmem:[#allocation11 + $0x60] sm:$0xff]
    %v2438 = vld [vmem:[#allocation11 + $0x68] sm:$0xff]
    %v2439 = vld [vmem:[#allocation11 + $0x70] sm:$0xff]
    %v2440 = vld [vmem:[#allocation11 + $0x78] sm:$0xff]
    %v2441 = vld [vmem:[#allocation11 + $0x80] sm:$0xff]
    %v2442 = vld [vmem:[#allocation11 + $0x88] sm:$0xff]
    %v2443 = vld [vmem:[#allocation11 + $0x90] sm:$0xff]
    %v2444 = vld [vmem:[#allocation11 + $0x98] sm:$0xff]
    %v2445 = vld [vmem:[#allocation11 + $0xa0] sm:$0xff]
    %v2446 = vld [vmem:[#allocation11 + $0xa8] sm:$0xff]
    %v2447 = vld [vmem:[#allocation11 + $0xb0] sm:$0xff]
    %v2448 = vld [vmem:[#allocation11 + $0xb8] sm:$0xff]
    %v2449 = vld [vmem:[#allocation11 + $0xc0] sm:$0xff]
    %v2450 = vld [vmem:[#allocation11 + $0xc8] sm:$0xff]
    %v2451 = vld [vmem:[#allocation11 + $0xd0] sm:$0xff]
    %v2452 = vld [vmem:[#allocation11 + $0xd8] sm:$0xff]
    %v2453 = vld [vmem:[#allocation11 + $0xe0] sm:$0xff]
    %v2454 = vld [vmem:[#allocation11 + $0xe8] sm:$0xff]
    %v2455 = vld [vmem:[#allocation11 + $0xf0] sm:$0xff]
    %v2456 = vld [vmem:[#allocation11 + $0xf8] sm:$0xff]
    %v2457 = vld [vmem:[%s8] sm:$0xf]
    %v2459 = vlaneseq
    %v2460 = vshrl.u32 %v2459, 7
    %v2461 = vsub.s32 0, %v2460
    %v2462 = vrot.slane %v2457, %v2461
    %v2463 = vlaneseq
    %v2464 = vshrl.u32 %v2463, 7
    %v2465 = vsub.s32 1, %v2464
    %v2466 = vrot.slane %v2457, %v2465
    %v2467 = vlaneseq
    %v2468 = vshrl.u32 %v2467, 7
    %v2469 = vsub.s32 2, %v2468
    %v2470 = vrot.slane %v2457, %v2469
    %v2471 = vlaneseq
    %v2472 = vshrl.u32 %v2471, 7
    %v2473 = vsub.s32 3, %v2472
    %v2474 = vrot.slane %v2457, %v2473
    %v2511 = vunpack.c.l.b16 %v2425
    %v2512 = vunpack.c.h.b16 %v2425
    %v2513 = vunpack.c.l.b16 %v2426
    %v2514 = vunpack.c.h.b16 %v2426
    %v2515 = vunpack.c.l.b16 %v2427
    %v2516 = vunpack.c.h.b16 %v2427
    %v2517 = vunpack.c.l.b16 %v2428
    %v2518 = vunpack.c.h.b16 %v2428
    %v2519 = vunpack.c.l.b16 %v2429
    %v2520 = vunpack.c.h.b16 %v2429
    %v2521 = vunpack.c.l.b16 %v2430
    %v2522 = vunpack.c.h.b16 %v2430
    %v2523 = vunpack.c.l.b16 %v2431
    %v2524 = vunpack.c.h.b16 %v2431
    %v2525 = vunpack.c.l.b16 %v2432
    %v2526 = vunpack.c.h.b16 %v2432
    %v2527 = vunpack.c.l.b16 %v2433
    %v2528 = vunpack.c.h.b16 %v2433
    %v2529 = vunpack.c.l.b16 %v2434
    %v2530 = vunpack.c.h.b16 %v2434
    %v2531 = vunpack.c.l.b16 %v2435
    %v2532 = vunpack.c.h.b16 %v2435
    %v2533 = vunpack.c.l.b16 %v2436
    %v2534 = vunpack.c.h.b16 %v2436
    %v2535 = vunpack.c.l.b16 %v2437
    %v2536 = vunpack.c.h.b16 %v2437
    %v2537 = vunpack.c.l.b16 %v2438
    %v2538 = vunpack.c.h.b16 %v2438
    %v2539 = vunpack.c.l.b16 %v2439
    %v2540 = vunpack.c.h.b16 %v2439
    %v2541 = vunpack.c.l.b16 %v2440
    %v2542 = vunpack.c.h.b16 %v2440
    %v2543 = vunpack.c.l.b16 %v2441
    %v2544 = vunpack.c.h.b16 %v2441
    %v2545 = vunpack.c.l.b16 %v2442
    %v2546 = vunpack.c.h.b16 %v2442
    %v2547 = vunpack.c.l.b16 %v2443
    %v2548 = vunpack.c.h.b16 %v2443
    %v2549 = vunpack.c.l.b16 %v2444
    %v2550 = vunpack.c.h.b16 %v2444
    %v2551 = vunpack.c.l.b16 %v2445
    %v2552 = vunpack.c.h.b16 %v2445
    %v2553 = vunpack.c.l.b16 %v2446
    %v2554 = vunpack.c.h.b16 %v2446
    %v2555 = vunpack.c.l.b16 %v2447
    %v2556 = vunpack.c.h.b16 %v2447
    %v2557 = vunpack.c.l.b16 %v2448
    %v2558 = vunpack.c.h.b16 %v2448
    %v2559 = vunpack.c.l.b16 %v2449
    %v2560 = vunpack.c.h.b16 %v2449
    %v2561 = vunpack.c.l.b16 %v2450
    %v2562 = vunpack.c.h.b16 %v2450
    %v2563 = vunpack.c.l.b16 %v2451
    %v2564 = vunpack.c.h.b16 %v2451
    %v2565 = vunpack.c.l.b16 %v2452
    %v2566 = vunpack.c.h.b16 %v2452
    %v2567 = vunpack.c.l.b16 %v2453
    %v2568 = vunpack.c.h.b16 %v2453
    %v2569 = vunpack.c.l.b16 %v2454
    %v2570 = vunpack.c.h.b16 %v2454
    %v2571 = vunpack.c.l.b16 %v2455
    %v2572 = vunpack.c.h.b16 %v2455
    %v2573 = vunpack.c.l.b16 %v2456
    %v2574 = vunpack.c.h.b16 %v2456
    %v2575 = vpack.c.b16 %v2515, %v2511
    %v2576 = vpack.c.b16 %v2516, %v2512
    %v2577 = vpack.c.b16 %v2517, %v2513
    %v2578 = vpack.c.b16 %v2518, %v2514
    %v2579 = vpack.c.b16 %v2523, %v2519
    %v2580 = vpack.c.b16 %v2524, %v2520
    %v2581 = vpack.c.b16 %v2525, %v2521
    %v2582 = vpack.c.b16 %v2526, %v2522
    %v2583 = vpack.c.b16 %v2531, %v2527
    %v2584 = vpack.c.b16 %v2532, %v2528
    %v2585 = vpack.c.b16 %v2533, %v2529
    %v2586 = vpack.c.b16 %v2534, %v2530
    %v2587 = vpack.c.b16 %v2539, %v2535
    %v2588 = vpack.c.b16 %v2540, %v2536
    %v2589 = vpack.c.b16 %v2541, %v2537
    %v2590 = vpack.c.b16 %v2542, %v2538
    %v2591 = vpack.c.b16 %v2547, %v2543
    %v2592 = vpack.c.b16 %v2548, %v2544
    %v2593 = vpack.c.b16 %v2549, %v2545
    %v2594 = vpack.c.b16 %v2550, %v2546
    %v2595 = vpack.c.b16 %v2555, %v2551
    %v2596 = vpack.c.b16 %v2556, %v2552
    %v2597 = vpack.c.b16 %v2557, %v2553
    %v2598 = vpack.c.b16 %v2558, %v2554
    %v2599 = vpack.c.b16 %v2563, %v2559
    %v2600 = vpack.c.b16 %v2564, %v2560
    %v2601 = vpack.c.b16 %v2565, %v2561
    %v2602 = vpack.c.b16 %v2566, %v2562
    %v2603 = vpack.c.b16 %v2571, %v2567
    %v2604 = vpack.c.b16 %v2572, %v2568
    %v2605 = vpack.c.b16 %v2573, %v2569
    %v2606 = vpack.c.b16 %v2574, %v2570
    %2639 = vmatprep.subr.bf16.mxu0 %v2576
    %2640 = vmatpush1.bf16.msra.mxu0 %v2575
    %2641 = vmatprep.subr.bf16.mxu0 %v2580
    %2642 = vmatpush1.bf16.msra.mxu0 %v2579
    %2643 = vmatprep.subr.bf16.mxu0 %v2584
    %2644 = vmatpush1.bf16.msra.mxu0 %v2583
    %2645 = vmatprep.subr.bf16.mxu0 %v2588
    %2646 = vmatpush1.bf16.msra.mxu0 %v2587
    %2647 = vmatprep.subr.bf16.mxu0 %v2592
    %2648 = vmatpush1.bf16.msra.mxu0 %v2591
    %2649 = vmatprep.subr.bf16.mxu0 %v2596
    %2650 = vmatpush1.bf16.msra.mxu0 %v2595
    %2651 = vmatprep.subr.bf16.mxu0 %v2600
    %2652 = vmatpush1.bf16.msra.mxu0 %v2599
    %2653 = vmatprep.subr.bf16.mxu0 %v2604
    %2654 = vmatpush1.bf16.msra.mxu0 %v2603
    %2655 = vmatprep.subr.bf16.mxu0 0
    %2656 = vmatpush1.bf16.msra.mxu0 0
    %2657 = vmatprep.subr.bf16.mxu0 0
    %2658 = vmatpush1.bf16.msra.mxu0 0
    %2659 = vmatprep.subr.bf16.mxu0 0
    %2660 = vmatpush1.bf16.msra.mxu0 0
    %2661 = vmatprep.subr.bf16.mxu0 0
    %2662 = vmatpush1.bf16.msra.mxu0 0
    %2663 = vmatprep.subr.bf16.mxu0 0
    %2664 = vmatpush1.bf16.msra.mxu0 0
    %2665 = vmatprep.subr.bf16.mxu0 0
    %2666 = vmatpush1.bf16.msra.mxu0 0
    %2667 = vmatprep.subr.bf16.mxu0 0
    %2668 = vmatpush1.bf16.msra.mxu0 0
    %2669 = vmatprep.subr.bf16.mxu0 0
    %2670 = vmatpush1.bf16.msra.mxu0 0
    %2671 = vmatprep.mubr.bf16.mxu0 0
    %2672 = vmatmul.mubr.bf16.gmra.mrb[0].mxu0 %v2424
    %v2673 = vpop.f32.mrb[0].mxu0
    %v2674 = vadd.f32 %v2462, %v2673
    %v2675 = vpop.f32.mrb[0].mxu0
    %v2676 = vadd.f32 %v2466, %v2675
    %v2677 = vpop.f32.mrb[0].mxu0
    %v2678 = vadd.f32 %v2462, %v2677
    %v2679 = vpop.f32.mrb[0].mxu0
    %v2680 = vadd.f32 %v2466, %v2679
    %2681 = vdwg.mxu0
    %2682 = vmatprep.subr.bf16.mxu0 %v2578
    %2683 = vmatpush1.bf16.msra.mxu0 %v2577
    %2684 = vmatprep.subr.bf16.mxu0 %v2582
    %2685 = vmatpush1.bf16.msra.mxu0 %v2581
    %2686 = vmatprep.subr.bf16.mxu0 %v2586
    %2687 = vmatpush1.bf16.msra.mxu0 %v2585
    %2688 = vmatprep.subr.bf16.mxu0 %v2590
    %2689 = vmatpush1.bf16.msra.mxu0 %v2589
    %2690 = vmatprep.subr.bf16.mxu0 %v2594
    %2691 = vmatpush1.bf16.msra.mxu0 %v2593
    %2692 = vmatprep.subr.bf16.mxu0 %v2598
    %2693 = vmatpush1.bf16.msra.mxu0 %v2597
    %2694 = vmatprep.subr.bf16.mxu0 %v2602
    %2695 = vmatpush1.bf16.msra.mxu0 %v2601
    %2696 = vmatprep.subr.bf16.mxu0 %v2606
    %2697 = vmatpush1.bf16.msra.mxu0 %v2605
    %2698 = vmatprep.subr.bf16.mxu0 0
    %2699 = vmatpush1.bf16.msra.mxu0 0
    %2700 = vmatprep.subr.bf16.mxu0 0
    %2701 = vmatpush1.bf16.msra.mxu0 0
    %2702 = vmatprep.subr.bf16.mxu0 0
    %2703 = vmatpush1.bf16.msra.mxu0 0
    %2704 = vmatprep.subr.bf16.mxu0 0
    %2705 = vmatpush1.bf16.msra.mxu0 0
    %2706 = vmatprep.subr.bf16.mxu0 0
    %2707 = vmatpush1.bf16.msra.mxu0 0
    %2708 = vmatprep.subr.bf16.mxu0 0
    %2709 = vmatpush1.bf16.msra.mxu0 0
    %2710 = vmatprep.subr.bf16.mxu0 0
    %2711 = vmatpush1.bf16.msra.mxu0 0
    %2712 = vmatprep.subr.bf16.mxu0 0
    %2713 = vmatpush1.bf16.msra.mxu0 0
    %2714 = vmatprep.mubr.bf16.mxu0 0
    %2715 = vmatmul.mubr.bf16.gmra.mrb[0].mxu0 %v2424
    %v2716 = vpop.f32.mrb[0].mxu0
    %v2717 = vadd.f32 %v2470, %v2716
    %v2718 = vpop.f32.mrb[0].mxu0
    %v2719 = vadd.f32 %v2474, %v2718
    %v2720 = vpop.f32.mrb[0].mxu0
    %v2721 = vadd.f32 %v2470, %v2720
    %v2722 = vpop.f32.mrb[0].mxu0
    %v2723 = vadd.f32 %v2474, %v2722
    %2724 = vdwg.mxu0
    %v2725 = vmax.f32 %v2674, 0.0
    %v2726 = vmax.f32 %v2676, 0.0
    %v2727 = vmax.f32 %v2717, 0.0
    %v2728 = vmax.f32 %v2719, 0.0
    %v2729 = vmax.f32 %v2678, 0.0
    %v2730 = vmax.f32 %v2680, 0.0
    %v2731 = vmax.f32 %v2721, 0.0
    %v2732 = vmax.f32 %v2723, 0.0
    %v2733 = vpack.c.bf16 %v2729, %v2725
    %v2734 = vpack.c.bf16 %v2730, %v2726
    %v2735 = vpack.c.bf16 %v2731, %v2727
    %v2736 = vpack.c.bf16 %v2732, %v2728
    %v2737 = vld [vmem:[#allocation12] sm:$0xff]
    %v2738 = vld [vmem:[#allocation12 + $0x8] sm:$0xff]
    %v2739 = vld [vmem:[#allocation12 + $0x10] sm:$0xff]
    %v2740 = vld [vmem:[#allocation12 + $0x18] sm:$0xf]
    %v2741 = vld [vmem:[#allocation12 + $0x1c] sm:$0xff]
    %v2742 = vld [vmem:[#allocation12 + $0x24] sm:$0xff]
    %v2743 = vld [vmem:[#allocation12 + $0x2c] sm:$0xff]
    %v2744 = vld [vmem:[#allocation12 + $0x34] sm:$0xf]
    %v2745 = vld [vmem:[#allocation12 + $0x38] sm:$0xff]
    %v2746 = vld [vmem:[#allocation12 + $0x40] sm:$0xff]
    %v2747 = vld [vmem:[#allocation12 + $0x48] sm:$0xff]
    %v2748 = vld [vmem:[#allocation12 + $0x50] sm:$0xf]
    %v2749 = vld [vmem:[#allocation12 + $0x54] sm:$0xff]
    %v2750 = vld [vmem:[#allocation12 + $0x5c] sm:$0xff]
    %v2751 = vld [vmem:[#allocation12 + $0x64] sm:$0xff]
    %v2752 = vld [vmem:[#allocation12 + $0x6c] sm:$0xf]
    %v2753 = vld [vmem:[#allocation12 + $0x70] sm:$0xff]
    %v2754 = vld [vmem:[#allocation12 + $0x78] sm:$0xff]
    %v2755 = vld [vmem:[#allocation12 + $0x80] sm:$0xff]
    %v2756 = vld [vmem:[#allocation12 + $0x88] sm:$0xf]
    %v2757 = vld [vmem:[#allocation12 + $0x8c] sm:$0xff]
    %v2758 = vld [vmem:[#allocation12 + $0x94] sm:$0xff]
    %v2759 = vld [vmem:[#allocation12 + $0x9c] sm:$0xff]
    %v2760 = vld [vmem:[#allocation12 + $0xa4] sm:$0xf]
    %v2761 = vld [vmem:[#allocation12 + $0xa8] sm:$0xff]
    %v2762 = vld [vmem:[#allocation12 + $0xb0] sm:$0xff]
    %v2763 = vld [vmem:[#allocation12 + $0xb8] sm:$0xff]
    %v2764 = vld [vmem:[#allocation12 + $0xc0] sm:$0xf]
    %v2765 = vld [vmem:[#allocation12 + $0xc4] sm:$0xff]
    %v2766 = vld [vmem:[#allocation12 + $0xcc] sm:$0xff]
    %v2767 = vld [vmem:[#allocation12 + $0xd4] sm:$0xff]
    %v2768 = vld [vmem:[#allocation12 + $0xdc] sm:$0xf]
    %v2769 = vld [vmem:[#allocation12 + $0xe0] sm:$0xff]
    %v2770 = vld [vmem:[#allocation12 + $0xe8] sm:$0xff]
    %v2771 = vld [vmem:[#allocation12 + $0xf0] sm:$0xff]
    %v2772 = vld [vmem:[#allocation12 + $0xf8] sm:$0xf]
    %v2773 = vld [vmem:[#allocation12 + $0xfc] sm:$0xff]
    %v2774 = vld [vmem:[#allocation12 + $0x104] sm:$0xff]
    %v2775 = vld [vmem:[#allocation12 + $0x10c] sm:$0xff]
    %v2776 = vld [vmem:[#allocation12 + $0x114] sm:$0xf]
    %v2777 = vld [vmem:[#allocation12 + $0x118] sm:$0xff]
    %v2778 = vld [vmem:[#allocation12 + $0x120] sm:$0xff]
    %v2779 = vld [vmem:[#allocation12 + $0x128] sm:$0xff]
    %v2780 = vld [vmem:[#allocation12 + $0x130] sm:$0xf]
    %v2781 = vld [vmem:[#allocation12 + $0x134] sm:$0xff]
    %v2782 = vld [vmem:[#allocation12 + $0x13c] sm:$0xff]
    %v2783 = vld [vmem:[#allocation12 + $0x144] sm:$0xff]
    %v2784 = vld [vmem:[#allocation12 + $0x14c] sm:$0xf]
    %v2785 = vld [vmem:[#allocation12 + $0x150] sm:$0xff]
    %v2786 = vld [vmem:[#allocation12 + $0x158] sm:$0xff]
    %v2787 = vld [vmem:[#allocation12 + $0x160] sm:$0xff]
    %v2788 = vld [vmem:[#allocation12 + $0x168] sm:$0xf]
    %v2789 = vld [vmem:[#allocation12 + $0x16c] sm:$0xff]
    %v2790 = vld [vmem:[#allocation12 + $0x174] sm:$0xff]
    %v2791 = vld [vmem:[#allocation12 + $0x17c] sm:$0xff]
    %v2792 = vld [vmem:[#allocation12 + $0x184] sm:$0xf]
    %v2793 = vld [vmem:[#allocation12 + $0x188] sm:$0xff]
    %v2794 = vld [vmem:[#allocation12 + $0x190] sm:$0xff]
    %v2795 = vld [vmem:[#allocation12 + $0x198] sm:$0xff]
    %v2796 = vld [vmem:[#allocation12 + $0x1a0] sm:$0xf]
    %v2797 = vld [vmem:[#allocation12 + $0x1a4] sm:$0xff]
    %v2798 = vld [vmem:[#allocation12 + $0x1ac] sm:$0xff]
    %v2799 = vld [vmem:[#allocation12 + $0x1b4] sm:$0xff]
    %v2800 = vld [vmem:[#allocation12 + $0x1bc] sm:$0xf]
    %v2801 = vld [vmem:[#allocation12 + $0x1c0] sm:$0xff]
    %v2802 = vld [vmem:[#allocation12 + $0x1c8] sm:$0xff]
    %v2803 = vld [vmem:[#allocation12 + $0x1d0] sm:$0xff]
    %v2804 = vld [vmem:[#allocation12 + $0x1d8] sm:$0xf]
    %v2805 = vld [vmem:[#allocation12 + $0x1dc] sm:$0xff]
    %v2806 = vld [vmem:[#allocation12 + $0x1e4] sm:$0xff]
    %v2807 = vld [vmem:[#allocation12 + $0x1ec] sm:$0xff]
    %v2808 = vld [vmem:[#allocation12 + $0x1f4] sm:$0xf]
    %v2809 = vld [vmem:[#allocation12 + $0x1f8] sm:$0xff]
    %v2810 = vld [vmem:[#allocation12 + $0x200] sm:$0xff]
    %v2811 = vld [vmem:[#allocation12 + $0x208] sm:$0xff]
    %v2812 = vld [vmem:[#allocation12 + $0x210] sm:$0xf]
    %v2813 = vld [vmem:[#allocation12 + $0x214] sm:$0xff]
    %v2814 = vld [vmem:[#allocation12 + $0x21c] sm:$0xff]
    %v2815 = vld [vmem:[#allocation12 + $0x224] sm:$0xff]
    %v2816 = vld [vmem:[#allocation12 + $0x22c] sm:$0xf]
    %v2817 = vld [vmem:[#allocation12 + $0x230] sm:$0xff]
    %v2818 = vld [vmem:[#allocation12 + $0x238] sm:$0xff]
    %v2819 = vld [vmem:[#allocation12 + $0x240] sm:$0xff]
    %v2820 = vld [vmem:[#allocation12 + $0x248] sm:$0xf]
    %v2821 = vld [vmem:[#allocation12 + $0x24c] sm:$0xff]
    %v2822 = vld [vmem:[#allocation12 + $0x254] sm:$0xff]
    %v2823 = vld [vmem:[#allocation12 + $0x25c] sm:$0xff]
    %v2824 = vld [vmem:[#allocation12 + $0x264] sm:$0xf]
    %v2825 = vld [vmem:[#allocation12 + $0x268] sm:$0xff]
    %v2826 = vld [vmem:[#allocation12 + $0x270] sm:$0xff]
    %v2827 = vld [vmem:[#allocation12 + $0x278] sm:$0xff]
    %v2828 = vld [vmem:[#allocation12 + $0x280] sm:$0xf]
    %v2829 = vld [vmem:[#allocation12 + $0x284] sm:$0xff]
    %v2830 = vld [vmem:[#allocation12 + $0x28c] sm:$0xff]
    %v2831 = vld [vmem:[#allocation12 + $0x294] sm:$0xff]
    %v2832 = vld [vmem:[#allocation12 + $0x29c] sm:$0xf]
    %v2833 = vld [vmem:[#allocation12 + $0x2a0] sm:$0xff]
    %v2834 = vld [vmem:[#allocation12 + $0x2a8] sm:$0xff]
    %v2835 = vld [vmem:[#allocation12 + $0x2b0] sm:$0xff]
    %v2836 = vld [vmem:[#allocation12 + $0x2b8] sm:$0xf]
    %v2837 = vld [vmem:[#allocation12 + $0x2bc] sm:$0xff]
    %v2838 = vld [vmem:[#allocation12 + $0x2c4] sm:$0xff]
    %v2839 = vld [vmem:[#allocation12 + $0x2cc] sm:$0xff]
    %v2840 = vld [vmem:[#allocation12 + $0x2d4] sm:$0xf]
    %v2841 = vld [vmem:[#allocation12 + $0x2d8] sm:$0xff]
    %v2842 = vld [vmem:[#allocation12 + $0x2e0] sm:$0xff]
    %v2843 = vld [vmem:[#allocation12 + $0x2e8] sm:$0xff]
    %v2844 = vld [vmem:[#allocation12 + $0x2f0] sm:$0xf]
    %v2845 = vld [vmem:[#allocation12 + $0x2f4] sm:$0xff]
    %v2846 = vld [vmem:[#allocation12 + $0x2fc] sm:$0xff]
    %v2847 = vld [vmem:[#allocation12 + $0x304] sm:$0xff]
    %v2848 = vld [vmem:[#allocation12 + $0x30c] sm:$0xf]
    %v2849 = vld [vmem:[#allocation12 + $0x310] sm:$0xff]
    %v2850 = vld [vmem:[#allocation12 + $0x318] sm:$0xff]
    %v2851 = vld [vmem:[#allocation12 + $0x320] sm:$0xff]
    %v2852 = vld [vmem:[#allocation12 + $0x328] sm:$0xf]
    %v2853 = vld [vmem:[#allocation12 + $0x32c] sm:$0xff]
    %v2854 = vld [vmem:[#allocation12 + $0x334] sm:$0xff]
    %v2855 = vld [vmem:[#allocation12 + $0x33c] sm:$0xff]
    %v2856 = vld [vmem:[#allocation12 + $0x344] sm:$0xf]
    %v2857 = vld [vmem:[#allocation12 + $0x348] sm:$0xff]
    %v2858 = vld [vmem:[#allocation12 + $0x350] sm:$0xff]
    %v2859 = vld [vmem:[#allocation12 + $0x358] sm:$0xff]
    %v2860 = vld [vmem:[#allocation12 + $0x360] sm:$0xf]
    %v2861 = vld [vmem:[#allocation12 + $0x364] sm:$0xff]
    %v2862 = vld [vmem:[#allocation12 + $0x36c] sm:$0xff]
    %v2863 = vld [vmem:[#allocation12 + $0x374] sm:$0xff]
    %v2864 = vld [vmem:[#allocation12 + $0x37c] sm:$0xf]
    %v2865 = vld [vmem:[#allocation12 + $0x380] sm:$0xff]
    %v2866 = vld [vmem:[#allocation12 + $0x388] sm:$0xff]
    %v2867 = vld [vmem:[#allocation12 + $0x390] sm:$0xff]
    %v2868 = vld [vmem:[#allocation12 + $0x398] sm:$0xf]
    %v2869 = vld [vmem:[#allocation12 + $0x39c] sm:$0xff]
    %v2870 = vld [vmem:[#allocation12 + $0x3a4] sm:$0xff]
    %v2871 = vld [vmem:[#allocation12 + $0x3ac] sm:$0xff]
    %v2872 = vld [vmem:[#allocation12 + $0x3b4] sm:$0xf]
    %v2873 = vld [vmem:[#allocation12 + $0x3b8] sm:$0xff]
    %v2874 = vld [vmem:[#allocation12 + $0x3c0] sm:$0xff]
    %v2875 = vld [vmem:[#allocation12 + $0x3c8] sm:$0xff]
    %v2876 = vld [vmem:[#allocation12 + $0x3d0] sm:$0xf]
    %v2877 = vld [vmem:[#allocation12 + $0x3d4] sm:$0xff]
    %v2878 = vld [vmem:[#allocation12 + $0x3dc] sm:$0xff]
    %v2879 = vld [vmem:[#allocation12 + $0x3e4] sm:$0xff]
    %v2880 = vld [vmem:[#allocation12 + $0x3ec] sm:$0xf]
    %v2881 = vld [vmem:[#allocation12 + $0x3f0] sm:$0xff]
    %v2882 = vld [vmem:[#allocation12 + $0x3f8] sm:$0xff]
    %v2883 = vld [vmem:[#allocation12 + $0x400] sm:$0xff]
    %v2884 = vld [vmem:[#allocation12 + $0x408] sm:$0xf]
    %v2885 = vld [vmem:[#allocation12 + $0x40c] sm:$0xff]
    %v2886 = vld [vmem:[#allocation12 + $0x414] sm:$0xff]
    %v2887 = vld [vmem:[#allocation12 + $0x41c] sm:$0xff]
    %v2888 = vld [vmem:[#allocation12 + $0x424] sm:$0xf]
    %v2889 = vld [vmem:[#allocation12 + $0x428] sm:$0xff]
    %v2890 = vld [vmem:[#allocation12 + $0x430] sm:$0xff]
    %v2891 = vld [vmem:[#allocation12 + $0x438] sm:$0xff]
    %v2892 = vld [vmem:[#allocation12 + $0x440] sm:$0xf]
    %v2893 = vld [vmem:[#allocation12 + $0x444] sm:$0xff]
    %v2894 = vld [vmem:[#allocation12 + $0x44c] sm:$0xff]
    %v2895 = vld [vmem:[#allocation12 + $0x454] sm:$0xff]
    %v2896 = vld [vmem:[#allocation12 + $0x45c] sm:$0xf]
    %v2897 = vld [vmem:[#allocation12 + $0x460] sm:$0xff]
    %v2898 = vld [vmem:[#allocation12 + $0x468] sm:$0xff]
    %v2899 = vld [vmem:[#allocation12 + $0x470] sm:$0xff]
    %v2900 = vld [vmem:[#allocation12 + $0x478] sm:$0xf]
    %v2901 = vld [vmem:[#allocation12 + $0x47c] sm:$0xff]
    %v2902 = vld [vmem:[#allocation12 + $0x484] sm:$0xff]
    %v2903 = vld [vmem:[#allocation12 + $0x48c] sm:$0xff]
    %v2904 = vld [vmem:[#allocation12 + $0x494] sm:$0xf]
    %v2905 = vld [vmem:[#allocation12 + $0x498] sm:$0xff]
    %v2906 = vld [vmem:[#allocation12 + $0x4a0] sm:$0xff]
    %v2907 = vld [vmem:[#allocation12 + $0x4a8] sm:$0xff]
    %v2908 = vld [vmem:[#allocation12 + $0x4b0] sm:$0xf]
    %v2909 = vld [vmem:[#allocation12 + $0x4b4] sm:$0xff]
    %v2910 = vld [vmem:[#allocation12 + $0x4bc] sm:$0xff]
    %v2911 = vld [vmem:[#allocation12 + $0x4c4] sm:$0xff]
    %v2912 = vld [vmem:[#allocation12 + $0x4cc] sm:$0xf]
    %v2913 = vld [vmem:[#allocation12 + $0x4d0] sm:$0xff]
    %v2914 = vld [vmem:[#allocation12 + $0x4d8] sm:$0xff]
    %v2915 = vld [vmem:[#allocation12 + $0x4e0] sm:$0xff]
    %v2916 = vld [vmem:[#allocation12 + $0x4e8] sm:$0xf]
    %v2917 = vld [vmem:[#allocation12 + $0x4ec] sm:$0xff]
    %v2918 = vld [vmem:[#allocation12 + $0x4f4] sm:$0xff]
    %v2919 = vld [vmem:[#allocation12 + $0x4fc] sm:$0xff]
    %v2920 = vld [vmem:[#allocation12 + $0x504] sm:$0xf]
    %v2921 = vld [vmem:[#allocation12 + $0x508] sm:$0xff]
    %v2922 = vld [vmem:[#allocation12 + $0x510] sm:$0xff]
    %v2923 = vld [vmem:[#allocation12 + $0x518] sm:$0xff]
    %v2924 = vld [vmem:[#allocation12 + $0x520] sm:$0xf]
    %v2925 = vld [vmem:[#allocation12 + $0x524] sm:$0xff]
    %v2926 = vld [vmem:[#allocation12 + $0x52c] sm:$0xff]
    %v2927 = vld [vmem:[#allocation12 + $0x534] sm:$0xff]
    %v2928 = vld [vmem:[#allocation12 + $0x53c] sm:$0xf]
    %v2929 = vld [vmem:[#allocation12 + $0x540] sm:$0xff]
    %v2930 = vld [vmem:[#allocation12 + $0x548] sm:$0xff]
    %v2931 = vld [vmem:[#allocation12 + $0x550] sm:$0xff]
    %v2932 = vld [vmem:[#allocation12 + $0x558] sm:$0xf]
    %v2933 = vld [vmem:[#allocation12 + $0x55c] sm:$0xff]
    %v2934 = vld [vmem:[#allocation12 + $0x564] sm:$0xff]
    %v2935 = vld [vmem:[#allocation12 + $0x56c] sm:$0xff]
    %v2936 = vld [vmem:[#allocation12 + $0x574] sm:$0xf]
    %v2937 = vld [vmem:[#allocation12 + $0x578] sm:$0xff]
    %v2938 = vld [vmem:[#allocation12 + $0x580] sm:$0xff]
    %v2939 = vld [vmem:[#allocation12 + $0x588] sm:$0xff]
    %v2940 = vld [vmem:[#allocation12 + $0x590] sm:$0xf]
    %v2941 = vld [vmem:[#allocation12 + $0x594] sm:$0xff]
    %v2942 = vld [vmem:[#allocation12 + $0x59c] sm:$0xff]
    %v2943 = vld [vmem:[#allocation12 + $0x5a4] sm:$0xff]
    %v2944 = vld [vmem:[#allocation12 + $0x5ac] sm:$0xf]
    %v2945 = vld [vmem:[#allocation12 + $0x5b0] sm:$0xff]
    %v2946 = vld [vmem:[#allocation12 + $0x5b8] sm:$0xff]
    %v2947 = vld [vmem:[#allocation12 + $0x5c0] sm:$0xff]
    %v2948 = vld [vmem:[#allocation12 + $0x5c8] sm:$0xf]
    %v2949 = vld [vmem:[#allocation12 + $0x5cc] sm:$0xff]
    %v2950 = vld [vmem:[#allocation12 + $0x5d4] sm:$0xff]
    %v2951 = vld [vmem:[#allocation12 + $0x5dc] sm:$0xff]
    %v2952 = vld [vmem:[#allocation12 + $0x5e4] sm:$0xf]
    %v2953 = vld [vmem:[#allocation12 + $0x5e8] sm:$0xff]
    %v2954 = vld [vmem:[#allocation12 + $0x5f0] sm:$0xff]
    %v2955 = vld [vmem:[#allocation12 + $0x5f8] sm:$0xff]
    %v2956 = vld [vmem:[#allocation12 + $0x600] sm:$0xf]
    %v2957 = vld [vmem:[#allocation12 + $0x604] sm:$0xff]
    %v2958 = vld [vmem:[#allocation12 + $0x60c] sm:$0xff]
    %v2959 = vld [vmem:[#allocation12 + $0x614] sm:$0xff]
    %v2960 = vld [vmem:[#allocation12 + $0x61c] sm:$0xf]
    %v2961 = vld [vmem:[#allocation12 + $0x620] sm:$0xff]
    %v2962 = vld [vmem:[#allocation12 + $0x628] sm:$0xff]
    %v2963 = vld [vmem:[#allocation12 + $0x630] sm:$0xff]
    %v2964 = vld [vmem:[#allocation12 + $0x638] sm:$0xf]
    %v2965 = vld [vmem:[#allocation12 + $0x63c] sm:$0xff]
    %v2966 = vld [vmem:[#allocation12 + $0x644] sm:$0xff]
    %v2967 = vld [vmem:[#allocation12 + $0x64c] sm:$0xff]
    %v2968 = vld [vmem:[#allocation12 + $0x654] sm:$0xf]
    %v2969 = vld [vmem:[#allocation12 + $0x658] sm:$0xff]
    %v2970 = vld [vmem:[#allocation12 + $0x660] sm:$0xff]
    %v2971 = vld [vmem:[#allocation12 + $0x668] sm:$0xff]
    %v2972 = vld [vmem:[#allocation12 + $0x670] sm:$0xf]
    %v2973 = vld [vmem:[#allocation12 + $0x674] sm:$0xff]
    %v2974 = vld [vmem:[#allocation12 + $0x67c] sm:$0xff]
    %v2975 = vld [vmem:[#allocation12 + $0x684] sm:$0xff]
    %v2976 = vld [vmem:[#allocation12 + $0x68c] sm:$0xf]
    %v2977 = vld [vmem:[#allocation12 + $0x690] sm:$0xff]
    %v2978 = vld [vmem:[#allocation12 + $0x698] sm:$0xff]
    %v2979 = vld [vmem:[#allocation12 + $0x6a0] sm:$0xff]
    %v2980 = vld [vmem:[#allocation12 + $0x6a8] sm:$0xf]
    %v2981 = vld [vmem:[#allocation12 + $0x6ac] sm:$0xff]
    %v2982 = vld [vmem:[#allocation12 + $0x6b4] sm:$0xff]
    %v2983 = vld [vmem:[#allocation12 + $0x6bc] sm:$0xff]
    %v2984 = vld [vmem:[#allocation12 + $0x6c4] sm:$0xf]
    %v2985 = vld [vmem:[#allocation12 + $0x6c8] sm:$0xff]
    %v2986 = vld [vmem:[#allocation12 + $0x6d0] sm:$0xff]
    %v2987 = vld [vmem:[#allocation12 + $0x6d8] sm:$0xff]
    %v2988 = vld [vmem:[#allocation12 + $0x6e0] sm:$0xf]
    %v2989 = vld [vmem:[#allocation12 + $0x6e4] sm:$0xff]
    %v2990 = vld [vmem:[#allocation12 + $0x6ec] sm:$0xff]
    %v2991 = vld [vmem:[#allocation12 + $0x6f4] sm:$0xff]
    %v2992 = vld [vmem:[#allocation12 + $0x6fc] sm:$0xf]
    %v2993 = vld [vmem:[%s10] sm:$0xff]
    %v2995 = vlaneseq
    %v2996 = vshrl.u32 %v2995, 7
    %v2997 = vsub.s32 0, %v2996
    %v2998 = vrot.slane %v2993, %v2997
    %v2999 = vlaneseq
    %v3000 = vshrl.u32 %v2999, 7
    %v3001 = vsub.s32 1, %v3000
    %v3002 = vrot.slane %v2993, %v3001
    %v3003 = vlaneseq
    %v3004 = vshrl.u32 %v3003, 7
    %v3005 = vsub.s32 2, %v3004
    %v3006 = vrot.slane %v2993, %v3005
    %v3007 = vlaneseq
    %v3008 = vshrl.u32 %v3007, 7
    %v3009 = vsub.s32 3, %v3008
    %v3010 = vrot.slane %v2993, %v3009
    %v3011 = vlaneseq
    %v3012 = vshrl.u32 %v3011, 7
    %v3013 = vsub.s32 4, %v3012
    %v3014 = vrot.slane %v2993, %v3013
    %v3015 = vlaneseq
    %v3016 = vshrl.u32 %v3015, 7
    %v3017 = vsub.s32 5, %v3016
    %v3018 = vrot.slane %v2993, %v3017
    %v3019 = vlaneseq
    %v3020 = vshrl.u32 %v3019, 7
    %v3021 = vsub.s32 6, %v3020
    %v3022 = vrot.slane %v2993, %v3021
    %v3286 = vunpack.c.l.b16 %v2737
    %v3287 = vunpack.c.h.b16 %v2737
    %v3288 = vunpack.c.l.b16 %v2738
    %v3289 = vunpack.c.h.b16 %v2738
    %v3290 = vunpack.c.l.b16 %v2739
    %v3291 = vunpack.c.h.b16 %v2739
    %v3292 = vunpack.c.l.b16 %v2740
    %v3293 = vunpack.c.l.b16 %v2741
    %v3294 = vunpack.c.h.b16 %v2741
    %v3295 = vunpack.c.l.b16 %v2742
    %v3296 = vunpack.c.h.b16 %v2742
    %v3297 = vunpack.c.l.b16 %v2743
    %v3298 = vunpack.c.h.b16 %v2743
    %v3299 = vunpack.c.l.b16 %v2744
    %v3300 = vunpack.c.l.b16 %v2745
    %v3301 = vunpack.c.h.b16 %v2745
    %v3302 = vunpack.c.l.b16 %v2746
    %v3303 = vunpack.c.h.b16 %v2746
    %v3304 = vunpack.c.l.b16 %v2747
    %v3305 = vunpack.c.h.b16 %v2747
    %v3306 = vunpack.c.l.b16 %v2748
    %v3307 = vunpack.c.l.b16 %v2749
    %v3308 = vunpack.c.h.b16 %v2749
    %v3309 = vunpack.c.l.b16 %v2750
    %v3310 = vunpack.c.h.b16 %v2750
    %v3311 = vunpack.c.l.b16 %v2751
    %v3312 = vunpack.c.h.b16 %v2751
    %v3313 = vunpack.c.l.b16 %v2752
    %v3314 = vunpack.c.l.b16 %v2753
    %v3315 = vunpack.c.h.b16 %v2753
    %v3316 = vunpack.c.l.b16 %v2754
    %v3317 = vunpack.c.h.b16 %v2754
    %v3318 = vunpack.c.l.b16 %v2755
    %v3319 = vunpack.c.h.b16 %v2755
    %v3320 = vunpack.c.l.b16 %v2756
    %v3321 = vunpack.c.l.b16 %v2757
    %v3322 = vunpack.c.h.b16 %v2757
    %v3323 = vunpack.c.l.b16 %v2758
    %v3324 = vunpack.c.h.b16 %v2758
    %v3325 = vunpack.c.l.b16 %v2759
    %v3326 = vunpack.c.h.b16 %v2759
    %v3327 = vunpack.c.l.b16 %v2760
    %v3328 = vunpack.c.l.b16 %v2761
    %v3329 = vunpack.c.h.b16 %v2761
    %v3330 = vunpack.c.l.b16 %v2762
    %v3331 = vunpack.c.h.b16 %v2762
    %v3332 = vunpack.c.l.b16 %v2763
    %v3333 = vunpack.c.h.b16 %v2763
    %v3334 = vunpack.c.l.b16 %v2764
    %v3335 = vunpack.c.l.b16 %v2765
    %v3336 = vunpack.c.h.b16 %v2765
    %v3337 = vunpack.c.l.b16 %v2766
    %v3338 = vunpack.c.h.b16 %v2766
    %v3339 = vunpack.c.l.b16 %v2767
    %v3340 = vunpack.c.h.b16 %v2767
    %v3341 = vunpack.c.l.b16 %v2768
    %v3342 = vunpack.c.l.b16 %v2769
    %v3343 = vunpack.c.h.b16 %v2769
    %v3344 = vunpack.c.l.b16 %v2770
    %v3345 = vunpack.c.h.b16 %v2770
    %v3346 = vunpack.c.l.b16 %v2771
    %v3347 = vunpack.c.h.b16 %v2771
    %v3348 = vunpack.c.l.b16 %v2772
    %v3349 = vunpack.c.l.b16 %v2773
    %v3350 = vunpack.c.h.b16 %v2773
    %v3351 = vunpack.c.l.b16 %v2774
    %v3352 = vunpack.c.h.b16 %v2774
    %v3353 = vunpack.c.l.b16 %v2775
    %v3354 = vunpack.c.h.b16 %v2775
    %v3355 = vunpack.c.l.b16 %v2776
    %v3356 = vunpack.c.l.b16 %v2777
    %v3357 = vunpack.c.h.b16 %v2777
    %v3358 = vunpack.c.l.b16 %v2778
    %v3359 = vunpack.c.h.b16 %v2778
    %v3360 = vunpack.c.l.b16 %v2779
    %v3361 = vunpack.c.h.b16 %v2779
    %v3362 = vunpack.c.l.b16 %v2780
    %v3363 = vunpack.c.l.b16 %v2781
    %v3364 = vunpack.c.h.b16 %v2781
    %v3365 = vunpack.c.l.b16 %v2782
    %v3366 = vunpack.c.h.b16 %v2782
    %v3367 = vunpack.c.l.b16 %v2783
    %v3368 = vunpack.c.h.b16 %v2783
    %v3369 = vunpack.c.l.b16 %v2784
    %v3370 = vunpack.c.l.b16 %v2785
    %v3371 = vunpack.c.h.b16 %v2785
    %v3372 = vunpack.c.l.b16 %v2786
    %v3373 = vunpack.c.h.b16 %v2786
    %v3374 = vunpack.c.l.b16 %v2787
    %v3375 = vunpack.c.h.b16 %v2787
    %v3376 = vunpack.c.l.b16 %v2788
    %v3377 = vunpack.c.l.b16 %v2789
    %v3378 = vunpack.c.h.b16 %v2789
    %v3379 = vunpack.c.l.b16 %v2790
    %v3380 = vunpack.c.h.b16 %v2790
    %v3381 = vunpack.c.l.b16 %v2791
    %v3382 = vunpack.c.h.b16 %v2791
    %v3383 = vunpack.c.l.b16 %v2792
    %v3384 = vunpack.c.l.b16 %v2793
    %v3385 = vunpack.c.h.b16 %v2793
    %v3386 = vunpack.c.l.b16 %v2794
    %v3387 = vunpack.c.h.b16 %v2794
    %v3388 = vunpack.c.l.b16 %v2795
    %v3389 = vunpack.c.h.b16 %v2795
    %v3390 = vunpack.c.l.b16 %v2796
    %v3391 = vunpack.c.l.b16 %v2797
    %v3392 = vunpack.c.h.b16 %v2797
    %v3393 = vunpack.c.l.b16 %v2798
    %v3394 = vunpack.c.h.b16 %v2798
    %v3395 = vunpack.c.l.b16 %v2799
    %v3396 = vunpack.c.h.b16 %v2799
    %v3397 = vunpack.c.l.b16 %v2800
    %v3398 = vunpack.c.l.b16 %v2801
    %v3399 = vunpack.c.h.b16 %v2801
    %v3400 = vunpack.c.l.b16 %v2802
    %v3401 = vunpack.c.h.b16 %v2802
    %v3402 = vunpack.c.l.b16 %v2803
    %v3403 = vunpack.c.h.b16 %v2803
    %v3404 = vunpack.c.l.b16 %v2804
    %v3405 = vunpack.c.l.b16 %v2805
    %v3406 = vunpack.c.h.b16 %v2805
    %v3407 = vunpack.c.l.b16 %v2806
    %v3408 = vunpack.c.h.b16 %v2806
    %v3409 = vunpack.c.l.b16 %v2807
    %v3410 = vunpack.c.h.b16 %v2807
    %v3411 = vunpack.c.l.b16 %v2808
    %v3412 = vunpack.c.l.b16 %v2809
    %v3413 = vunpack.c.h.b16 %v2809
    %v3414 = vunpack.c.l.b16 %v2810
    %v3415 = vunpack.c.h.b16 %v2810
    %v3416 = vunpack.c.l.b16 %v2811
    %v3417 = vunpack.c.h.b16 %v2811
    %v3418 = vunpack.c.l.b16 %v2812
    %v3419 = vunpack.c.l.b16 %v2813
    %v3420 = vunpack.c.h.b16 %v2813
    %v3421 = vunpack.c.l.b16 %v2814
    %v3422 = vunpack.c.h.b16 %v2814
    %v3423 = vunpack.c.l.b16 %v2815
    %v3424 = vunpack.c.h.b16 %v2815
    %v3425 = vunpack.c.l.b16 %v2816
    %v3426 = vunpack.c.l.b16 %v2817
    %v3427 = vunpack.c.h.b16 %v2817
    %v3428 = vunpack.c.l.b16 %v2818
    %v3429 = vunpack.c.h.b16 %v2818
    %v3430 = vunpack.c.l.b16 %v2819
    %v3431 = vunpack.c.h.b16 %v2819
    %v3432 = vunpack.c.l.b16 %v2820
    %v3433 = vunpack.c.l.b16 %v2821
    %v3434 = vunpack.c.h.b16 %v2821
    %v3435 = vunpack.c.l.b16 %v2822
    %v3436 = vunpack.c.h.b16 %v2822
    %v3437 = vunpack.c.l.b16 %v2823
    %v3438 = vunpack.c.h.b16 %v2823
    %v3439 = vunpack.c.l.b16 %v2824
    %v3440 = vunpack.c.l.b16 %v2825
    %v3441 = vunpack.c.h.b16 %v2825
    %v3442 = vunpack.c.l.b16 %v2826
    %v3443 = vunpack.c.h.b16 %v2826
    %v3444 = vunpack.c.l.b16 %v2827
    %v3445 = vunpack.c.h.b16 %v2827
    %v3446 = vunpack.c.l.b16 %v2828
    %v3447 = vunpack.c.l.b16 %v2829
    %v3448 = vunpack.c.h.b16 %v2829
    %v3449 = vunpack.c.l.b16 %v2830
    %v3450 = vunpack.c.h.b16 %v2830
    %v3451 = vunpack.c.l.b16 %v2831
    %v3452 = vunpack.c.h.b16 %v2831
    %v3453 = vunpack.c.l.b16 %v2832
    %v3454 = vunpack.c.l.b16 %v2833
    %v3455 = vunpack.c.h.b16 %v2833
    %v3456 = vunpack.c.l.b16 %v2834
    %v3457 = vunpack.c.h.b16 %v2834
    %v3458 = vunpack.c.l.b16 %v2835
    %v3459 = vunpack.c.h.b16 %v2835
    %v3460 = vunpack.c.l.b16 %v2836
    %v3461 = vunpack.c.l.b16 %v2837
    %v3462 = vunpack.c.h.b16 %v2837
    %v3463 = vunpack.c.l.b16 %v2838
    %v3464 = vunpack.c.h.b16 %v2838
    %v3465 = vunpack.c.l.b16 %v2839
    %v3466 = vunpack.c.h.b16 %v2839
    %v3467 = vunpack.c.l.b16 %v2840
    %v3468 = vunpack.c.l.b16 %v2841
    %v3469 = vunpack.c.h.b16 %v2841
    %v3470 = vunpack.c.l.b16 %v2842
    %v3471 = vunpack.c.h.b16 %v2842
    %v3472 = vunpack.c.l.b16 %v2843
    %v3473 = vunpack.c.h.b16 %v2843
    %v3474 = vunpack.c.l.b16 %v2844
    %v3475 = vunpack.c.l.b16 %v2845
    %v3476 = vunpack.c.h.b16 %v2845
    %v3477 = vunpack.c.l.b16 %v2846
    %v3478 = vunpack.c.h.b16 %v2846
    %v3479 = vunpack.c.l.b16 %v2847
    %v3480 = vunpack.c.h.b16 %v2847
    %v3481 = vunpack.c.l.b16 %v2848
    %v3482 = vunpack.c.l.b16 %v2849
    %v3483 = vunpack.c.h.b16 %v2849
    %v3484 = vunpack.c.l.b16 %v2850
    %v3485 = vunpack.c.h.b16 %v2850
    %v3486 = vunpack.c.l.b16 %v2851
    %v3487 = vunpack.c.h.b16 %v2851
    %v3488 = vunpack.c.l.b16 %v2852
    %v3489 = vunpack.c.l.b16 %v2853
    %v3490 = vunpack.c.h.b16 %v2853
    %v3491 = vunpack.c.l.b16 %v2854
    %v3492 = vunpack.c.h.b16 %v2854
    %v3493 = vunpack.c.l.b16 %v2855
    %v3494 = vunpack.c.h.b16 %v2855
    %v3495 = vunpack.c.l.b16 %v2856
    %v3496 = vunpack.c.l.b16 %v2857
    %v3497 = vunpack.c.h.b16 %v2857
    %v3498 = vunpack.c.l.b16 %v2858
    %v3499 = vunpack.c.h.b16 %v2858
    %v3500 = vunpack.c.l.b16 %v2859
    %v3501 = vunpack.c.h.b16 %v2859
    %v3502 = vunpack.c.l.b16 %v2860
    %v3503 = vunpack.c.l.b16 %v2861
    %v3504 = vunpack.c.h.b16 %v2861
    %v3505 = vunpack.c.l.b16 %v2862
    %v3506 = vunpack.c.h.b16 %v2862
    %v3507 = vunpack.c.l.b16 %v2863
    %v3508 = vunpack.c.h.b16 %v2863
    %v3509 = vunpack.c.l.b16 %v2864
    %v3510 = vunpack.c.l.b16 %v2865
    %v3511 = vunpack.c.h.b16 %v2865
    %v3512 = vunpack.c.l.b16 %v2866
    %v3513 = vunpack.c.h.b16 %v2866
    %v3514 = vunpack.c.l.b16 %v2867
    %v3515 = vunpack.c.h.b16 %v2867
    %v3516 = vunpack.c.l.b16 %v2868
    %v3517 = vunpack.c.l.b16 %v2869
    %v3518 = vunpack.c.h.b16 %v2869
    %v3519 = vunpack.c.l.b16 %v2870
    %v3520 = vunpack.c.h.b16 %v2870
    %v3521 = vunpack.c.l.b16 %v2871
    %v3522 = vunpack.c.h.b16 %v2871
    %v3523 = vunpack.c.l.b16 %v2872
    %v3524 = vunpack.c.l.b16 %v2873
    %v3525 = vunpack.c.h.b16 %v2873
    %v3526 = vunpack.c.l.b16 %v2874
    %v3527 = vunpack.c.h.b16 %v2874
    %v3528 = vunpack.c.l.b16 %v2875
    %v3529 = vunpack.c.h.b16 %v2875
    %v3530 = vunpack.c.l.b16 %v2876
    %v3531 = vunpack.c.l.b16 %v2877
    %v3532 = vunpack.c.h.b16 %v2877
    %v3533 = vunpack.c.l.b16 %v2878
    %v3534 = vunpack.c.h.b16 %v2878
    %v3535 = vunpack.c.l.b16 %v2879
    %v3536 = vunpack.c.h.b16 %v2879
    %v3537 = vunpack.c.l.b16 %v2880
    %v3538 = vunpack.c.l.b16 %v2881
    %v3539 = vunpack.c.h.b16 %v2881
    %v3540 = vunpack.c.l.b16 %v2882
    %v3541 = vunpack.c.h.b16 %v2882
    %v3542 = vunpack.c.l.b16 %v2883
    %v3543 = vunpack.c.h.b16 %v2883
    %v3544 = vunpack.c.l.b16 %v2884
    %v3545 = vunpack.c.l.b16 %v2885
    %v3546 = vunpack.c.h.b16 %v2885
    %v3547 = vunpack.c.l.b16 %v2886
    %v3548 = vunpack.c.h.b16 %v2886
    %v3549 = vunpack.c.l.b16 %v2887
    %v3550 = vunpack.c.h.b16 %v2887
    %v3551 = vunpack.c.l.b16 %v2888
    %v3552 = vunpack.c.l.b16 %v2889
    %v3553 = vunpack.c.h.b16 %v2889
    %v3554 = vunpack.c.l.b16 %v2890
    %v3555 = vunpack.c.h.b16 %v2890
    %v3556 = vunpack.c.l.b16 %v2891
    %v3557 = vunpack.c.h.b16 %v2891
    %v3558 = vunpack.c.l.b16 %v2892
    %v3559 = vunpack.c.l.b16 %v2893
    %v3560 = vunpack.c.h.b16 %v2893
    %v3561 = vunpack.c.l.b16 %v2894
    %v3562 = vunpack.c.h.b16 %v2894
    %v3563 = vunpack.c.l.b16 %v2895
    %v3564 = vunpack.c.h.b16 %v2895
    %v3565 = vunpack.c.l.b16 %v2896
    %v3566 = vunpack.c.l.b16 %v2897
    %v3567 = vunpack.c.h.b16 %v2897
    %v3568 = vunpack.c.l.b16 %v2898
    %v3569 = vunpack.c.h.b16 %v2898
    %v3570 = vunpack.c.l.b16 %v2899
    %v3571 = vunpack.c.h.b16 %v2899
    %v3572 = vunpack.c.l.b16 %v2900
    %v3573 = vunpack.c.l.b16 %v2901
    %v3574 = vunpack.c.h.b16 %v2901
    %v3575 = vunpack.c.l.b16 %v2902
    %v3576 = vunpack.c.h.b16 %v2902
    %v3577 = vunpack.c.l.b16 %v2903
    %v3578 = vunpack.c.h.b16 %v2903
    %v3579 = vunpack.c.l.b16 %v2904
    %v3580 = vunpack.c.l.b16 %v2905
    %v3581 = vunpack.c.h.b16 %v2905
    %v3582 = vunpack.c.l.b16 %v2906
    %v3583 = vunpack.c.h.b16 %v2906
    %v3584 = vunpack.c.l.b16 %v2907
    %v3585 = vunpack.c.h.b16 %v2907
    %v3586 = vunpack.c.l.b16 %v2908
    %v3587 = vunpack.c.l.b16 %v2909
    %v3588 = vunpack.c.h.b16 %v2909
    %v3589 = vunpack.c.l.b16 %v2910
    %v3590 = vunpack.c.h.b16 %v2910
    %v3591 = vunpack.c.l.b16 %v2911
    %v3592 = vunpack.c.h.b16 %v2911
    %v3593 = vunpack.c.l.b16 %v2912
    %v3594 = vunpack.c.l.b16 %v2913
    %v3595 = vunpack.c.h.b16 %v2913
    %v3596 = vunpack.c.l.b16 %v2914
    %v3597 = vunpack.c.h.b16 %v2914
    %v3598 = vunpack.c.l.b16 %v2915
    %v3599 = vunpack.c.h.b16 %v2915
    %v3600 = vunpack.c.l.b16 %v2916
    %v3601 = vunpack.c.l.b16 %v2917
    %v3602 = vunpack.c.h.b16 %v2917
    %v3603 = vunpack.c.l.b16 %v2918
    %v3604 = vunpack.c.h.b16 %v2918
    %v3605 = vunpack.c.l.b16 %v2919
    %v3606 = vunpack.c.h.b16 %v2919
    %v3607 = vunpack.c.l.b16 %v2920
    %v3608 = vunpack.c.l.b16 %v2921
    %v3609 = vunpack.c.h.b16 %v2921
    %v3610 = vunpack.c.l.b16 %v2922
    %v3611 = vunpack.c.h.b16 %v2922
    %v3612 = vunpack.c.l.b16 %v2923
    %v3613 = vunpack.c.h.b16 %v2923
    %v3614 = vunpack.c.l.b16 %v2924
    %v3615 = vunpack.c.l.b16 %v2925
    %v3616 = vunpack.c.h.b16 %v2925
    %v3617 = vunpack.c.l.b16 %v2926
    %v3618 = vunpack.c.h.b16 %v2926
    %v3619 = vunpack.c.l.b16 %v2927
    %v3620 = vunpack.c.h.b16 %v2927
    %v3621 = vunpack.c.l.b16 %v2928
    %v3622 = vunpack.c.l.b16 %v2929
    %v3623 = vunpack.c.h.b16 %v2929
    %v3624 = vunpack.c.l.b16 %v2930
    %v3625 = vunpack.c.h.b16 %v2930
    %v3626 = vunpack.c.l.b16 %v2931
    %v3627 = vunpack.c.h.b16 %v2931
    %v3628 = vunpack.c.l.b16 %v2932
    %v3629 = vunpack.c.l.b16 %v2933
    %v3630 = vunpack.c.h.b16 %v2933
    %v3631 = vunpack.c.l.b16 %v2934
    %v3632 = vunpack.c.h.b16 %v2934
    %v3633 = vunpack.c.l.b16 %v2935
    %v3634 = vunpack.c.h.b16 %v2935
    %v3635 = vunpack.c.l.b16 %v2936
    %v3636 = vunpack.c.l.b16 %v2937
    %v3637 = vunpack.c.h.b16 %v2937
    %v3638 = vunpack.c.l.b16 %v2938
    %v3639 = vunpack.c.h.b16 %v2938
    %v3640 = vunpack.c.l.b16 %v2939
    %v3641 = vunpack.c.h.b16 %v2939
    %v3642 = vunpack.c.l.b16 %v2940
    %v3643 = vunpack.c.l.b16 %v2941
    %v3644 = vunpack.c.h.b16 %v2941
    %v3645 = vunpack.c.l.b16 %v2942
    %v3646 = vunpack.c.h.b16 %v2942
    %v3647 = vunpack.c.l.b16 %v2943
    %v3648 = vunpack.c.h.b16 %v2943
    %v3649 = vunpack.c.l.b16 %v2944
    %v3650 = vunpack.c.l.b16 %v2945
    %v3651 = vunpack.c.h.b16 %v2945
    %v3652 = vunpack.c.l.b16 %v2946
    %v3653 = vunpack.c.h.b16 %v2946
    %v3654 = vunpack.c.l.b16 %v2947
    %v3655 = vunpack.c.h.b16 %v2947
    %v3656 = vunpack.c.l.b16 %v2948
    %v3657 = vunpack.c.l.b16 %v2949
    %v3658 = vunpack.c.h.b16 %v2949
    %v3659 = vunpack.c.l.b16 %v2950
    %v3660 = vunpack.c.h.b16 %v2950
    %v3661 = vunpack.c.l.b16 %v2951
    %v3662 = vunpack.c.h.b16 %v2951
    %v3663 = vunpack.c.l.b16 %v2952
    %v3664 = vunpack.c.l.b16 %v2953
    %v3665 = vunpack.c.h.b16 %v2953
    %v3666 = vunpack.c.l.b16 %v2954
    %v3667 = vunpack.c.h.b16 %v2954
    %v3668 = vunpack.c.l.b16 %v2955
    %v3669 = vunpack.c.h.b16 %v2955
    %v3670 = vunpack.c.l.b16 %v2956
    %v3671 = vunpack.c.l.b16 %v2957
    %v3672 = vunpack.c.h.b16 %v2957
    %v3673 = vunpack.c.l.b16 %v2958
    %v3674 = vunpack.c.h.b16 %v2958
    %v3675 = vunpack.c.l.b16 %v2959
    %v3676 = vunpack.c.h.b16 %v2959
    %v3677 = vunpack.c.l.b16 %v2960
    %v3678 = vunpack.c.l.b16 %v2961
    %v3679 = vunpack.c.h.b16 %v2961
    %v3680 = vunpack.c.l.b16 %v2962
    %v3681 = vunpack.c.h.b16 %v2962
    %v3682 = vunpack.c.l.b16 %v2963
    %v3683 = vunpack.c.h.b16 %v2963
    %v3684 = vunpack.c.l.b16 %v2964
    %v3685 = vunpack.c.l.b16 %v2965
    %v3686 = vunpack.c.h.b16 %v2965
    %v3687 = vunpack.c.l.b16 %v2966
    %v3688 = vunpack.c.h.b16 %v2966
    %v3689 = vunpack.c.l.b16 %v2967
    %v3690 = vunpack.c.h.b16 %v2967
    %v3691 = vunpack.c.l.b16 %v2968
    %v3692 = vunpack.c.l.b16 %v2969
    %v3693 = vunpack.c.h.b16 %v2969
    %v3694 = vunpack.c.l.b16 %v2970
    %v3695 = vunpack.c.h.b16 %v2970
    %v3696 = vunpack.c.l.b16 %v2971
    %v3697 = vunpack.c.h.b16 %v2971
    %v3698 = vunpack.c.l.b16 %v2972
    %v3699 = vunpack.c.l.b16 %v2973
    %v3700 = vunpack.c.h.b16 %v2973
    %v3701 = vunpack.c.l.b16 %v2974
    %v3702 = vunpack.c.h.b16 %v2974
    %v3703 = vunpack.c.l.b16 %v2975
    %v3704 = vunpack.c.h.b16 %v2975
    %v3705 = vunpack.c.l.b16 %v2976
    %v3706 = vunpack.c.l.b16 %v2977
    %v3707 = vunpack.c.h.b16 %v2977
    %v3708 = vunpack.c.l.b16 %v2978
    %v3709 = vunpack.c.h.b16 %v2978
    %v3710 = vunpack.c.l.b16 %v2979
    %v3711 = vunpack.c.h.b16 %v2979
    %v3712 = vunpack.c.l.b16 %v2980
    %v3713 = vunpack.c.l.b16 %v2981
    %v3714 = vunpack.c.h.b16 %v2981
    %v3715 = vunpack.c.l.b16 %v2982
    %v3716 = vunpack.c.h.b16 %v2982
    %v3717 = vunpack.c.l.b16 %v2983
    %v3718 = vunpack.c.h.b16 %v2983
    %v3719 = vunpack.c.l.b16 %v2984
    %v3720 = vunpack.c.l.b16 %v2985
    %v3721 = vunpack.c.h.b16 %v2985
    %v3722 = vunpack.c.l.b16 %v2986
    %v3723 = vunpack.c.h.b16 %v2986
    %v3724 = vunpack.c.l.b16 %v2987
    %v3725 = vunpack.c.h.b16 %v2987
    %v3726 = vunpack.c.l.b16 %v2988
    %v3727 = vunpack.c.l.b16 %v2989
    %v3728 = vunpack.c.h.b16 %v2989
    %v3729 = vunpack.c.l.b16 %v2990
    %v3730 = vunpack.c.h.b16 %v2990
    %v3731 = vunpack.c.l.b16 %v2991
    %v3732 = vunpack.c.h.b16 %v2991
    %v3733 = vunpack.c.l.b16 %v2992
    %v3734 = vpack.c.b16 %v3293, %v3286
    %v3735 = vpack.c.b16 %v3294, %v3287
    %v3736 = vpack.c.b16 %v3295, %v3288
    %v3737 = vpack.c.b16 %v3296, %v3289
    %v3738 = vpack.c.b16 %v3297, %v3290
    %v3739 = vpack.c.b16 %v3298, %v3291
    %v3740 = vpack.c.b16 %v3299, %v3292
    %v3741 = vpack.c.b16 %v3307, %v3300
    %v3742 = vpack.c.b16 %v3308, %v3301
    %v3743 = vpack.c.b16 %v3309, %v3302
    %v3744 = vpack.c.b16 %v3310, %v3303
    %v3745 = vpack.c.b16 %v3311, %v3304
    %v3746 = vpack.c.b16 %v3312, %v3305
    %v3747 = vpack.c.b16 %v3313, %v3306
    %v3748 = vpack.c.b16 %v3321, %v3314
    %v3749 = vpack.c.b16 %v3322, %v3315
    %v3750 = vpack.c.b16 %v3323, %v3316
    %v3751 = vpack.c.b16 %v3324, %v3317
    %v3752 = vpack.c.b16 %v3325, %v3318
    %v3753 = vpack.c.b16 %v3326, %v3319
    %v3754 = vpack.c.b16 %v3327, %v3320
    %v3755 = vpack.c.b16 %v3335, %v3328
    %v3756 = vpack.c.b16 %v3336, %v3329
    %v3757 = vpack.c.b16 %v3337, %v3330
    %v3758 = vpack.c.b16 %v3338, %v3331
    %v3759 = vpack.c.b16 %v3339, %v3332
    %v3760 = vpack.c.b16 %v3340, %v3333
    %v3761 = vpack.c.b16 %v3341, %v3334
    %v3762 = vpack.c.b16 %v3349, %v3342
    %v3763 = vpack.c.b16 %v3350, %v3343
    %v3764 = vpack.c.b16 %v3351, %v3344
    %v3765 = vpack.c.b16 %v3352, %v3345
    %v3766 = vpack.c.b16 %v3353, %v3346
    %v3767 = vpack.c.b16 %v3354, %v3347
    %v3768 = vpack.c.b16 %v3355, %v3348
    %v3769 = vpack.c.b16 %v3363, %v3356
    %v3770 = vpack.c.b16 %v3364, %v3357
    %v3771 = vpack.c.b16 %v3365, %v3358
    %v3772 = vpack.c.b16 %v3366, %v3359
    %v3773 = vpack.c.b16 %v3367, %v3360
    %v3774 = vpack.c.b16 %v3368, %v3361
    %v3775 = vpack.c.b16 %v3369, %v3362
    %v3776 = vpack.c.b16 %v3377, %v3370
    %v3777 = vpack.c.b16 %v3378, %v3371
    %v3778 = vpack.c.b16 %v3379, %v3372
    %v3779 = vpack.c.b16 %v3380, %v3373
    %v3780 = vpack.c.b16 %v3381, %v3374
    %v3781 = vpack.c.b16 %v3382, %v3375
    %v3782 = vpack.c.b16 %v3383, %v3376
    %v3783 = vpack.c.b16 %v3391, %v3384
    %v3784 = vpack.c.b16 %v3392, %v3385
    %v3785 = vpack.c.b16 %v3393, %v3386
    %v3786 = vpack.c.b16 %v3394, %v3387
    %v3787 = vpack.c.b16 %v3395, %v3388
    %v3788 = vpack.c.b16 %v3396, %v3389
    %v3789 = vpack.c.b16 %v3397, %v3390
    %v3790 = vpack.c.b16 %v3405, %v3398
    %v3791 = vpack.c.b16 %v3406, %v3399
    %v3792 = vpack.c.b16 %v3407, %v3400
    %v3793 = vpack.c.b16 %v3408, %v3401
    %v3794 = vpack.c.b16 %v3409, %v3402
    %v3795 = vpack.c.b16 %v3410, %v3403
    %v3796 = vpack.c.b16 %v3411, %v3404
    %v3797 = vpack.c.b16 %v3419, %v3412
    %v3798 = vpack.c.b16 %v3420, %v3413
    %v3799 = vpack.c.b16 %v3421, %v3414
    %v3800 = vpack.c.b16 %v3422, %v3415
    %v3801 = vpack.c.b16 %v3423, %v3416
    %v3802 = vpack.c.b16 %v3424, %v3417
    %v3803 = vpack.c.b16 %v3425, %v3418
    %v3804 = vpack.c.b16 %v3433, %v3426
    %v3805 = vpack.c.b16 %v3434, %v3427
    %v3806 = vpack.c.b16 %v3435, %v3428
    %v3807 = vpack.c.b16 %v3436, %v3429
    %v3808 = vpack.c.b16 %v3437, %v3430
    %v3809 = vpack.c.b16 %v3438, %v3431
    %v3810 = vpack.c.b16 %v3439, %v3432
    %v3811 = vpack.c.b16 %v3447, %v3440
    %v3812 = vpack.c.b16 %v3448, %v3441
    %v3813 = vpack.c.b16 %v3449, %v3442
    %v3814 = vpack.c.b16 %v3450, %v3443
    %v3815 = vpack.c.b16 %v3451, %v3444
    %v3816 = vpack.c.b16 %v3452, %v3445
    %v3817 = vpack.c.b16 %v3453, %v3446
    %v3818 = vpack.c.b16 %v3461, %v3454
    %v3819 = vpack.c.b16 %v3462, %v3455
    %v3820 = vpack.c.b16 %v3463, %v3456
    %v3821 = vpack.c.b16 %v3464, %v3457
    %v3822 = vpack.c.b16 %v3465, %v3458
    %v3823 = vpack.c.b16 %v3466, %v3459
    %v3824 = vpack.c.b16 %v3467, %v3460
    %v3825 = vpack.c.b16 %v3475, %v3468
    %v3826 = vpack.c.b16 %v3476, %v3469
    %v3827 = vpack.c.b16 %v3477, %v3470
    %v3828 = vpack.c.b16 %v3478, %v3471
    %v3829 = vpack.c.b16 %v3479, %v3472
    %v3830 = vpack.c.b16 %v3480, %v3473
    %v3831 = vpack.c.b16 %v3481, %v3474
    %v3832 = vpack.c.b16 %v3489, %v3482
    %v3833 = vpack.c.b16 %v3490, %v3483
    %v3834 = vpack.c.b16 %v3491, %v3484
    %v3835 = vpack.c.b16 %v3492, %v3485
    %v3836 = vpack.c.b16 %v3493, %v3486
    %v3837 = vpack.c.b16 %v3494, %v3487
    %v3838 = vpack.c.b16 %v3495, %v3488
    %v3839 = vpack.c.b16 %v3503, %v3496
    %v3840 = vpack.c.b16 %v3504, %v3497
    %v3841 = vpack.c.b16 %v3505, %v3498
    %v3842 = vpack.c.b16 %v3506, %v3499
    %v3843 = vpack.c.b16 %v3507, %v3500
    %v3844 = vpack.c.b16 %v3508, %v3501
    %v3845 = vpack.c.b16 %v3509, %v3502
    %v3846 = vpack.c.b16 %v3517, %v3510
    %v3847 = vpack.c.b16 %v3518, %v3511
    %v3848 = vpack.c.b16 %v3519, %v3512
    %v3849 = vpack.c.b16 %v3520, %v3513
    %v3850 = vpack.c.b16 %v3521, %v3514
    %v3851 = vpack.c.b16 %v3522, %v3515
    %v3852 = vpack.c.b16 %v3523, %v3516
    %v3853 = vpack.c.b16 %v3531, %v3524
    %v3854 = vpack.c.b16 %v3532, %v3525
    %v3855 = vpack.c.b16 %v3533, %v3526
    %v3856 = vpack.c.b16 %v3534, %v3527
    %v3857 = vpack.c.b16 %v3535, %v3528
    %v3858 = vpack.c.b16 %v3536, %v3529
    %v3859 = vpack.c.b16 %v3537, %v3530
    %v3860 = vpack.c.b16 %v3545, %v3538
    %v3861 = vpack.c.b16 %v3546, %v3539
    %v3862 = vpack.c.b16 %v3547, %v3540
    %v3863 = vpack.c.b16 %v3548, %v3541
    %v3864 = vpack.c.b16 %v3549, %v3542
    %v3865 = vpack.c.b16 %v3550, %v3543
    %v3866 = vpack.c.b16 %v3551, %v3544
    %v3867 = vpack.c.b16 %v3559, %v3552
    %v3868 = vpack.c.b16 %v3560, %v3553
    %v3869 = vpack.c.b16 %v3561, %v3554
    %v3870 = vpack.c.b16 %v3562, %v3555
    %v3871 = vpack.c.b16 %v3563, %v3556
    %v3872 = vpack.c.b16 %v3564, %v3557
    %v3873 = vpack.c.b16 %v3565, %v3558
    %v3874 = vpack.c.b16 %v3573, %v3566
    %v3875 = vpack.c.b16 %v3574, %v3567
    %v3876 = vpack.c.b16 %v3575, %v3568
    %v3877 = vpack.c.b16 %v3576, %v3569
    %v3878 = vpack.c.b16 %v3577, %v3570
    %v3879 = vpack.c.b16 %v3578, %v3571
    %v3880 = vpack.c.b16 %v3579, %v3572
    %v3881 = vpack.c.b16 %v3587, %v3580
    %v3882 = vpack.c.b16 %v3588, %v3581
    %v3883 = vpack.c.b16 %v3589, %v3582
    %v3884 = vpack.c.b16 %v3590, %v3583
    %v3885 = vpack.c.b16 %v3591, %v3584
    %v3886 = vpack.c.b16 %v3592, %v3585
    %v3887 = vpack.c.b16 %v3593, %v3586
    %v3888 = vpack.c.b16 %v3601, %v3594
    %v3889 = vpack.c.b16 %v3602, %v3595
    %v3890 = vpack.c.b16 %v3603, %v3596
    %v3891 = vpack.c.b16 %v3604, %v3597
    %v3892 = vpack.c.b16 %v3605, %v3598
    %v3893 = vpack.c.b16 %v3606, %v3599
    %v3894 = vpack.c.b16 %v3607, %v3600
    %v3895 = vpack.c.b16 %v3615, %v3608
    %v3896 = vpack.c.b16 %v3616, %v3609
    %v3897 = vpack.c.b16 %v3617, %v3610
    %v3898 = vpack.c.b16 %v3618, %v3611
    %v3899 = vpack.c.b16 %v3619, %v3612
    %v3900 = vpack.c.b16 %v3620, %v3613
    %v3901 = vpack.c.b16 %v3621, %v3614
    %v3902 = vpack.c.b16 %v3629, %v3622
    %v3903 = vpack.c.b16 %v3630, %v3623
    %v3904 = vpack.c.b16 %v3631, %v3624
    %v3905 = vpack.c.b16 %v3632, %v3625
    %v3906 = vpack.c.b16 %v3633, %v3626
    %v3907 = vpack.c.b16 %v3634, %v3627
    %v3908 = vpack.c.b16 %v3635, %v3628
    %v3909 = vpack.c.b16 %v3643, %v3636
    %v3910 = vpack.c.b16 %v3644, %v3637
    %v3911 = vpack.c.b16 %v3645, %v3638
    %v3912 = vpack.c.b16 %v3646, %v3639
    %v3913 = vpack.c.b16 %v3647, %v3640
    %v3914 = vpack.c.b16 %v3648, %v3641
    %v3915 = vpack.c.b16 %v3649, %v3642
    %v3916 = vpack.c.b16 %v3657, %v3650
    %v3917 = vpack.c.b16 %v3658, %v3651
    %v3918 = vpack.c.b16 %v3659, %v3652
    %v3919 = vpack.c.b16 %v3660, %v3653
    %v3920 = vpack.c.b16 %v3661, %v3654
    %v3921 = vpack.c.b16 %v3662, %v3655
    %v3922 = vpack.c.b16 %v3663, %v3656
    %v3923 = vpack.c.b16 %v3671, %v3664
    %v3924 = vpack.c.b16 %v3672, %v3665
    %v3925 = vpack.c.b16 %v3673, %v3666
    %v3926 = vpack.c.b16 %v3674, %v3667
    %v3927 = vpack.c.b16 %v3675, %v3668
    %v3928 = vpack.c.b16 %v3676, %v3669
    %v3929 = vpack.c.b16 %v3677, %v3670
    %v3930 = vpack.c.b16 %v3685, %v3678
    %v3931 = vpack.c.b16 %v3686, %v3679
    %v3932 = vpack.c.b16 %v3687, %v3680
    %v3933 = vpack.c.b16 %v3688, %v3681
    %v3934 = vpack.c.b16 %v3689, %v3682
    %v3935 = vpack.c.b16 %v3690, %v3683
    %v3936 = vpack.c.b16 %v3691, %v3684
    %v3937 = vpack.c.b16 %v3699, %v3692
    %v3938 = vpack.c.b16 %v3700, %v3693
    %v3939 = vpack.c.b16 %v3701, %v3694
    %v3940 = vpack.c.b16 %v3702, %v3695
    %v3941 = vpack.c.b16 %v3703, %v3696
    %v3942 = vpack.c.b16 %v3704, %v3697
    %v3943 = vpack.c.b16 %v3705, %v3698
    %v3944 = vpack.c.b16 %v3713, %v3706
    %v3945 = vpack.c.b16 %v3714, %v3707
    %v3946 = vpack.c.b16 %v3715, %v3708
    %v3947 = vpack.c.b16 %v3716, %v3709
    %v3948 = vpack.c.b16 %v3717, %v3710
    %v3949 = vpack.c.b16 %v3718, %v3711
    %v3950 = vpack.c.b16 %v3719, %v3712
    %v3951 = vpack.c.b16 %v3727, %v3720
    %v3952 = vpack.c.b16 %v3728, %v3721
    %v3953 = vpack.c.b16 %v3729, %v3722
    %v3954 = vpack.c.b16 %v3730, %v3723
    %v3955 = vpack.c.b16 %v3731, %v3724
    %v3956 = vpack.c.b16 %v3732, %v3725
    %v3957 = vpack.c.b16 %v3733, %v3726
    %4182 = vmatprep.subr.bf16.mxu0 %v3735
    %4183 = vmatpush1.bf16.msra.mxu0 %v3734
    %4184 = vmatprep.subr.bf16.mxu0 %v3742
    %4185 = vmatpush1.bf16.msra.mxu0 %v3741
    %4186 = vmatprep.subr.bf16.mxu0 %v3749
    %4187 = vmatpush1.bf16.msra.mxu0 %v3748
    %4188 = vmatprep.subr.bf16.mxu0 %v3756
    %4189 = vmatpush1.bf16.msra.mxu0 %v3755
    %4190 = vmatprep.subr.bf16.mxu0 %v3763
    %4191 = vmatpush1.bf16.msra.mxu0 %v3762
    %4192 = vmatprep.subr.bf16.mxu0 %v3770
    %4193 = vmatpush1.bf16.msra.mxu0 %v3769
    %4194 = vmatprep.subr.bf16.mxu0 %v3777
    %4195 = vmatpush1.bf16.msra.mxu0 %v3776
    %4196 = vmatprep.subr.bf16.mxu0 %v3784
    %4197 = vmatpush1.bf16.msra.mxu0 %v3783
    %4198 = vmatprep.subr.bf16.mxu0 %v3791
    %4199 = vmatpush1.bf16.msra.mxu0 %v3790
    %4200 = vmatprep.subr.bf16.mxu0 %v3798
    %4201 = vmatpush1.bf16.msra.mxu0 %v3797
    %4202 = vmatprep.subr.bf16.mxu0 %v3805
    %4203 = vmatpush1.bf16.msra.mxu0 %v3804
    %4204 = vmatprep.subr.bf16.mxu0 %v3812
    %4205 = vmatpush1.bf16.msra.mxu0 %v3811
    %4206 = vmatprep.subr.bf16.mxu0 %v3819
    %4207 = vmatpush1.bf16.msra.mxu0 %v3818
    %4208 = vmatprep.subr.bf16.mxu0 %v3826
    %4209 = vmatpush1.bf16.msra.mxu0 %v3825
    %4210 = vmatprep.subr.bf16.mxu0 %v3833
    %4211 = vmatpush1.bf16.msra.mxu0 %v3832
    %4212 = vmatprep.subr.bf16.mxu0 %v3840
    %4213 = vmatpush1.bf16.msra.mxu0 %v3839
    %4214 = vmatprep.mubr.bf16.mxu0 %v2734
    %4215 = vmatmul.mubr.bf16.gmra.mrb[0].mxu0 %v2733
    %v4216 = vpop.f32.mrb[0].mxu0
    %v4217 = vadd.f32 %v2998, %v4216
    %v4218 = vpop.f32.mrb[0].mxu0
    %v4219 = vadd.f32 %v3002, %v4218
    %v4220 = vpop.f32.mrb[0].mxu0
    %v4221 = vadd.f32 %v2998, %v4220
    %v4222 = vpop.f32.mrb[0].mxu0
    %v4223 = vadd.f32 %v3002, %v4222
    %4224 = vdwg.mxu0
    %4225 = vmatprep.subr.bf16.mxu0 %v3847
    %4226 = vmatpush1.bf16.msra.mxu0 %v3846
    %4227 = vmatprep.subr.bf16.mxu0 %v3854
    %4228 = vmatpush1.bf16.msra.mxu0 %v3853
    %4229 = vmatprep.subr.bf16.mxu0 %v3861
    %4230 = vmatpush1.bf16.msra.mxu0 %v3860
    %4231 = vmatprep.subr.bf16.mxu0 %v3868
    %4232 = vmatpush1.bf16.msra.mxu0 %v3867
    %4233 = vmatprep.subr.bf16.mxu0 %v3875
    %4234 = vmatpush1.bf16.msra.mxu0 %v3874
    %4235 = vmatprep.subr.bf16.mxu0 %v3882
    %4236 = vmatpush1.bf16.msra.mxu0 %v3881
    %4237 = vmatprep.subr.bf16.mxu0 %v3889
    %4238 = vmatpush1.bf16.msra.mxu0 %v3888
    %4239 = vmatprep.subr.bf16.mxu0 %v3896
    %4240 = vmatpush1.bf16.msra.mxu0 %v3895
    %4241 = vmatprep.subr.bf16.mxu0 %v3903
    %4242 = vmatpush1.bf16.msra.mxu0 %v3902
    %4243 = vmatprep.subr.bf16.mxu0 %v3910
    %4244 = vmatpush1.bf16.msra.mxu0 %v3909
    %4245 = vmatprep.subr.bf16.mxu0 %v3917
    %4246 = vmatpush1.bf16.msra.mxu0 %v3916
    %4247 = vmatprep.subr.bf16.mxu0 %v3924
    %4248 = vmatpush1.bf16.msra.mxu0 %v3923
    %4249 = vmatprep.subr.bf16.mxu0 %v3931
    %4250 = vmatpush1.bf16.msra.mxu0 %v3930
    %4251 = vmatprep.subr.bf16.mxu0 %v3938
    %4252 = vmatpush1.bf16.msra.mxu0 %v3937
    %4253 = vmatprep.subr.bf16.mxu0 %v3945
    %4254 = vmatpush1.bf16.msra.mxu0 %v3944
    %4255 = vmatprep.subr.bf16.mxu0 %v3952
    %4256 = vmatpush1.bf16.msra.mxu0 %v3951
    %4257 = vmatprep.mubr.bf16.mxu0 %v2736
    %4258 = vmatmul.mubr.bf16.gmra.mrb[0].mxu0 %v2735
    %v4259 = vpop.f32.mrb[0].mxu0
    %v4260 = vadd.f32 %v4217, %v4259
    %v4261 = vpop.f32.mrb[0].mxu0
    %v4262 = vadd.f32 %v4219, %v4261
    %v4263 = vpop.f32.mrb[0].mxu0
    %v4264 = vadd.f32 %v4221, %v4263
    %v4265 = vpop.f32.mrb[0].mxu0
    %v4266 = vadd.f32 %v4223, %v4265
    %4267 = vdwg.mxu0
    %4268 = vmatprep.subr.bf16.mxu0 %v3737
    %4269 = vmatpush1.bf16.msra.mxu0 %v3736
    %4270 = vmatprep.subr.bf16.mxu0 %v3744
    %4271 = vmatpush1.bf16.msra.mxu0 %v3743
    %4272 = vmatprep.subr.bf16.mxu0 %v3751
    %4273 = vmatpush1.bf16.msra.mxu0 %v3750
    %4274 = vmatprep.subr.bf16.mxu0 %v3758
    %4275 = vmatpush1.bf16.msra.mxu0 %v3757
    %4276 = vmatprep.subr.bf16.mxu0 %v3765
    %4277 = vmatpush1.bf16.msra.mxu0 %v3764
    %4278 = vmatprep.subr.bf16.mxu0 %v3772
    %4279 = vmatpush1.bf16.msra.mxu0 %v3771
    %4280 = vmatprep.subr.bf16.mxu0 %v3779
    %4281 = vmatpush1.bf16.msra.mxu0 %v3778
    %4282 = vmatprep.subr.bf16.mxu0 %v3786
    %4283 = vmatpush1.bf16.msra.mxu0 %v3785
    %4284 = vmatprep.subr.bf16.mxu0 %v3793
    %4285 = vmatpush1.bf16.msra.mxu0 %v3792
    %4286 = vmatprep.subr.bf16.mxu0 %v3800
    %4287 = vmatpush1.bf16.msra.mxu0 %v3799
    %4288 = vmatprep.subr.bf16.mxu0 %v3807
    %4289 = vmatpush1.bf16.msra.mxu0 %v3806
    %4290 = vmatprep.subr.bf16.mxu0 %v3814
    %4291 = vmatpush1.bf16.msra.mxu0 %v3813
    %4292 = vmatprep.subr.bf16.mxu0 %v3821
    %4293 = vmatpush1.bf16.msra.mxu0 %v3820
    %4294 = vmatprep.subr.bf16.mxu0 %v3828
    %4295 = vmatpush1.bf16.msra.mxu0 %v3827
    %4296 = vmatprep.subr.bf16.mxu0 %v3835
    %4297 = vmatpush1.bf16.msra.mxu0 %v3834
    %4298 = vmatprep.subr.bf16.mxu0 %v3842
    %4299 = vmatpush1.bf16.msra.mxu0 %v3841
    %4300 = vmatprep.mubr.bf16.mxu0 %v2734
    %4301 = vmatmul.mubr.bf16.gmra.mrb[0].mxu0 %v2733
    %v4302 = vpop.f32.mrb[0].mxu0
    %v4303 = vadd.f32 %v3006, %v4302
    %v4304 = vpop.f32.mrb[0].mxu0
    %v4305 = vadd.f32 %v3010, %v4304
    %v4306 = vpop.f32.mrb[0].mxu0
    %v4307 = vadd.f32 %v3006, %v4306
    %v4308 = vpop.f32.mrb[0].mxu0
    %v4309 = vadd.f32 %v3010, %v4308
    %4310 = vdwg.mxu0
    %4311 = vmatprep.subr.bf16.mxu0 %v3849
    %4312 = vmatpush1.bf16.msra.mxu0 %v3848
    %4313 = vmatprep.subr.bf16.mxu0 %v3856
    %4314 = vmatpush1.bf16.msra.mxu0 %v3855
    %4315 = vmatprep.subr.bf16.mxu0 %v3863
    %4316 = vmatpush1.bf16.msra.mxu0 %v3862
    %4317 = vmatprep.subr.bf16.mxu0 %v3870
    %4318 = vmatpush1.bf16.msra.mxu0 %v3869
    %4319 = vmatprep.subr.bf16.mxu0 %v3877
    %4320 = vmatpush1.bf16.msra.mxu0 %v3876
    %4321 = vmatprep.subr.bf16.mxu0 %v3884
    %4322 = vmatpush1.bf16.msra.mxu0 %v3883
    %4323 = vmatprep.subr.bf16.mxu0 %v3891
    %4324 = vmatpush1.bf16.msra.mxu0 %v3890
    %4325 = vmatprep.subr.bf16.mxu0 %v3898
    %4326 = vmatpush1.bf16.msra.mxu0 %v3897
    %4327 = vmatprep.subr.bf16.mxu0 %v3905
    %4328 = vmatpush1.bf16.msra.mxu0 %v3904
    %4329 = vmatprep.subr.bf16.mxu0 %v3912
    %4330 = vmatpush1.bf16.msra.mxu0 %v3911
    %4331 = vmatprep.subr.bf16.mxu0 %v3919
    %4332 = vmatpush1.bf16.msra.mxu0 %v3918
    %4333 = vmatprep.subr.bf16.mxu0 %v3926
    %4334 = vmatpush1.bf16.msra.mxu0 %v3925
    %4335 = vmatprep.subr.bf16.mxu0 %v3933
    %4336 = vmatpush1.bf16.msra.mxu0 %v3932
    %4337 = vmatprep.subr.bf16.mxu0 %v3940
    %4338 = vmatpush1.bf16.msra.mxu0 %v3939
    %4339 = vmatprep.subr.bf16.mxu0 %v3947
    %4340 = vmatpush1.bf16.msra.mxu0 %v3946
    %4341 = vmatprep.subr.bf16.mxu0 %v3954
    %4342 = vmatpush1.bf16.msra.mxu0 %v3953
    %4343 = vmatprep.mubr.bf16.mxu0 %v2736
    %4344 = vmatmul.mubr.bf16.gmra.mrb[0].mxu0 %v2735
    %v4345 = vpop.f32.mrb[0].mxu0
    %v4346 = vadd.f32 %v4303, %v4345
    %v4347 = vpop.f32.mrb[0].mxu0
    %v4348 = vadd.f32 %v4305, %v4347
    %v4349 = vpop.f32.mrb[0].mxu0
    %v4350 = vadd.f32 %v4307, %v4349
    %v4351 = vpop.f32.mrb[0].mxu0
    %v4352 = vadd.f32 %v4309, %v4351
    %4353 = vdwg.mxu0
    %4354 = vmatprep.subr.bf16.mxu0 %v3739
    %4355 = vmatpush1.bf16.msra.mxu0 %v3738
    %4356 = vmatprep.subr.bf16.mxu0 %v3746
    %4357 = vmatpush1.bf16.msra.mxu0 %v3745
    %4358 = vmatprep.subr.bf16.mxu0 %v3753
    %4359 = vmatpush1.bf16.msra.mxu0 %v3752
    %4360 = vmatprep.subr.bf16.mxu0 %v3760
    %4361 = vmatpush1.bf16.msra.mxu0 %v3759
    %4362 = vmatprep.subr.bf16.mxu0 %v3767
    %4363 = vmatpush1.bf16.msra.mxu0 %v3766
    %4364 = vmatprep.subr.bf16.mxu0 %v3774
    %4365 = vmatpush1.bf16.msra.mxu0 %v3773
    %4366 = vmatprep.subr.bf16.mxu0 %v3781
    %4367 = vmatpush1.bf16.msra.mxu0 %v3780
    %4368 = vmatprep.subr.bf16.mxu0 %v3788
    %4369 = vmatpush1.bf16.msra.mxu0 %v3787
    %4370 = vmatprep.subr.bf16.mxu0 %v3795
    %4371 = vmatpush1.bf16.msra.mxu0 %v3794
    %4372 = vmatprep.subr.bf16.mxu0 %v3802
    %4373 = vmatpush1.bf16.msra.mxu0 %v3801
    %4374 = vmatprep.subr.bf16.mxu0 %v3809
    %4375 = vmatpush1.bf16.msra.mxu0 %v3808
    %4376 = vmatprep.subr.bf16.mxu0 %v3816
    %4377 = vmatpush1.bf16.msra.mxu0 %v3815
    %4378 = vmatprep.subr.bf16.mxu0 %v3823
    %4379 = vmatpush1.bf16.msra.mxu0 %v3822
    %4380 = vmatprep.subr.bf16.mxu0 %v3830
    %4381 = vmatpush1.bf16.msra.mxu0 %v3829
    %4382 = vmatprep.subr.bf16.mxu0 %v3837
    %4383 = vmatpush1.bf16.msra.mxu0 %v3836
    %4384 = vmatprep.subr.bf16.mxu0 %v3844
    %4385 = vmatpush1.bf16.msra.mxu0 %v3843
    %4386 = vmatprep.mubr.bf16.mxu0 %v2734
    %4387 = vmatmul.mubr.bf16.gmra.mrb[0].mxu0 %v2733
    %v4388 = vpop.f32.mrb[0].mxu0
    %v4389 = vadd.f32 %v3014, %v4388
    %v4390 = vpop.f32.mrb[0].mxu0
    %v4391 = vadd.f32 %v3018, %v4390
    %v4392 = vpop.f32.mrb[0].mxu0
    %v4393 = vadd.f32 %v3014, %v4392
    %v4394 = vpop.f32.mrb[0].mxu0
    %v4395 = vadd.f32 %v3018, %v4394
    %4396 = vdwg.mxu0
    %4397 = vmatprep.subr.bf16.mxu0 %v3851
    %4398 = vmatpush1.bf16.msra.mxu0 %v3850
    %4399 = vmatprep.subr.bf16.mxu0 %v3858
    %4400 = vmatpush1.bf16.msra.mxu0 %v3857
    %4401 = vmatprep.subr.bf16.mxu0 %v3865
    %4402 = vmatpush1.bf16.msra.mxu0 %v3864
    %4403 = vmatprep.subr.bf16.mxu0 %v3872
    %4404 = vmatpush1.bf16.msra.mxu0 %v3871
    %4405 = vmatprep.subr.bf16.mxu0 %v3879
    %4406 = vmatpush1.bf16.msra.mxu0 %v3878
    %4407 = vmatprep.subr.bf16.mxu0 %v3886
    %4408 = vmatpush1.bf16.msra.mxu0 %v3885
    %4409 = vmatprep.subr.bf16.mxu0 %v3893
    %4410 = vmatpush1.bf16.msra.mxu0 %v3892
    %4411 = vmatprep.subr.bf16.mxu0 %v3900
    %4412 = vmatpush1.bf16.msra.mxu0 %v3899
    %4413 = vmatprep.subr.bf16.mxu0 %v3907
    %4414 = vmatpush1.bf16.msra.mxu0 %v3906
    %4415 = vmatprep.subr.bf16.mxu0 %v3914
    %4416 = vmatpush1.bf16.msra.mxu0 %v3913
    %4417 = vmatprep.subr.bf16.mxu0 %v3921
    %4418 = vmatpush1.bf16.msra.mxu0 %v3920
    %4419 = vmatprep.subr.bf16.mxu0 %v3928
    %4420 = vmatpush1.bf16.msra.mxu0 %v3927
    %4421 = vmatprep.subr.bf16.mxu0 %v3935
    %4422 = vmatpush1.bf16.msra.mxu0 %v3934
    %4423 = vmatprep.subr.bf16.mxu0 %v3942
    %4424 = vmatpush1.bf16.msra.mxu0 %v3941
    %4425 = vmatprep.subr.bf16.mxu0 %v3949
    %4426 = vmatpush1.bf16.msra.mxu0 %v3948
    %4427 = vmatprep.subr.bf16.mxu0 %v3956
    %4428 = vmatpush1.bf16.msra.mxu0 %v3955
    %4429 = vmatprep.mubr.bf16.mxu0 %v2736
    %4430 = vmatmul.mubr.bf16.gmra.mrb[0].mxu0 %v2735
    %v4431 = vpop.f32.mrb[0].mxu0
    %v4432 = vadd.f32 %v4389, %v4431
    %v4433 = vpop.f32.mrb[0].mxu0
    %v4434 = vadd.f32 %v4391, %v4433
    %v4435 = vpop.f32.mrb[0].mxu0
    %v4436 = vadd.f32 %v4393, %v4435
    %v4437 = vpop.f32.mrb[0].mxu0
    %v4438 = vadd.f32 %v4395, %v4437
    %4439 = vdwg.mxu0
    %4440 = vmatprep.subr.bf16.mxu0 0
    %4441 = vmatpush1.bf16.msra.mxu0 %v3740
    %4442 = vmatprep.subr.bf16.mxu0 0
    %4443 = vmatpush1.bf16.msra.mxu0 %v3747
    %4444 = vmatprep.subr.bf16.mxu0 0
    %4445 = vmatpush1.bf16.msra.mxu0 %v3754
    %4446 = vmatprep.subr.bf16.mxu0 0
    %4447 = vmatpush1.bf16.msra.mxu0 %v3761
    %4448 = vmatprep.subr.bf16.mxu0 0
    %4449 = vmatpush1.bf16.msra.mxu0 %v3768
    %4450 = vmatprep.subr.bf16.mxu0 0
    %4451 = vmatpush1.bf16.msra.mxu0 %v3775
    %4452 = vmatprep.subr.bf16.mxu0 0
    %4453 = vmatpush1.bf16.msra.mxu0 %v3782
    %4454 = vmatprep.subr.bf16.mxu0 0
    %4455 = vmatpush1.bf16.msra.mxu0 %v3789
    %4456 = vmatprep.subr.bf16.mxu0 0
    %4457 = vmatpush1.bf16.msra.mxu0 %v3796
    %4458 = vmatprep.subr.bf16.mxu0 0
    %4459 = vmatpush1.bf16.msra.mxu0 %v3803
    %4460 = vmatprep.subr.bf16.mxu0 0
    %4461 = vmatpush1.bf16.msra.mxu0 %v3810
    %4462 = vmatprep.subr.bf16.mxu0 0
    %4463 = vmatpush1.bf16.msra.mxu0 %v3817
    %4464 = vmatprep.subr.bf16.mxu0 0
    %4465 = vmatpush1.bf16.msra.mxu0 %v3824
    %4466 = vmatprep.subr.bf16.mxu0 0
    %4467 = vmatpush1.bf16.msra.mxu0 %v3831
    %4468 = vmatprep.subr.bf16.mxu0 0
    %4469 = vmatpush1.bf16.msra.mxu0 %v3838
    %4470 = vmatprep.subr.bf16.mxu0 0
    %4471 = vmatpush1.bf16.msra.mxu0 %v3845
    %4472 = vmatprep.mubr.bf16.mxu0 %v2734
    %4473 = vmatmul.mubr.bf16.gmra.mrb[0].mxu0 %v2733
    %v4474 = vpop.f32.mrb[0].mxu0
    %v4475 = vadd.f32 %v3022, %v4474
    %v4476 = vpop.f32.mrb[0].mxu0
    %v4477 = vpop.f32.mrb[0].mxu0
    %v4478 = vadd.f32 %v3022, %v4477
    %v4479 = vpop.f32.mrb[0].mxu0
    %4480 = vdwg.mxu0
    %4481 = vmatprep.subr.bf16.mxu0 0
    %4482 = vmatpush1.bf16.msra.mxu0 %v3852
    %4483 = vmatprep.subr.bf16.mxu0 0
    %4484 = vmatpush1.bf16.msra.mxu0 %v3859
    %4485 = vmatprep.subr.bf16.mxu0 0
    %4486 = vmatpush1.bf16.msra.mxu0 %v3866
    %4487 = vmatprep.subr.bf16.mxu0 0
    %4488 = vmatpush1.bf16.msra.mxu0 %v3873
    %4489 = vmatprep.subr.bf16.mxu0 0
    %4490 = vmatpush1.bf16.msra.mxu0 %v3880
    %4491 = vmatprep.subr.bf16.mxu0 0
    %4492 = vmatpush1.bf16.msra.mxu0 %v3887
    %4493 = vmatprep.subr.bf16.mxu0 0
    %4494 = vmatpush1.bf16.msra.mxu0 %v3894
    %4495 = vmatprep.subr.bf16.mxu0 0
    %4496 = vmatpush1.bf16.msra.mxu0 %v3901
    %4497 = vmatprep.subr.bf16.mxu0 0
    %4498 = vmatpush1.bf16.msra.mxu0 %v3908
    %4499 = vmatprep.subr.bf16.mxu0 0
    %4500 = vmatpush1.bf16.msra.mxu0 %v3915
    %4501 = vmatprep.subr.bf16.mxu0 0
    %4502 = vmatpush1.bf16.msra.mxu0 %v3922
    %4503 = vmatprep.subr.bf16.mxu0 0
    %4504 = vmatpush1.bf16.msra.mxu0 %v3929
    %4505 = vmatprep.subr.bf16.mxu0 0
    %4506 = vmatpush1.bf16.msra.mxu0 %v3936
    %4507 = vmatprep.subr.bf16.mxu0 0
    %4508 = vmatpush1.bf16.msra.mxu0 %v3943
    %4509 = vmatprep.subr.bf16.mxu0 0
    %4510 = vmatpush1.bf16.msra.mxu0 %v3950
    %4511 = vmatprep.subr.bf16.mxu0 0
    %4512 = vmatpush1.bf16.msra.mxu0 %v3957
    %4513 = vmatprep.mubr.bf16.mxu0 %v2736
    %4514 = vmatmul.mubr.bf16.gmra.mrb[0].mxu0 %v2735
    %v4515 = vpop.f32.mrb[0].mxu0
    %v4516 = vadd.f32 %v4475, %v4515
    %v4517 = vpop.f32.mrb[0].mxu0
    %v4518 = vpop.f32.mrb[0].mxu0
    %v4519 = vadd.f32 %v4478, %v4518
    %v4520 = vpop.f32.mrb[0].mxu0
    %4521 = vdwg.mxu0
    %v4522 = vsub.f32 0.0, %v4260
    %v4523 = vsub.f32 0.0, %v4262
    %v4524 = vsub.f32 0.0, %v4346
    %v4525 = vsub.f32 0.0, %v4348
    %v4526 = vsub.f32 0.0, %v4432
    %v4527 = vsub.f32 0.0, %v4434
    %v4528 = vsub.f32 0.0, %v4516
    %v4529 = vsub.f32 0.0, %v4264
    %v4530 = vsub.f32 0.0, %v4266
    %v4531 = vsub.f32 0.0, %v4350
    %v4532 = vsub.f32 0.0, %v4352
    %v4533 = vsub.f32 0.0, %v4436
    %v4534 = vsub.f32 0.0, %v4438
    %v4535 = vsub.f32 0.0, %v4519
    %v4536 = vmul.f32 %v4522, 1.442695
    %v4537 = vpow.pop %v4536
    %v4538 = vmul.f32 %v4523, 1.442695
    %v4539 = vpow.pop %v4538
    %v4540 = vmul.f32 %v4524, 1.442695
    %v4541 = vpow.pop %v4540
    %v4542 = vmul.f32 %v4525, 1.442695
    %v4543 = vpow.pop %v4542
    %v4544 = vmul.f32 %v4526, 1.442695
    %v4545 = vpow.pop %v4544
    %v4546 = vmul.f32 %v4527, 1.442695
    %v4547 = vpow.pop %v4546
    %v4548 = vmul.f32 %v4528, 1.442695
    %v4549 = vpow.pop %v4548
    %v4550 = vmul.f32 %v4529, 1.442695
    %v4551 = vpow.pop %v4550
    %v4552 = vmul.f32 %v4530, 1.442695
    %v4553 = vpow.pop %v4552
    %v4554 = vmul.f32 %v4531, 1.442695
    %v4555 = vpow.pop %v4554
    %v4556 = vmul.f32 %v4532, 1.442695
    %v4557 = vpow.pop %v4556
    %v4558 = vmul.f32 %v4533, 1.442695
    %v4559 = vpow.pop %v4558
    %v4560 = vmul.f32 %v4534, 1.442695
    %v4561 = vpow.pop %v4560
    %v4562 = vmul.f32 %v4535, 1.442695
    %v4563 = vpow.pop %v4562
    %v4564 = vadd.f32 %v4537, 1.0
    %v4565 = vadd.f32 %v4539, 1.0
    %v4566 = vadd.f32 %v4541, 1.0
    %v4567 = vadd.f32 %v4543, 1.0
    %v4568 = vadd.f32 %v4545, 1.0
    %v4569 = vadd.f32 %v4547, 1.0
    %v4570 = vadd.f32 %v4549, 1.0
    %v4571 = vadd.f32 %v4551, 1.0
    %v4572 = vadd.f32 %v4553, 1.0
    %v4573 = vadd.f32 %v4555, 1.0
    %v4574 = vadd.f32 %v4557, 1.0
    %v4575 = vadd.f32 %v4559, 1.0
    %v4576 = vadd.f32 %v4561, 1.0
    %v4577 = vadd.f32 %v4563, 1.0
    %v4578 = vrcp.pop %v4564
    %v4579 = vrcp.pop %v4565
    %v4580 = vrcp.pop %v4566
    %v4581 = vrcp.pop %v4567
    %v4582 = vrcp.pop %v4568
    %v4583 = vrcp.pop %v4569
    %v4584 = vrcp.pop %v4570
    %v4585 = vrcp.pop %v4571
    %v4586 = vrcp.pop %v4572
    %v4587 = vrcp.pop %v4573
    %v4588 = vrcp.pop %v4574
    %v4589 = vrcp.pop %v4575
    %v4590 = vrcp.pop %v4576
    %v4591 = vrcp.pop %v4577
    %v4592 = vpack.c.bf16 %v4585, %v4578
    %v4593 = vpack.c.bf16 %v4586, %v4579
    %v4594 = vpack.c.bf16 %v4587, %v4580
    %v4595 = vpack.c.bf16 %v4588, %v4581
    %v4596 = vpack.c.bf16 %v4589, %v4582
    %v4597 = vpack.c.bf16 %v4590, %v4583
    %v4598 = vpack.c.bf16 %v4591, %v4584
    %v4606 = vunpack.c.l.b16 %v4592
    %v4607 = vunpack.c.l.b16 %v4593
    %v4608 = vunpack.c.l.b16 %v4594
    %v4609 = vunpack.c.l.b16 %v4595
    %v4610 = vunpack.c.l.b16 %v4596
    %v4611 = vunpack.c.l.b16 %v4597
    %v4612 = vunpack.c.l.b16 %v4598
    %v4613 = vunpack.c.h.b16 %v4592
    %v4614 = vunpack.c.h.b16 %v4593
    %v4615 = vunpack.c.h.b16 %v4594
    %v4616 = vunpack.c.h.b16 %v4595
    %v4617 = vunpack.c.h.b16 %v4596
    %v4618 = vunpack.c.h.b16 %v4597
    %v4619 = vunpack.c.h.b16 %v4598
    %v4620 = vpack.c.b16 %v4607, %v4606
    %v4621 = vpack.c.b16 %v4609, %v4608
    %v4622 = vpack.c.b16 %v4611, %v4610
    %v4623 = vpack.c.b16 %v4612, %v4612
    %v4624 = vpack.c.b16 %v4614, %v4613
    %v4625 = vpack.c.b16 %v4616, %v4615
    %v4626 = vpack.c.b16 %v4618, %v4617
    %v4627 = vpack.c.b16 %v4619, %v4619
    %4636 = vst [vmem:[#allocation14] sm:$0xff] %v4620
    %4637 = vst [vmem:[#allocation14 + $0x8] sm:$0xff] %v4621
    %4638 = vst [vmem:[#allocation14 + $0x10] sm:$0xff] %v4622
    %4639 = vst [vmem:[#allocation14 + $0x18] sm:$0xf] %v4623
    %4640 = vst [vmem:[#allocation14 + $0x1c] sm:$0xff] %v4624
    %4641 = vst [vmem:[#allocation14 + $0x24] sm:$0xff] %v4625
    %4642 = vst [vmem:[#allocation14 + $0x2c] sm:$0xff] %v4626
    %4643 = vst [vmem:[#allocation14 + $0x34] sm:$0xf] %v4627
    // Predicated region
    $region70: #{tpu_custom_call.1} parent=1 // pred_check
      _
    $region71: #{tpu_custom_call.1} parent=1 // pred_check_branch
      %4645 = sbr.rel (0) target = $region73
    $region72: #{tpu_custom_call.1} parent=1 // pred_region
      %s4647 = ssub.s32 896, 896
      %4648 = vsyncadd [#allocation5], %s4647
      %s4649 = sshll.u32 [#allocation14], 4
      %s4650 = int_to_ptr.vmem [resolvable:$true] %s4649
      %4655 = dma.vmem_to_hbm [thread:$0]  %s4650, 896, %s11, [#allocation5], 448, 448, 28
    $region73: #{tpu_custom_call.1} parent=1 // pred_fallthru
      _
    // Predicated region
    $region74: #{tpu_custom_call.1} parent=1 // pred_check
      _
    $region75: #{tpu_custom_call.1} parent=1 // pred_check_branch
      %4657 = sbr.rel (0) target = $region77
    $region76: #{tpu_custom_call.1} parent=1 // pred_region
      %s4659 = ssub.s32 128, 128
      %4660 = vsyncadd [#allocation16], %s4659
      %s4662 = sshll.u32 [#allocation15], 4
      %s4663 = int_to_ptr.vmem [resolvable:$true] %s4662
      %4665 = dma.vmem_to_hbm [thread:$0]  %s4663, 128, %s12, [#allocation16]
    $region77: #{tpu_custom_call.1} parent=1 // pred_fallthru
      _
    // Predicated region
    $region78: #{tpu_custom_call.1} parent=1 // pred_check
      _
    $region79: #{tpu_custom_call.1} parent=1 // pred_check_branch
      %4667 = sbr.rel (0) target = $region81
    $region80: #{tpu_custom_call.1} parent=1 // pred_region
      %4668 = dma.done [#allocation5], 896
    $region81: #{tpu_custom_call.1} parent=1 // pred_fallthru
      _
    // Predicated region
    $region82: #{tpu_custom_call.1} parent=1 // pred_check
      _
    $region83: #{tpu_custom_call.1} parent=1 // pred_check_branch
      %4670 = sbr.rel (0) target = $region85
    $region84: #{tpu_custom_call.1} parent=1 // pred_region
      %4671 = dma.done [#allocation16], 128
    $region85: #{tpu_custom_call.1} parent=1 // pred_fallthru
      _
    %4672 = vsyncpa [#allocation4], 1
    %4673 = vsyncpa [#allocation7], 1
    %4674 = vsyncpa [#allocation10], 1
    %4675 = vsyncpa [#allocation13], 1
    %4676 = vsyncpa [#allocation5], 1
    %4677 = vsyncpa [#allocation16], 1

</llo_original>
